<compile_context>
chip_gen: v7x
topology: tpu7x:2x2x1
jax: 0.10.0
libtpu: 0.0.40
codegen_flags: <defaults>
</compile_context>

<pallas_src>
import functools
import math

import jax
import jax.numpy as jnp
from jax.experimental import pallas as pl
from jax.experimental.pallas import tpu as pltpu

LN_EPS = 1e-5


def _layernorm_f32(x, g, b):
    # x: (R, D) f32; g, b: (1, D) f32. PyTorch LayerNorm (biased var, eps=1e-5).
    mean = jnp.mean(x, axis=-1, keepdims=True)
    var = jnp.mean((x - mean) ** 2, axis=-1, keepdims=True)
    return (x - mean) * jax.lax.rsqrt(var + LN_EPS) * g + b


def transformer_kernel(x_ref, g1_ref, b1_ref, wqkv_ref, bqkv_ref,
                       wo_ref, bo_ref, g2_ref, b2_ref,
                       wfc_ref, bfc_ref, wp_ref, bp_ref,
                       o_ref, x_sc, *, n_head):
    layer = pl.program_id(1)
    n_layers = pl.num_programs(1)

    S, TB, D = x_ref.shape          # x block is (S, TB, D) straight from (S,B,D)
    R = TB * S
    Dh = D // n_head

    @pl.when(layer == 0)
    def _():
        # Load this batch tile once and relayout (S,TB,D)->(TB*S,D) in VMEM.
        # It stays VMEM-resident across all layers of the stack.
        xin = x_ref[...].astype(jnp.float32)
        x_sc[...] = jnp.transpose(xin, (1, 0, 2)).reshape(R, D)

    x = x_sc[...]                                   # (R, D) f32

    # ---------------- attention branch ----------------
    xln = _layernorm_f32(x, g1_ref[0], b1_ref[0])                       # (R, D)
    # 1/sqrt(Dh) is already folded into the q slice of wqkv/bqkv host-side.
    qkv = jnp.dot(xln.astype(jnp.bfloat16), wqkv_ref[0],
                  preferred_element_type=jnp.float32) + bqkv_ref[0]     # (R, 3D)
    q = qkv[:, :D]
    k = qkv[:, D:2 * D]
    v = qkv[:, 2 * D:]

    # Attention is per batch element (sequences don't attend across batch).
    # TB is small and static, so an unrolled Python loop over the tile is fine;
    # each iteration is a batched-over-heads (H,S,Dh) contraction.
    attn_rows = []
    for t in range(TB):
        lo, hi = t * S, (t + 1) * S
        qh = q[lo:hi].reshape(S, n_head, Dh).transpose(1, 0, 2).astype(jnp.bfloat16)
        kh = k[lo:hi].reshape(S, n_head, Dh).transpose(1, 0, 2).astype(jnp.bfloat16)
        vh = v[lo:hi].reshape(S, n_head, Dh).transpose(1, 0, 2).astype(jnp.bfloat16)

        s = jnp.einsum('hqd,hkd->hqk', qh, kh,
                       preferred_element_type=jnp.float32)              # (H, S, S)
        s = s - jnp.max(s, axis=-1, keepdims=True)
        p = jnp.exp(s)
        p = p * pl.reciprocal(jnp.sum(p, axis=-1, keepdims=True), approx=True)
        oh = jnp.einsum('hqk,hkd->hqd', p.astype(jnp.bfloat16), vh,
                        preferred_element_type=jnp.float32)             # (H, S, Dh)
        attn_rows.append(oh.transpose(1, 0, 2).reshape(S, D))
    attn = attn_rows[0] if TB == 1 else jnp.concatenate(attn_rows, axis=0)

    attn = jnp.dot(attn.astype(jnp.bfloat16), wo_ref[0],
                   preferred_element_type=jnp.float32) + bo_ref[0]
    x1 = x + attn

    # ---------------- MLP branch (QuickGELU) ----------------
    x2 = _layernorm_f32(x1, g2_ref[0], b2_ref[0])
    h = jnp.dot(x2.astype(jnp.bfloat16), wfc_ref[0],
                preferred_element_type=jnp.float32) + bfc_ref[0]        # (R, 4D)
    h = h * jax.nn.sigmoid(1.702 * h)
    y = x1 + jnp.dot(h.astype(jnp.bfloat16), wp_ref[0],
                     preferred_element_type=jnp.float32) + bp_ref[0]

    x_sc[...] = y

    @pl.when(layer == n_layers - 1)
    def _():
        # (R, D) -> (TB, S, D) -> (S, TB, D) once, then write back.
        o_ref[...] = jnp.transpose(y.reshape(TB, S, D), (1, 0, 2)).astype(o_ref.dtype)


def prepare_transformer_params(params, n_head):
    """Stack per-layer params along a leading layer axis, pre-transpose matmul
    weights to MXU contraction order, fold the 1/sqrt(Dh) attention scale into
    the q slice of wqkv/bqkv, and cast weight matrices to bf16.

    Call ONCE at model-load time (hoisted out of the forward path)."""
    D = params[0]['wo'].shape[0]
    Dh = D // n_head
    scale = 1.0 / math.sqrt(Dh)
    qscale = jnp.concatenate([jnp.full((D,), scale, jnp.float32),
                              jnp.ones((2 * D,), jnp.float32)])          # (3D,)

    def stack(name):
        return jnp.stack([p[name] for p in params], axis=0)

    wqkv = stack('wqkv') * qscale[None, :, None]                         # (L, 3D, D)
    bqkv = stack('bqkv') * qscale[None, None, :]                         # (L, 1, 3D)
    wqkv = jnp.transpose(wqkv, (0, 2, 1)).astype(jnp.bfloat16)           # (L, D, 3D)
    wo = jnp.transpose(stack('wo'), (0, 2, 1)).astype(jnp.bfloat16)      # (L, D, D)
    wfc = jnp.transpose(stack('wfc'), (0, 2, 1)).astype(jnp.bfloat16)    # (L, D, 4D)
    wp = jnp.transpose(stack('wp'), (0, 2, 1)).astype(jnp.bfloat16)      # (L, 4D, D)
    return dict(
        g1=stack('g1'), b1=stack('b1'), wqkv=wqkv, bqkv=bqkv,
        wo=wo, bo=stack('bo'), g2=stack('g2'), b2=stack('b2'),
        wfc=wfc, bfc=stack('bfc'), wp=wp, bp=stack('bp'),
    )


def _weight_spec(arr):
    # (L, r, c) stacked weight: block = one layer's full (r, c) slab, indexed
    # only by the layer grid axis (constant across the batch-tile axis).
    _, r, c = arr.shape
    return pl.BlockSpec((1, r, c), lambda b, l: (l, 0, 0))


def _vmem_cap_bytes():
    # ~75% of physical VMEM: ~96 MiB on v5e/v6e (128 MiB), ~48 MiB on v7x (64 MiB).
    try:
        phys = int(pltpu.get_tpu_info().vmem_capacity_bytes)
    except Exception:
        phys = 64 * 1024 * 1024      # conservative fallback
    return max(32 * 1024 * 1024, (phys * 3) // 4)


def transformer_pallas(x_sbd, stacked, n_head, n_layers, tb):
    """Full transformer stack. x_sbd: (S, B, D) float32 with B % tb == 0."""
    S, B, D = x_sbd.shape
    assert B % tb == 0

    names = ['g1', 'b1', 'wqkv', 'bqkv', 'wo', 'bo',
             'g2', 'b2', 'wfc', 'bfc', 'wp', 'bp']
    weights = [stacked[n] for n in names]

    x_spec = pl.BlockSpec((S, tb, D), lambda b, l: (0, b, 0))
    in_specs = [x_spec] + [_weight_spec(w) for w in weights]
    out_spec = pl.BlockSpec((S, tb, D), lambda b, l: (0, b, 0))

    # VMEM residency estimate: double-buffered per-layer weight slabs, in/out x
    # blocks, resident residual stream, qkv / MLP-hidden / scores temporaries.
    R = tb * S
    w_bytes = sum((w.size // w.shape[0]) * w.dtype.itemsize for w in weights)
    est = (2 * w_bytes
           + 4 * S * tb * D * x_sbd.dtype.itemsize   # in + out blocks (double-buffered)
           + R * D * 4                               # x_sc scratch (f32)
           + R * 3 * D * 4                           # qkv (f32)
           + R * 4 * D * 4                           # MLP hidden (f32)
           + 3 * R * D * 4                           # xln / attn / x1 temporaries
           + 2 * n_head * S * S * 4                  # per-element scores + probs
           + (2 << 20))
    vmem_limit = max(32 * 1024 * 1024, min(int(est * 1.3), _vmem_cap_bytes()))

    return pl.pallas_call(
        functools.partial(transformer_kernel, n_head=n_head),
        out_shape=jax.ShapeDtypeStruct((S, B, D), x_sbd.dtype),
        grid=(B // tb, n_layers),
        in_specs=in_specs,
        out_specs=out_spec,
        scratch_shapes=[pltpu.VMEM((R, D), jnp.float32)],
        compiler_params=pltpu.CompilerParams(
            dimension_semantics=("parallel", "arbitrary"),
            vmem_limit_bytes=vmem_limit),
    )(x_sbd, *weights)


def transformer_forward(x_sbd, stacked, n_head, n_layers, batch_tile=8):
    """Transformer.forward. x_sbd: (S, B, D) like the PyTorch module.
    `stacked` must come from prepare_transformer_params (call it once)."""
    S, B, D = x_sbd.shape
    if B <= batch_tile:
        tb = B                               # full batch in one tile
        x_p = x_sbd
    else:
        tb = ((batch_tile + 7) // 8) * 8     # (8,128) sublane-tiling constraint
        pad = (-B) % tb
        x_p = jnp.pad(x_sbd, ((0, 0), (0, pad), (0, 0))) if pad else x_sbd
    y = transformer_pallas(x_p, stacked, n_head, n_layers, tb)
    return y[:, :B, :] if y.shape[1] != B else y


def init_params(key, width, layers):
    params = []
    for _ in range(layers):
        key, k0, k1, k2, k3, k4, k5 = jax.random.split(key, 7)
        rnd = lambda k, shape: jax.random.normal(k, shape, jnp.float32) * 0.02
        params.append(dict(
            g1=jnp.ones((1, width), jnp.float32),
            b1=jnp.zeros((1, width), jnp.float32),
            wqkv=rnd(k0, (3 * width, width)),        # nn.MultiheadAttention.in_proj_weight
            bqkv=jnp.zeros((1, 3 * width), jnp.float32),
            wo=rnd(k1, (width, width)),              # out_proj.weight
            bo=jnp.zeros((1, width), jnp.float32),
            g2=jnp.ones((1, width), jnp.float32),
            b2=jnp.zeros((1, width), jnp.float32),
            wfc=rnd(k2, (4 * width, width)),         # mlp.c_fc
            bfc=rnd(k3, (1, 4 * width)),
            wp=rnd(k4, (width, 4 * width)),          # mlp.c_proj
            bp=rnd(k5, (1, width)),
        ))
    return params


# ---------------- pure-JAX reference (for correctness check) ----------------
def _ref_block(x, p, n_head):                      # x: (B, S, D) f32
    B, S, D = x.shape
    Dh = D // n_head
    scale = 1.0 / math.sqrt(Dh)
    # The kernel holds bf16 weights with the softmax scale folded into the q
    # slice of wqkv/bqkv; mirror that here so the comparison isolates in-kernel
    # numerics.
    rt = lambda w: w.astype(jnp.bfloat16).astype(jnp.float32)
    qscale = jnp.concatenate([jnp.full((D,), scale, jnp.float32),
                              jnp.ones((2 * D,), jnp.float32)])

    def ln(v, g, b):
        m = v.mean(-1, keepdims=True)
        var = ((v - m) ** 2).mean(-1, keepdims=True)
        return (v - m) / jnp.sqrt(var + LN_EPS) * g + b

    xln = ln(x, p['g1'], p['b1'])
    qkv = xln @ rt(p['wqkv'] * qscale[:, None]).T + p['bqkv'] * qscale[None, :]
    q, k, v = jnp.split(qkv, 3, axis=-1)
    q = q.reshape(B, S, n_head, Dh).transpose(0, 2, 1, 3)
    k = k.reshape(B, S, n_head, Dh).transpose(0, 2, 1, 3)
    v = v.reshape(B, S, n_head, Dh).transpose(0, 2, 1, 3)
    s = jnp.einsum('bhqd,bhkd->bhqk', q, k)        # scale already folded into q
    a = jax.nn.softmax(s, axis=-1)
    o = jnp.einsum('bhqk,bhkd->bhqd', a, v).transpose(0, 2, 1, 3).reshape(B, S, D)
    x1 = x + o @ rt(p['wo']).T + p['bo']
    h = ln(x1, p['g2'], p['b2']) @ rt(p['wfc']).T + p['bfc']
    h = h * jax.nn.sigmoid(1.702 * h)
    return x1 + h @ rt(p['wp']).T + p['bp']


if __name__ == "__main__":
    width, layers, heads = 32, 2, 4
    seq, batch = 8, 2          # keep S a multiple of 8 (sublane alignment)

    key = jax.random.PRNGKey(0)
    kx, kp = jax.random.split(key)
    x = jax.random.normal(kx, (seq, batch, width), jnp.float32)   # (S, B, D)
    params = init_params(kp, width, layers)

    # Weight prep hoisted out of the forward path: done once at "load time".
    stacked = prepare_transformer_params(params, heads)

    out = jax.block_until_ready(transformer_forward(x, stacked, heads, layers))

    # sanity check vs. pure-JAX reference (bf16-rounded weights, f32 elsewhere)
    ref = jnp.transpose(x, (1, 0, 2))
    for p in params:
        ref = _ref_block(ref, p, heads)
    ref = jnp.transpose(ref, (1, 0, 2))

    assert out.shape == (seq, batch, width)
    max_err = float(jnp.max(jnp.abs(out - ref)))
    assert jnp.allclose(out, ref, atol=2e-2, rtol=2e-2), \
        f"mismatch vs reference, max abs err {max_err}"
    print("KERNEL_OK")
</pallas_src>

<mosaic_0001>
module attributes {stable_mosaic.version = 11 : i64} {
  func.func @transformer_kernel(%arg0: i32, %arg1: i32, %arg2: memref<8x2x32xf32, #tpu.memory_space<vmem>>, %arg3: memref<1x1x32xf32, #tpu.memory_space<vmem>>, %arg4: memref<1x1x32xf32, #tpu.memory_space<vmem>>, %arg5: memref<1x32x96xbf16, #tpu.memory_space<vmem>>, %arg6: memref<1x1x96xf32, #tpu.memory_space<vmem>>, %arg7: memref<1x32x32xbf16, #tpu.memory_space<vmem>>, %arg8: memref<1x1x32xf32, #tpu.memory_space<vmem>>, %arg9: memref<1x1x32xf32, #tpu.memory_space<vmem>>, %arg10: memref<1x1x32xf32, #tpu.memory_space<vmem>>, %arg11: memref<1x32x128xbf16, #tpu.memory_space<vmem>>, %arg12: memref<1x1x128xf32, #tpu.memory_space<vmem>>, %arg13: memref<1x128x32xbf16, #tpu.memory_space<vmem>>, %arg14: memref<1x1x32xf32, #tpu.memory_space<vmem>>, %arg15: memref<8x2x32xf32, #tpu.memory_space<vmem>>, %arg16: memref<16x32xf32, #tpu.memory_space<vmem>>) attributes {dimension_semantics = [#tpu.dimension_semantics<parallel>, #tpu.dimension_semantics<arbitrary>], iteration_bounds = array<i64: 1, 2>, scalar_prefetch = 0 : i64, scratch_operands = 1 : i64, tpu.core_type = #tpu.core_type<tc>, window_params = [{transform_indices = @transform_0, window_bounds = array<i64: 8, 2, 32>}, {transform_indices = @transform_1, window_bounds = array<i64: 1, 1, 32>}, {transform_indices = @transform_2, window_bounds = array<i64: 1, 1, 32>}, {transform_indices = @transform_3, window_bounds = array<i64: 1, 32, 96>}, {transform_indices = @transform_4, window_bounds = array<i64: 1, 1, 96>}, {transform_indices = @transform_5, window_bounds = array<i64: 1, 32, 32>}, {transform_indices = @transform_6, window_bounds = array<i64: 1, 1, 32>}, {transform_indices = @transform_7, window_bounds = array<i64: 1, 1, 32>}, {transform_indices = @transform_8, window_bounds = array<i64: 1, 1, 32>}, {transform_indices = @transform_9, window_bounds = array<i64: 1, 32, 128>}, {transform_indices = @transform_10, window_bounds = array<i64: 1, 1, 128>}, {transform_indices = @transform_11, window_bounds = array<i64: 1, 128, 32>}, {transform_indices = @transform_12, window_bounds = array<i64: 1, 1, 32>}, {transform_indices = @transform_13, window_bounds = array<i64: 8, 2, 32>}]} {
    %c0_i32 = arith.constant 0 : i32
    %0 = arith.cmpi eq, %arg1, %c0_i32 : i32
    %1 = arith.extui %0 : i1 to i32
    %c0_i32_0 = arith.constant 0 : i32
    %2 = arith.cmpi ne, %1, %c0_i32_0 : i32
    scf.if %2 {
      %c0_64 = arith.constant 0 : index
      %c0_65 = arith.constant 0 : index
      %c0_66 = arith.constant 0 : index
      %160 = vector.load %arg2[%c0_64, %c0_65, %c0_66] : memref<8x2x32xf32, #tpu.memory_space<vmem>>, vector<8x2x32xf32>
      %161 = tpu.transpose %160, [1, 0, 2] : vector<8x2x32xf32> -> vector<2x8x32xf32>
      %162 = vector.shape_cast %161 : vector<2x8x32xf32> to vector<16x32xf32>
      %c0_67 = arith.constant 0 : index
      %c0_68 = arith.constant 0 : index
      %163 = vector.load %arg16[%c0_67, %c0_68] : memref<16x32xf32, #tpu.memory_space<vmem>>, vector<16x32xf32>
      tpu.vector_store %arg16[%c0_67, %c0_68], %162 {strides = array<i32>} : memref<16x32xf32, #tpu.memory_space<vmem>>, vector<16x32xf32>,
    } else {
    }
    %c0 = arith.constant 0 : index
    %c0_1 = arith.constant 0 : index
    %3 = vector.load %arg16[%c0, %c0_1] : memref<16x32xf32, #tpu.memory_space<vmem>>, vector<16x32xf32>
    %c0_2 = arith.constant 0 : index
    %c0_3 = arith.constant 0 : index
    %c0_4 = arith.constant 0 : index
    %4 = vector.load %arg3[%c0_2, %c0_3, %c0_4] : memref<1x1x32xf32, #tpu.memory_space<vmem>>, vector<1x1x32xf32>
    %5 = vector.shape_cast %4 : vector<1x1x32xf32> to vector<1x32xf32>
    %c0_5 = arith.constant 0 : index
    %c0_6 = arith.constant 0 : index
    %c0_7 = arith.constant 0 : index
    %6 = vector.load %arg4[%c0_5, %c0_6, %c0_7] : memref<1x1x32xf32, #tpu.memory_space<vmem>>, vector<1x1x32xf32>
    %7 = vector.shape_cast %6 : vector<1x1x32xf32> to vector<1x32xf32>
    %cst = arith.constant dense<0.000000e+00> : vector<16xf32>
    %8 = vector.multi_reduction <add>, %3, %cst [1] : vector<16x32xf32> to vector<16xf32>
    %9 = vector.shape_cast %8 : vector<16xf32> to vector<16x1xf32>
    %cst_8 = arith.constant 3.200000e+01 : f32
    %10 = vector.broadcast %cst_8 : f32 to vector<16x1xf32>
    %11 = arith.divf %9, %10 : vector<16x1xf32>
    %12 = vector.broadcast %11 : vector<16x1xf32> to vector<16x32xf32>
    %13 = arith.subf %3, %12 : vector<16x32xf32>
    %14 = arith.mulf %13, %13 : vector<16x32xf32>
    %cst_9 = arith.constant dense<0.000000e+00> : vector<16xf32>
    %15 = vector.multi_reduction <add>, %14, %cst_9 [1] : vector<16x32xf32> to vector<16xf32>
    %16 = vector.shape_cast %15 : vector<16xf32> to vector<16x1xf32>
    %cst_10 = arith.constant 3.200000e+01 : f32
    %17 = vector.broadcast %cst_10 : f32 to vector<16x1xf32>
    %18 = arith.divf %16, %17 : vector<16x1xf32>
    %19 = vector.broadcast %11 : vector<16x1xf32> to vector<16x32xf32>
    %20 = arith.subf %3, %19 : vector<16x32xf32>
    %cst_11 = arith.constant 9.99999974E-6 : f32
    %21 = vector.broadcast %cst_11 : f32 to vector<16x1xf32>
    %22 = arith.addf %18, %21 : vector<16x1xf32>
    %23 = math.rsqrt %22 : vector<16x1xf32>
    %24 = vector.broadcast %23 : vector<16x1xf32> to vector<16x32xf32>
    %25 = arith.mulf %20, %24 : vector<16x32xf32>
    %26 = vector.broadcast %5 : vector<1x32xf32> to vector<16x32xf32>
    %27 = arith.mulf %25, %26 : vector<16x32xf32>
    %28 = vector.broadcast %7 : vector<1x32xf32> to vector<16x32xf32>
    %29 = arith.addf %27, %28 : vector<16x32xf32>
    %30 = arith.truncf %29 : vector<16x32xf32> to vector<16x32xbf16>
    %c0_12 = arith.constant 0 : index
    %c0_13 = arith.constant 0 : index
    %c0_14 = arith.constant 0 : index
    %31 = vector.load %arg5[%c0_12, %c0_13, %c0_14] : memref<1x32x96xbf16, #tpu.memory_space<vmem>>, vector<1x32x96xbf16>
    %32 = vector.shape_cast %31 : vector<1x32x96xbf16> to vector<32x96xbf16>
    %cst_15 = arith.constant dense<0.000000e+00> : vector<16x96xf32>
    %33 = tpu.matmul %30, %32, %cst_15 {dimension_numbers = #tpu.dot_dimension_numbers<[1], [0], [0], [1], [0, 0, 1, 1], [], []>} : vector<16x32xbf16>, vector<32x96xbf16>, vector<16x96xf32> -> vector<16x96xf32>
    %c0_16 = arith.constant 0 : index
    %c0_17 = arith.constant 0 : index
    %c0_18 = arith.constant 0 : index
    %34 = vector.load %arg6[%c0_16, %c0_17, %c0_18] : memref<1x1x96xf32, #tpu.memory_space<vmem>>, vector<1x1x96xf32>
    %35 = vector.shape_cast %34 : vector<1x1x96xf32> to vector<1x96xf32>
    %36 = vector.broadcast %35 : vector<1x96xf32> to vector<16x96xf32>
    %37 = arith.addf %33, %36 : vector<16x96xf32>
    %38 = vector.extract_strided_slice %37 {offsets = [0, 0], sizes = [16, 32], strides = [1, 1]} : vector<16x96xf32> to vector<16x32xf32>
    %39 = vector.extract_strided_slice %37 {offsets = [0, 32], sizes = [16, 32], strides = [1, 1]} : vector<16x96xf32> to vector<16x32xf32>
    %40 = vector.extract_strided_slice %37 {offsets = [0, 64], sizes = [16, 32], strides = [1, 1]} : vector<16x96xf32> to vector<16x32xf32>
    %41 = vector.extract_strided_slice %38 {offsets = [0, 0], sizes = [8, 32], strides = [1, 1]} : vector<16x32xf32> to vector<8x32xf32>
    %42 = vector.shape_cast %41 : vector<8x32xf32> to vector<8x4x8xf32>
    %43 = tpu.transpose %42, [1, 0, 2] : vector<8x4x8xf32> -> vector<4x8x8xf32>
    %44 = arith.truncf %43 : vector<4x8x8xf32> to vector<4x8x8xbf16>
    %45 = vector.extract_strided_slice %39 {offsets = [0, 0], sizes = [8, 32], strides = [1, 1]} : vector<16x32xf32> to vector<8x32xf32>
    %46 = vector.shape_cast %45 : vector<8x32xf32> to vector<8x4x8xf32>
    %47 = tpu.transpose %46, [1, 0, 2] : vector<8x4x8xf32> -> vector<4x8x8xf32>
    %48 = arith.truncf %47 : vector<4x8x8xf32> to vector<4x8x8xbf16>
    %49 = vector.extract_strided_slice %40 {offsets = [0, 0], sizes = [8, 32], strides = [1, 1]} : vector<16x32xf32> to vector<8x32xf32>
    %50 = vector.shape_cast %49 : vector<8x32xf32> to vector<8x4x8xf32>
    %51 = tpu.transpose %50, [1, 0, 2] : vector<8x4x8xf32> -> vector<4x8x8xf32>
    %52 = arith.truncf %51 : vector<4x8x8xf32> to vector<4x8x8xbf16>
    "tpu.trace_start"() <{level = 10 : i32, message = "hqd,hkd->hqk"}> : () -> ()
    %cst_19 = arith.constant dense<0.000000e+00> : vector<4x8x8xf32>
    %53 = tpu.matmul %44, %48, %cst_19 {dimension_numbers = #tpu.dot_dimension_numbers<[2], [2], [1], [1], [0, 0, 0, 1, 1, 1], [0], [0]>} : vector<4x8x8xbf16>, vector<4x8x8xbf16>, vector<4x8x8xf32> -> vector<4x8x8xf32>
    "tpu.trace_stop"() : () -> ()
    %cst_20 = arith.constant dense<0xFF800000> : vector<4x8xf32>
    %54 = vector.multi_reduction <maximumf>, %53, %cst_20 [2] : vector<4x8x8xf32> to vector<4x8xf32>
    %55 = vector.shape_cast %54 : vector<4x8xf32> to vector<4x8x1xf32>
    %56 = vector.broadcast %55 : vector<4x8x1xf32> to vector<4x8x8xf32>
    %57 = arith.subf %53, %56 : vector<4x8x8xf32>
    %58 = math.exp %57 : vector<4x8x8xf32>
    %cst_21 = arith.constant dense<0.000000e+00> : vector<4x8xf32>
    %59 = vector.multi_reduction <add>, %58, %cst_21 [2] : vector<4x8x8xf32> to vector<4x8xf32>
    %60 = vector.shape_cast %59 : vector<4x8xf32> to vector<4x8x1xf32>
    %61 = tpu.reciprocal %60 {approx = true} : vector<4x8x1xf32> -> vector<4x8x1xf32>
    %62 = vector.broadcast %61 : vector<4x8x1xf32> to vector<4x8x8xf32>
    %63 = arith.mulf %58, %62 : vector<4x8x8xf32>
    %64 = arith.truncf %63 : vector<4x8x8xf32> to vector<4x8x8xbf16>
    "tpu.trace_start"() <{level = 10 : i32, message = "hqk,hkd->hqd"}> : () -> ()
    %cst_22 = arith.constant dense<0.000000e+00> : vector<4x8x8xf32>
    %65 = tpu.matmul %64, %52, %cst_22 {dimension_numbers = #tpu.dot_dimension_numbers<[2], [1], [1], [2], [0, 0, 0, 1, 1, 2], [0], [0]>} : vector<4x8x8xbf16>, vector<4x8x8xbf16>, vector<4x8x8xf32> -> vector<4x8x8xf32>
    "tpu.trace_stop"() : () -> ()
    %66 = tpu.transpose %65, [1, 0, 2] : vector<4x8x8xf32> -> vector<8x4x8xf32>
    %67 = vector.shape_cast %66 : vector<8x4x8xf32> to vector<8x32xf32>
    %68 = vector.extract_strided_slice %38 {offsets = [8, 0], sizes = [8, 32], strides = [1, 1]} : vector<16x32xf32> to vector<8x32xf32>
    %69 = vector.shape_cast %68 : vector<8x32xf32> to vector<8x4x8xf32>
    %70 = tpu.transpose %69, [1, 0, 2] : vector<8x4x8xf32> -> vector<4x8x8xf32>
    %71 = arith.truncf %70 : vector<4x8x8xf32> to vector<4x8x8xbf16>
    %72 = vector.extract_strided_slice %39 {offsets = [8, 0], sizes = [8, 32], strides = [1, 1]} : vector<16x32xf32> to vector<8x32xf32>
    %73 = vector.shape_cast %72 : vector<8x32xf32> to vector<8x4x8xf32>
    %74 = tpu.transpose %73, [1, 0, 2] : vector<8x4x8xf32> -> vector<4x8x8xf32>
    %75 = arith.truncf %74 : vector<4x8x8xf32> to vector<4x8x8xbf16>
    %76 = vector.extract_strided_slice %40 {offsets = [8, 0], sizes = [8, 32], strides = [1, 1]} : vector<16x32xf32> to vector<8x32xf32>
    %77 = vector.shape_cast %76 : vector<8x32xf32> to vector<8x4x8xf32>
    %78 = tpu.transpose %77, [1, 0, 2] : vector<8x4x8xf32> -> vector<4x8x8xf32>
    %79 = arith.truncf %78 : vector<4x8x8xf32> to vector<4x8x8xbf16>
    "tpu.trace_start"() <{level = 10 : i32, message = "hqd,hkd->hqk"}> : () -> ()
    %cst_23 = arith.constant dense<0.000000e+00> : vector<4x8x8xf32>
    %80 = tpu.matmul %71, %75, %cst_23 {dimension_numbers = #tpu.dot_dimension_numbers<[2], [2], [1], [1], [0, 0, 0, 1, 1, 1], [0], [0]>} : vector<4x8x8xbf16>, vector<4x8x8xbf16>, vector<4x8x8xf32> -> vector<4x8x8xf32>
    "tpu.trace_stop"() : () -> ()
    %cst_24 = arith.constant dense<0xFF800000> : vector<4x8xf32>
    %81 = vector.multi_reduction <maximumf>, %80, %cst_24 [2] : vector<4x8x8xf32> to vector<4x8xf32>
    %82 = vector.shape_cast %81 : vector<4x8xf32> to vector<4x8x1xf32>
    %83 = vector.broadcast %82 : vector<4x8x1xf32> to vector<4x8x8xf32>
    %84 = arith.subf %80, %83 : vector<4x8x8xf32>
    %85 = math.exp %84 : vector<4x8x8xf32>
    %cst_25 = arith.constant dense<0.000000e+00> : vector<4x8xf32>
    %86 = vector.multi_reduction <add>, %85, %cst_25 [2] : vector<4x8x8xf32> to vector<4x8xf32>
    %87 = vector.shape_cast %86 : vector<4x8xf32> to vector<4x8x1xf32>
    %88 = tpu.reciprocal %87 {approx = true} : vector<4x8x1xf32> -> vector<4x8x1xf32>
    %89 = vector.broadcast %88 : vector<4x8x1xf32> to vector<4x8x8xf32>
    %90 = arith.mulf %85, %89 : vector<4x8x8xf32>
    %91 = arith.truncf %90 : vector<4x8x8xf32> to vector<4x8x8xbf16>
    "tpu.trace_start"() <{level = 10 : i32, message = "hqk,hkd->hqd"}> : () -> ()
    %cst_26 = arith.constant dense<0.000000e+00> : vector<4x8x8xf32>
    %92 = tpu.matmul %91, %79, %cst_26 {dimension_numbers = #tpu.dot_dimension_numbers<[2], [1], [1], [2], [0, 0, 0, 1, 1, 2], [0], [0]>} : vector<4x8x8xbf16>, vector<4x8x8xbf16>, vector<4x8x8xf32> -> vector<4x8x8xf32>
    "tpu.trace_stop"() : () -> ()
    %93 = tpu.transpose %92, [1, 0, 2] : vector<4x8x8xf32> -> vector<8x4x8xf32>
    %94 = vector.shape_cast %93 : vector<8x4x8xf32> to vector<8x32xf32>
    %95 = tpu.concatenate %67, %94 in 0 : vector<8x32xf32>, vector<8x32xf32> -> vector<16x32xf32>
    %96 = arith.truncf %95 : vector<16x32xf32> to vector<16x32xbf16>
    %c0_27 = arith.constant 0 : index
    %c0_28 = arith.constant 0 : index
    %c0_29 = arith.constant 0 : index
    %97 = vector.load %arg7[%c0_27, %c0_28, %c0_29] : memref<1x32x32xbf16, #tpu.memory_space<vmem>>, vector<1x32x32xbf16>
    %98 = vector.shape_cast %97 : vector<1x32x32xbf16> to vector<32x32xbf16>
    %cst_30 = arith.constant dense<0.000000e+00> : vector<16x32xf32>
    %99 = tpu.matmul %96, %98, %cst_30 {dimension_numbers = #tpu.dot_dimension_numbers<[1], [0], [0], [1], [0, 0, 1, 1], [], []>} : vector<16x32xbf16>, vector<32x32xbf16>, vector<16x32xf32> -> vector<16x32xf32>
    %c0_31 = arith.constant 0 : index
    %c0_32 = arith.constant 0 : index
    %c0_33 = arith.constant 0 : index
    %100 = vector.load %arg8[%c0_31, %c0_32, %c0_33] : memref<1x1x32xf32, #tpu.memory_space<vmem>>, vector<1x1x32xf32>
    %101 = vector.shape_cast %100 : vector<1x1x32xf32> to vector<1x32xf32>
    %102 = vector.broadcast %101 : vector<1x32xf32> to vector<16x32xf32>
    %103 = arith.addf %99, %102 : vector<16x32xf32>
    %104 = arith.addf %3, %103 : vector<16x32xf32>
    %c0_34 = arith.constant 0 : index
    %c0_35 = arith.constant 0 : index
    %c0_36 = arith.constant 0 : index
    %105 = vector.load %arg9[%c0_34, %c0_35, %c0_36] : memref<1x1x32xf32, #tpu.memory_space<vmem>>, vector<1x1x32xf32>
    %106 = vector.shape_cast %105 : vector<1x1x32xf32> to vector<1x32xf32>
    %c0_37 = arith.constant 0 : index
    %c0_38 = arith.constant 0 : index
    %c0_39 = arith.constant 0 : index
    %107 = vector.load %arg10[%c0_37, %c0_38, %c0_39] : memref<1x1x32xf32, #tpu.memory_space<vmem>>, vector<1x1x32xf32>
    %108 = vector.shape_cast %107 : vector<1x1x32xf32> to vector<1x32xf32>
    %cst_40 = arith.constant dense<0.000000e+00> : vector<16xf32>
    %109 = vector.multi_reduction <add>, %104, %cst_40 [1] : vector<16x32xf32> to vector<16xf32>
    %110 = vector.shape_cast %109 : vector<16xf32> to vector<16x1xf32>
    %cst_41 = arith.constant 3.200000e+01 : f32
    %111 = vector.broadcast %cst_41 : f32 to vector<16x1xf32>
    %112 = arith.divf %110, %111 : vector<16x1xf32>
    %113 = vector.broadcast %112 : vector<16x1xf32> to vector<16x32xf32>
    %114 = arith.subf %104, %113 : vector<16x32xf32>
    %115 = arith.mulf %114, %114 : vector<16x32xf32>
    %cst_42 = arith.constant dense<0.000000e+00> : vector<16xf32>
    %116 = vector.multi_reduction <add>, %115, %cst_42 [1] : vector<16x32xf32> to vector<16xf32>
    %117 = vector.shape_cast %116 : vector<16xf32> to vector<16x1xf32>
    %cst_43 = arith.constant 3.200000e+01 : f32
    %118 = vector.broadcast %cst_43 : f32 to vector<16x1xf32>
    %119 = arith.divf %117, %118 : vector<16x1xf32>
    %120 = vector.broadcast %112 : vector<16x1xf32> to vector<16x32xf32>
    %121 = arith.subf %104, %120 : vector<16x32xf32>
    %cst_44 = arith.constant 9.99999974E-6 : f32
    %122 = vector.broadcast %cst_44 : f32 to vector<16x1xf32>
    %123 = arith.addf %119, %122 : vector<16x1xf32>
    %124 = math.rsqrt %123 : vector<16x1xf32>
    %125 = vector.broadcast %124 : vector<16x1xf32> to vector<16x32xf32>
    %126 = arith.mulf %121, %125 : vector<16x32xf32>
    %127 = vector.broadcast %106 : vector<1x32xf32> to vector<16x32xf32>
    %128 = arith.mulf %126, %127 : vector<16x32xf32>
    %129 = vector.broadcast %108 : vector<1x32xf32> to vector<16x32xf32>
    %130 = arith.addf %128, %129 : vector<16x32xf32>
    %131 = arith.truncf %130 : vector<16x32xf32> to vector<16x32xbf16>
    %c0_45 = arith.constant 0 : index
    %c0_46 = arith.constant 0 : index
    %c0_47 = arith.constant 0 : index
    %132 = vector.load %arg11[%c0_45, %c0_46, %c0_47] : memref<1x32x128xbf16, #tpu.memory_space<vmem>>, vector<1x32x128xbf16>
    %133 = vector.shape_cast %132 : vector<1x32x128xbf16> to vector<32x128xbf16>
    %cst_48 = arith.constant dense<0.000000e+00> : vector<16x128xf32>
    %134 = tpu.matmul %131, %133, %cst_48 {dimension_numbers = #tpu.dot_dimension_numbers<[1], [0], [0], [1], [0, 0, 1, 1], [], []>} : vector<16x32xbf16>, vector<32x128xbf16>, vector<16x128xf32> -> vector<16x128xf32>
    %c0_49 = arith.constant 0 : index
    %c0_50 = arith.constant 0 : index
    %c0_51 = arith.constant 0 : index
    %135 = vector.load %arg12[%c0_49, %c0_50, %c0_51] : memref<1x1x128xf32, #tpu.memory_space<vmem>>, vector<1x1x128xf32>
    %136 = vector.shape_cast %135 : vector<1x1x128xf32> to vector<1x128xf32>
    %137 = vector.broadcast %136 : vector<1x128xf32> to vector<16x128xf32>
    %138 = arith.addf %134, %137 : vector<16x128xf32>
    %cst_52 = arith.constant 1.702000e+00 : f32
    %139 = vector.broadcast %cst_52 : f32 to vector<16x128xf32>
    %140 = arith.mulf %139, %138 : vector<16x128xf32>
    %141 = arith.negf %140 : vector<16x128xf32>
    %142 = math.exp %141 : vector<16x128xf32>
    %cst_53 = arith.constant 1.000000e+00 : f32
    %143 = vector.broadcast %cst_53 : f32 to vector<16x128xf32>
    %144 = arith.addf %143, %142 : vector<16x128xf32>
    %145 = arith.divf %143, %144 : vector<16x128xf32>
    %146 = arith.mulf %138, %145 : vector<16x128xf32>
    %147 = arith.truncf %146 : vector<16x128xf32> to vector<16x128xbf16>
    %c0_54 = arith.constant 0 : index
    %c0_55 = arith.constant 0 : index
    %c0_56 = arith.constant 0 : index
    %148 = vector.load %arg13[%c0_54, %c0_55, %c0_56] : memref<1x128x32xbf16, #tpu.memory_space<vmem>>, vector<1x128x32xbf16>
    %149 = vector.shape_cast %148 : vector<1x128x32xbf16> to vector<128x32xbf16>
    %cst_57 = arith.constant dense<0.000000e+00> : vector<16x32xf32>
    %150 = tpu.matmul %147, %149, %cst_57 {dimension_numbers = #tpu.dot_dimension_numbers<[1], [0], [0], [1], [0, 0, 1, 1], [], []>} : vector<16x128xbf16>, vector<128x32xbf16>, vector<16x32xf32> -> vector<16x32xf32>
    %151 = arith.addf %104, %150 : vector<16x32xf32>
    %c0_58 = arith.constant 0 : index
    %c0_59 = arith.constant 0 : index
    %c0_60 = arith.constant 0 : index
    %152 = vector.load %arg14[%c0_58, %c0_59, %c0_60] : memref<1x1x32xf32, #tpu.memory_space<vmem>>, vector<1x1x32xf32>
    %153 = vector.shape_cast %152 : vector<1x1x32xf32> to vector<1x32xf32>
    %154 = vector.broadcast %153 : vector<1x32xf32> to vector<16x32xf32>
    %155 = arith.addf %151, %154 : vector<16x32xf32>
    %c0_61 = arith.constant 0 : index
    %c0_62 = arith.constant 0 : index
    %156 = vector.load %arg16[%c0_61, %c0_62] : memref<16x32xf32, #tpu.memory_space<vmem>>, vector<16x32xf32>
    tpu.vector_store %arg16[%c0_61, %c0_62], %155 {strides = array<i32>} : memref<16x32xf32, #tpu.memory_space<vmem>>, vector<16x32xf32>,
    %c1_i32 = arith.constant 1 : i32
    %157 = arith.cmpi eq, %arg1, %c1_i32 : i32
    %158 = arith.extui %157 : i1 to i32
    %c0_i32_63 = arith.constant 0 : i32
    %159 = arith.cmpi ne, %158, %c0_i32_63 : i32
    scf.if %159 {
      %160 = vector.shape_cast %155 : vector<16x32xf32> to vector<2x8x32xf32>
      %161 = tpu.transpose %160, [1, 0, 2] : vector<2x8x32xf32> -> vector<8x2x32xf32>
      %c0_64 = arith.constant 0 : index
      %c0_65 = arith.constant 0 : index
      %c0_66 = arith.constant 0 : index
      %162 = vector.load %arg15[%c0_64, %c0_65, %c0_66] : memref<8x2x32xf32, #tpu.memory_space<vmem>>, vector<8x2x32xf32>
      tpu.vector_store %arg15[%c0_64, %c0_65, %c0_66], %161 {strides = array<i32>} : memref<8x2x32xf32, #tpu.memory_space<vmem>>, vector<8x2x32xf32>,
    } else {
    }
    return
  }
  func.func @transform_0(%arg0: i32, %arg1: i32) -> (i32, i32, i32) {
    %c0_i32 = arith.constant 0 : i32
    %c0_i32_0 = arith.constant 0 : i32
    %c0_i32_1 = arith.constant 0 : i32
    return %c0_i32, %arg0, %c0_i32_0 : i32, i32, i32
  }
  func.func @transform_1(%arg0: i32, %arg1: i32) -> (i32, i32, i32) {
    %c0_i32 = arith.constant 0 : i32
    %c0_i32_0 = arith.constant 0 : i32
    %c0_i32_1 = arith.constant 0 : i32
    return %arg1, %c0_i32, %c0_i32_0 : i32, i32, i32
  }
  func.func @transform_2(%arg0: i32, %arg1: i32) -> (i32, i32, i32) {
    %c0_i32 = arith.constant 0 : i32
    %c0_i32_0 = arith.constant 0 : i32
    %c0_i32_1 = arith.constant 0 : i32
    return %arg1, %c0_i32, %c0_i32_0 : i32, i32, i32
  }
  func.func @transform_3(%arg0: i32, %arg1: i32) -> (i32, i32, i32) {
    %c0_i32 = arith.constant 0 : i32
    %c0_i32_0 = arith.constant 0 : i32
    %c0_i32_1 = arith.constant 0 : i32
    return %arg1, %c0_i32, %c0_i32_0 : i32, i32, i32
  }
  func.func @transform_4(%arg0: i32, %arg1: i32) -> (i32, i32, i32) {
    %c0_i32 = arith.constant 0 : i32
    %c0_i32_0 = arith.constant 0 : i32
    %c0_i32_1 = arith.constant 0 : i32
    return %arg1, %c0_i32, %c0_i32_0 : i32, i32, i32
  }
  func.func @transform_5(%arg0: i32, %arg1: i32) -> (i32, i32, i32) {
    %c0_i32 = arith.constant 0 : i32
    %c0_i32_0 = arith.constant 0 : i32
    %c0_i32_1 = arith.constant 0 : i32
    return %arg1, %c0_i32, %c0_i32_0 : i32, i32, i32
  }
  func.func @transform_6(%arg0: i32, %arg1: i32) -> (i32, i32, i32) {
    %c0_i32 = arith.constant 0 : i32
    %c0_i32_0 = arith.constant 0 : i32
    %c0_i32_1 = arith.constant 0 : i32
    return %arg1, %c0_i32, %c0_i32_0 : i32, i32, i32
  }
  func.func @transform_7(%arg0: i32, %arg1: i32) -> (i32, i32, i32) {
    %c0_i32 = arith.constant 0 : i32
    %c0_i32_0 = arith.constant 0 : i32
    %c0_i32_1 = arith.constant 0 : i32
    return %arg1, %c0_i32, %c0_i32_0 : i32, i32, i32
  }
  func.func @transform_8(%arg0: i32, %arg1: i32) -> (i32, i32, i32) {
    %c0_i32 = arith.constant 0 : i32
    %c0_i32_0 = arith.constant 0 : i32
    %c0_i32_1 = arith.constant 0 : i32
    return %arg1, %c0_i32, %c0_i32_0 : i32, i32, i32
  }
  func.func @transform_9(%arg0: i32, %arg1: i32) -> (i32, i32, i32) {
    %c0_i32 = arith.constant 0 : i32
    %c0_i32_0 = arith.constant 0 : i32
    %c0_i32_1 = arith.constant 0 : i32
    return %arg1, %c0_i32, %c0_i32_0 : i32, i32, i32
  }
  func.func @transform_10(%arg0: i32, %arg1: i32) -> (i32, i32, i32) {
    %c0_i32 = arith.constant 0 : i32
    %c0_i32_0 = arith.constant 0 : i32
    %c0_i32_1 = arith.constant 0 : i32
    return %arg1, %c0_i32, %c0_i32_0 : i32, i32, i32
  }
  func.func @transform_11(%arg0: i32, %arg1: i32) -> (i32, i32, i32) {
    %c0_i32 = arith.constant 0 : i32
    %c0_i32_0 = arith.constant 0 : i32
    %c0_i32_1 = arith.constant 0 : i32
    return %arg1, %c0_i32, %c0_i32_0 : i32, i32, i32
  }
  func.func @transform_12(%arg0: i32, %arg1: i32) -> (i32, i32, i32) {
    %c0_i32 = arith.constant 0 : i32
    %c0_i32_0 = arith.constant 0 : i32
    %c0_i32_1 = arith.constant 0 : i32
    return %arg1, %c0_i32, %c0_i32_0 : i32, i32, i32
  }
  func.func @transform_13(%arg0: i32, %arg1: i32) -> (i32, i32, i32) {
    %c0_i32 = arith.constant 0 : i32
    %c0_i32_0 = arith.constant 0 : i32
    %c0_i32_1 = arith.constant 0 : i32
    return %c0_i32, %arg0, %c0_i32_0 : i32, i32, i32
  }
}

</mosaic_0001>

<llo_original>
// kernel: tpu_custom_call.1
$region0: #{tpu_custom_call.1}
  #allocation0 [shape = 'u32[]', space=smem, size = 0x4, offset = 0x4, fixed_abs, tag = 'smem constant byte address 0x4 - core index']
  #allocation1 [shape = 'u32[144,128]{1,0:T(1,128)}', space=vmem, size = 0x12000, scoped, tag = 'internal scratch']
  #allocation2 [shape = 'f32[16,32]{1,0:T(8,128)}', space=vmem, size = 0x2000, scoped, tag = 'scratch operand']
  %s0 = inlined_call_operand.vmem [shape: f32[8,2,32], index: 0, kind: input, shape index: {}]
  %s1 = inlined_call_operand.vmem [shape: f32[2,1,32], index: 1, kind: input, shape index: {}]
  %s2 = inlined_call_operand.vmem [shape: f32[2,1,32], index: 2, kind: input, shape index: {}]
  %s3 = inlined_call_operand.vmem [shape: bf16[2,32,96], index: 3, kind: input, shape index: {}]
  %s4 = inlined_call_operand.vmem [shape: f32[2,1,96], index: 4, kind: input, shape index: {}]
  %s5 = inlined_call_operand.vmem [shape: bf16[2,32,32], index: 5, kind: input, shape index: {}]
  %s6 = inlined_call_operand.vmem [shape: f32[2,1,32], index: 6, kind: input, shape index: {}]
  %s7 = inlined_call_operand.vmem [shape: f32[2,1,32], index: 7, kind: input, shape index: {}]
  %s8 = inlined_call_operand.vmem [shape: f32[2,1,32], index: 8, kind: input, shape index: {}]
  %s9 = inlined_call_operand.vmem [shape: bf16[2,32,128], index: 9, kind: input, shape index: {}]
  %s10 = inlined_call_operand.vmem [shape: f32[2,1,128], index: 10, kind: input, shape index: {}]
  %s11 = inlined_call_operand.vmem [shape: bf16[2,128,32], index: 11, kind: input, shape index: {}]
  %s12 = inlined_call_operand.vmem [shape: f32[2,1,32], index: 12, kind: input, shape index: {}]
  %s13 = inlined_call_operand.hbm [shape: f32[8,2,32], index: 13, kind: output, shape index: {}]
  %s14 = sld [smem:[#allocation0]]
  $region93: #{tpu_custom_call.1} parent=0
    _
  %s16 = ssub.s32 1, %s14
  %s17 = scalar_select 0, %s16, %s14
  $region1: #{tpu_custom_call.1} parent=0
    #allocation3 [shape = 'u8[8192]{0}', space=vmem, size = 0x2000, scoped, tag = 'output window, operand 0, single buffered']
    #allocation4 [shape = 's32[2]{0}', space=sflag, size = 0x8, scoped, tag = 'scoped memory for tpu_custom_call.1']
    %18 = vsyncpa [#allocation4], 0
    loop: start=0, step=1, limit=4
    $region2: #{tpu_custom_call.1} parent=1 // loop_pre_header
      _
    $region3: #{tpu_custom_call.1} parent=1 // loop_header
      %s20 = sphi 0, %s24
      %p21 = scmp.ge.s32.totalorder %s20, 4
      %s27 = sphi 0, %s39
      %s28 = sphi 0, %s35
      %s29 = sphi 0, %s27
      %s30 = sphi 0, %s28
      %s31 = sphi 0, %s29
      %s32 = sphi 0, %s30
      %s42 = sphi 0, %s44
      %s45 = sphi 0, %s42
      %s46 = sphi 0, %s45
      %s62 = sphi 0, %s46
      %s68 = sphi 0, %s70
      %s71 = sphi 0, %s68
      %s72 = sphi 0, %s71
      %s88 = sphi 0, %s72
      %s94 = sphi 0, %s96
      %s97 = sphi 0, %s94
      %s98 = sphi 0, %s97
      %s114 = sphi 0, %s98
      %s120 = sphi 0, %s122
      %s123 = sphi 0, %s120
      %s124 = sphi 0, %s123
      %s140 = sphi 0, %s124
      %s146 = sphi 0, %s148
      %s149 = sphi 0, %s146
      %s150 = sphi 0, %s149
      %s166 = sphi 0, %s150
      %s172 = sphi 0, %s174
      %s175 = sphi 0, %s172
      %s176 = sphi 0, %s175
      %s192 = sphi 0, %s176
      %s198 = sphi 0, %s200
      %s201 = sphi 0, %s198
      %s202 = sphi 0, %s201
      %s218 = sphi 0, %s202
      %s224 = sphi 0, %s226
      %s227 = sphi 0, %s224
      %s228 = sphi 0, %s227
      %s244 = sphi 0, %s228
      %s250 = sphi 0, %s252
      %s253 = sphi 0, %s250
      %s254 = sphi 0, %s253
      %s270 = sphi 0, %s254
      %s276 = sphi 0, %s278
      %s279 = sphi 0, %s276
      %s280 = sphi 0, %s279
      %s296 = sphi 0, %s280
      %s302 = sphi 0, %s304
      %s305 = sphi 0, %s302
      %s306 = sphi 0, %s305
      %s322 = sphi 0, %s306
      %s328 = sphi 0, %s330
      %s331 = sphi 0, %s328
      %s332 = sphi 0, %s331
      %s348 = sphi 0, %s332
      %s354 = sphi 0, %s356
      %s357 = sphi 0, %s354
      %s358 = sphi 0, %s357
      %s374 = sphi 0, %s358
      %s380 = sphi 0, %s382
      %s383 = sphi 0, %s380
      %s384 = sphi 0, %s383
      %s400 = sphi 0, %s384
    $region4: #{tpu_custom_call.1} parent=1 // loop_header_branch
      %23 = sbr.rel (%p21) target = $region8
    $region5: #{tpu_custom_call.1} parent=1 // loop_body
      %s25 = ssub.s32 %s20, 1
      %s26 = ssub.s32 %s20, 2
      %s33 = sadd.s32 1, %s28
      %p34 = scmp.ge.s32.totalorder %s33, 2
      %s35 = scalar_select %p34, 0, %s33
      %s36 = sadd.s32 1, %s27
      %s37 = scalar_select %p34, %s36, %s27
      %p38 = scmp.ge.s32.totalorder %s37, 1
      %s39 = scalar_select %p38, 0, %s37
      %s40 = ssub.s32 %s27, %s39
      %p41 = scmp.eq.s32.totalorder %s40, 0
      %s43 = sadd.s32 %s42, 1
      %s44 = scalar_select %p41, %s42, %s43
      %p47 = pneg %p41
      %p48 = scmp.eq.s32.totalorder %s20, 1
      %p49 = por %p47, %p48
      %p50 = scmp.ne.s32.totalorder %s42, %s45
      %p51 = scmp.eq.s32.totalorder %s20, 0
      %p52 = por %p50, %p51
      %p53 = scmp.ne.s32.totalorder %s42, %s45
      %p54 = scmp.eq.s32.totalorder %s25, 1
      %p55 = por %p53, %p54
      %p56 = scmp.ne.s32.totalorder %s45, %s46
      %p57 = scmp.eq.s32.totalorder %s25, 0
      %p58 = por %p56, %p57
      %p59 = scmp.ne.s32.totalorder %s45, %s46
      %p60 = scmp.eq.s32.totalorder %s26, 1
      %p61 = por %p59, %p60
      %p63 = scmp.ne.s32.totalorder %s46, %s62
      %p64 = scmp.eq.s32.totalorder %s26, 0
      %p65 = por %p63, %p64
      %s66 = ssub.s32 %s28, %s35
      %p67 = scmp.eq.s32.totalorder %s66, 0
      %s69 = sadd.s32 %s68, 1
      %s70 = scalar_select %p67, %s68, %s69
      %p73 = pneg %p67
      %p74 = scmp.eq.s32.totalorder %s20, 1
      %p75 = por %p73, %p74
      %p76 = scmp.ne.s32.totalorder %s68, %s71
      %p77 = scmp.eq.s32.totalorder %s20, 0
      %p78 = por %p76, %p77
      %p79 = scmp.ne.s32.totalorder %s68, %s71
      %p80 = scmp.eq.s32.totalorder %s25, 1
      %p81 = por %p79, %p80
      %p82 = scmp.ne.s32.totalorder %s71, %s72
      %p83 = scmp.eq.s32.totalorder %s25, 0
      %p84 = por %p82, %p83
      %p85 = scmp.ne.s32.totalorder %s71, %s72
      %p86 = scmp.eq.s32.totalorder %s26, 1
      %p87 = por %p85, %p86
      %p89 = scmp.ne.s32.totalorder %s72, %s88
      %p90 = scmp.eq.s32.totalorder %s26, 0
      %p91 = por %p89, %p90
      %s92 = ssub.s32 %s28, %s35
      %p93 = scmp.eq.s32.totalorder %s92, 0
      %s95 = sadd.s32 %s94, 1
      %s96 = scalar_select %p93, %s94, %s95
      %p99 = pneg %p93
      %p100 = scmp.eq.s32.totalorder %s20, 1
      %p101 = por %p99, %p100
      %p102 = scmp.ne.s32.totalorder %s94, %s97
      %p103 = scmp.eq.s32.totalorder %s20, 0
      %p104 = por %p102, %p103
      %p105 = scmp.ne.s32.totalorder %s94, %s97
      %p106 = scmp.eq.s32.totalorder %s25, 1
      %p107 = por %p105, %p106
      %p108 = scmp.ne.s32.totalorder %s97, %s98
      %p109 = scmp.eq.s32.totalorder %s25, 0
      %p110 = por %p108, %p109
      %p111 = scmp.ne.s32.totalorder %s97, %s98
      %p112 = scmp.eq.s32.totalorder %s26, 1
      %p113 = por %p111, %p112
      %p115 = scmp.ne.s32.totalorder %s98, %s114
      %p116 = scmp.eq.s32.totalorder %s26, 0
      %p117 = por %p115, %p116
      %s118 = ssub.s32 %s28, %s35
      %p119 = scmp.eq.s32.totalorder %s118, 0
      %s121 = sadd.s32 %s120, 1
      %s122 = scalar_select %p119, %s120, %s121
      %p125 = pneg %p119
      %p126 = scmp.eq.s32.totalorder %s20, 1
      %p127 = por %p125, %p126
      %p128 = scmp.ne.s32.totalorder %s120, %s123
      %p129 = scmp.eq.s32.totalorder %s20, 0
      %p130 = por %p128, %p129
      %p131 = scmp.ne.s32.totalorder %s120, %s123
      %p132 = scmp.eq.s32.totalorder %s25, 1
      %p133 = por %p131, %p132
      %p134 = scmp.ne.s32.totalorder %s123, %s124
      %p135 = scmp.eq.s32.totalorder %s25, 0
      %p136 = por %p134, %p135
      %p137 = scmp.ne.s32.totalorder %s123, %s124
      %p138 = scmp.eq.s32.totalorder %s26, 1
      %p139 = por %p137, %p138
      %p141 = scmp.ne.s32.totalorder %s124, %s140
      %p142 = scmp.eq.s32.totalorder %s26, 0
      %p143 = por %p141, %p142
      %s144 = ssub.s32 %s28, %s35
      %p145 = scmp.eq.s32.totalorder %s144, 0
      %s147 = sadd.s32 %s146, 1
      %s148 = scalar_select %p145, %s146, %s147
      %p151 = pneg %p145
      %p152 = scmp.eq.s32.totalorder %s20, 1
      %p153 = por %p151, %p152
      %p154 = scmp.ne.s32.totalorder %s146, %s149
      %p155 = scmp.eq.s32.totalorder %s20, 0
      %p156 = por %p154, %p155
      %p157 = scmp.ne.s32.totalorder %s146, %s149
      %p158 = scmp.eq.s32.totalorder %s25, 1
      %p159 = por %p157, %p158
      %p160 = scmp.ne.s32.totalorder %s149, %s150
      %p161 = scmp.eq.s32.totalorder %s25, 0
      %p162 = por %p160, %p161
      %p163 = scmp.ne.s32.totalorder %s149, %s150
      %p164 = scmp.eq.s32.totalorder %s26, 1
      %p165 = por %p163, %p164
      %p167 = scmp.ne.s32.totalorder %s150, %s166
      %p168 = scmp.eq.s32.totalorder %s26, 0
      %p169 = por %p167, %p168
      %s170 = ssub.s32 %s28, %s35
      %p171 = scmp.eq.s32.totalorder %s170, 0
      %s173 = sadd.s32 %s172, 1
      %s174 = scalar_select %p171, %s172, %s173
      %p177 = pneg %p171
      %p178 = scmp.eq.s32.totalorder %s20, 1
      %p179 = por %p177, %p178
      %p180 = scmp.ne.s32.totalorder %s172, %s175
      %p181 = scmp.eq.s32.totalorder %s20, 0
      %p182 = por %p180, %p181
      %p183 = scmp.ne.s32.totalorder %s172, %s175
      %p184 = scmp.eq.s32.totalorder %s25, 1
      %p185 = por %p183, %p184
      %p186 = scmp.ne.s32.totalorder %s175, %s176
      %p187 = scmp.eq.s32.totalorder %s25, 0
      %p188 = por %p186, %p187
      %p189 = scmp.ne.s32.totalorder %s175, %s176
      %p190 = scmp.eq.s32.totalorder %s26, 1
      %p191 = por %p189, %p190
      %p193 = scmp.ne.s32.totalorder %s176, %s192
      %p194 = scmp.eq.s32.totalorder %s26, 0
      %p195 = por %p193, %p194
      %s196 = ssub.s32 %s28, %s35
      %p197 = scmp.eq.s32.totalorder %s196, 0
      %s199 = sadd.s32 %s198, 1
      %s200 = scalar_select %p197, %s198, %s199
      %p203 = pneg %p197
      %p204 = scmp.eq.s32.totalorder %s20, 1
      %p205 = por %p203, %p204
      %p206 = scmp.ne.s32.totalorder %s198, %s201
      %p207 = scmp.eq.s32.totalorder %s20, 0
      %p208 = por %p206, %p207
      %p209 = scmp.ne.s32.totalorder %s198, %s201
      %p210 = scmp.eq.s32.totalorder %s25, 1
      %p211 = por %p209, %p210
      %p212 = scmp.ne.s32.totalorder %s201, %s202
      %p213 = scmp.eq.s32.totalorder %s25, 0
      %p214 = por %p212, %p213
      %p215 = scmp.ne.s32.totalorder %s201, %s202
      %p216 = scmp.eq.s32.totalorder %s26, 1
      %p217 = por %p215, %p216
      %p219 = scmp.ne.s32.totalorder %s202, %s218
      %p220 = scmp.eq.s32.totalorder %s26, 0
      %p221 = por %p219, %p220
      %s222 = ssub.s32 %s28, %s35
      %p223 = scmp.eq.s32.totalorder %s222, 0
      %s225 = sadd.s32 %s224, 1
      %s226 = scalar_select %p223, %s224, %s225
      %p229 = pneg %p223
      %p230 = scmp.eq.s32.totalorder %s20, 1
      %p231 = por %p229, %p230
      %p232 = scmp.ne.s32.totalorder %s224, %s227
      %p233 = scmp.eq.s32.totalorder %s20, 0
      %p234 = por %p232, %p233
      %p235 = scmp.ne.s32.totalorder %s224, %s227
      %p236 = scmp.eq.s32.totalorder %s25, 1
      %p237 = por %p235, %p236
      %p238 = scmp.ne.s32.totalorder %s227, %s228
      %p239 = scmp.eq.s32.totalorder %s25, 0
      %p240 = por %p238, %p239
      %p241 = scmp.ne.s32.totalorder %s227, %s228
      %p242 = scmp.eq.s32.totalorder %s26, 1
      %p243 = por %p241, %p242
      %p245 = scmp.ne.s32.totalorder %s228, %s244
      %p246 = scmp.eq.s32.totalorder %s26, 0
      %p247 = por %p245, %p246
      %s248 = ssub.s32 %s28, %s35
      %p249 = scmp.eq.s32.totalorder %s248, 0
      %s251 = sadd.s32 %s250, 1
      %s252 = scalar_select %p249, %s250, %s251
      %p255 = pneg %p249
      %p256 = scmp.eq.s32.totalorder %s20, 1
      %p257 = por %p255, %p256
      %p258 = scmp.ne.s32.totalorder %s250, %s253
      %p259 = scmp.eq.s32.totalorder %s20, 0
      %p260 = por %p258, %p259
      %p261 = scmp.ne.s32.totalorder %s250, %s253
      %p262 = scmp.eq.s32.totalorder %s25, 1
      %p263 = por %p261, %p262
      %p264 = scmp.ne.s32.totalorder %s253, %s254
      %p265 = scmp.eq.s32.totalorder %s25, 0
      %p266 = por %p264, %p265
      %p267 = scmp.ne.s32.totalorder %s253, %s254
      %p268 = scmp.eq.s32.totalorder %s26, 1
      %p269 = por %p267, %p268
      %p271 = scmp.ne.s32.totalorder %s254, %s270
      %p272 = scmp.eq.s32.totalorder %s26, 0
      %p273 = por %p271, %p272
      %s274 = ssub.s32 %s28, %s35
      %p275 = scmp.eq.s32.totalorder %s274, 0
      %s277 = sadd.s32 %s276, 1
      %s278 = scalar_select %p275, %s276, %s277
      %p281 = pneg %p275
      %p282 = scmp.eq.s32.totalorder %s20, 1
      %p283 = por %p281, %p282
      %p284 = scmp.ne.s32.totalorder %s276, %s279
      %p285 = scmp.eq.s32.totalorder %s20, 0
      %p286 = por %p284, %p285
      %p287 = scmp.ne.s32.totalorder %s276, %s279
      %p288 = scmp.eq.s32.totalorder %s25, 1
      %p289 = por %p287, %p288
      %p290 = scmp.ne.s32.totalorder %s279, %s280
      %p291 = scmp.eq.s32.totalorder %s25, 0
      %p292 = por %p290, %p291
      %p293 = scmp.ne.s32.totalorder %s279, %s280
      %p294 = scmp.eq.s32.totalorder %s26, 1
      %p295 = por %p293, %p294
      %p297 = scmp.ne.s32.totalorder %s280, %s296
      %p298 = scmp.eq.s32.totalorder %s26, 0
      %p299 = por %p297, %p298
      %s300 = ssub.s32 %s28, %s35
      %p301 = scmp.eq.s32.totalorder %s300, 0
      %s303 = sadd.s32 %s302, 1
      %s304 = scalar_select %p301, %s302, %s303
      %p307 = pneg %p301
      %p308 = scmp.eq.s32.totalorder %s20, 1
      %p309 = por %p307, %p308
      %p310 = scmp.ne.s32.totalorder %s302, %s305
      %p311 = scmp.eq.s32.totalorder %s20, 0
      %p312 = por %p310, %p311
      %p313 = scmp.ne.s32.totalorder %s302, %s305
      %p314 = scmp.eq.s32.totalorder %s25, 1
      %p315 = por %p313, %p314
      %p316 = scmp.ne.s32.totalorder %s305, %s306
      %p317 = scmp.eq.s32.totalorder %s25, 0
      %p318 = por %p316, %p317
      %p319 = scmp.ne.s32.totalorder %s305, %s306
      %p320 = scmp.eq.s32.totalorder %s26, 1
      %p321 = por %p319, %p320
      %p323 = scmp.ne.s32.totalorder %s306, %s322
      %p324 = scmp.eq.s32.totalorder %s26, 0
      %p325 = por %p323, %p324
      %s326 = ssub.s32 %s28, %s35
      %p327 = scmp.eq.s32.totalorder %s326, 0
      %s329 = sadd.s32 %s328, 1
      %s330 = scalar_select %p327, %s328, %s329
      %p333 = pneg %p327
      %p334 = scmp.eq.s32.totalorder %s20, 1
      %p335 = por %p333, %p334
      %p336 = scmp.ne.s32.totalorder %s328, %s331
      %p337 = scmp.eq.s32.totalorder %s20, 0
      %p338 = por %p336, %p337
      %p339 = scmp.ne.s32.totalorder %s328, %s331
      %p340 = scmp.eq.s32.totalorder %s25, 1
      %p341 = por %p339, %p340
      %p342 = scmp.ne.s32.totalorder %s331, %s332
      %p343 = scmp.eq.s32.totalorder %s25, 0
      %p344 = por %p342, %p343
      %p345 = scmp.ne.s32.totalorder %s331, %s332
      %p346 = scmp.eq.s32.totalorder %s26, 1
      %p347 = por %p345, %p346
      %p349 = scmp.ne.s32.totalorder %s332, %s348
      %p350 = scmp.eq.s32.totalorder %s26, 0
      %p351 = por %p349, %p350
      %s352 = ssub.s32 %s28, %s35
      %p353 = scmp.eq.s32.totalorder %s352, 0
      %s355 = sadd.s32 %s354, 1
      %s356 = scalar_select %p353, %s354, %s355
      %p359 = pneg %p353
      %p360 = scmp.eq.s32.totalorder %s20, 1
      %p361 = por %p359, %p360
      %p362 = scmp.ne.s32.totalorder %s354, %s357
      %p363 = scmp.eq.s32.totalorder %s20, 0
      %p364 = por %p362, %p363
      %p365 = scmp.ne.s32.totalorder %s354, %s357
      %p366 = scmp.eq.s32.totalorder %s25, 1
      %p367 = por %p365, %p366
      %p368 = scmp.ne.s32.totalorder %s357, %s358
      %p369 = scmp.eq.s32.totalorder %s25, 0
      %p370 = por %p368, %p369
      %p371 = scmp.ne.s32.totalorder %s357, %s358
      %p372 = scmp.eq.s32.totalorder %s26, 1
      %p373 = por %p371, %p372
      %p375 = scmp.ne.s32.totalorder %s358, %s374
      %p376 = scmp.eq.s32.totalorder %s26, 0
      %p377 = por %p375, %p376
      %s378 = ssub.s32 %s27, %s39
      %p379 = scmp.eq.s32.totalorder %s378, 0
      %s381 = sadd.s32 %s380, 1
      %s382 = scalar_select %p379, %s380, %s381
      %p385 = pneg %p379
      %p386 = scmp.eq.s32.totalorder %s20, 1
      %p387 = por %p385, %p386
      %p388 = scmp.ne.s32.totalorder %s380, %s383
      %p389 = scmp.eq.s32.totalorder %s20, 0
      %p390 = por %p388, %p389
      %p391 = scmp.ne.s32.totalorder %s380, %s383
      %p392 = scmp.eq.s32.totalorder %s25, 1
      %p393 = por %p391, %p392
      %p394 = scmp.ne.s32.totalorder %s383, %s384
      %p395 = scmp.eq.s32.totalorder %s25, 0
      %p396 = por %p394, %p395
      %p397 = scmp.ne.s32.totalorder %s383, %s384
      %p398 = scmp.eq.s32.totalorder %s26, 1
      %p399 = por %p397, %p398
      %p401 = scmp.ne.s32.totalorder %s384, %s400
      %p402 = scmp.eq.s32.totalorder %s26, 0
      %p403 = por %p401, %p402
      %p404 = scmp.le.s32.totalorder 1, %s20
      %p405 = scmp.lt.s32.totalorder %s20, 3
      %p406 = pnand %p404, %p405
      %p407 = pneg %p406
      // Predicated region
      $region9: #{tpu_custom_call.1} parent=5 // pred_check
        _
      $region10: #{tpu_custom_call.1} parent=5 // pred_check_branch
        %409 = sbr.rel (%p406) target = $region12
      $region11: #{tpu_custom_call.1} parent=5 // pred_region
        %s410 = ssub.s32 %s20, 1
        // Predicated region
        $region13: #{tpu_custom_call.1} parent=11 // pred_check
          %p411 = pneg %p58
        $region14: #{tpu_custom_call.1} parent=11 // pred_check_branch
          %413 = sbr.rel (%p411) target = $region16
        $region15: #{tpu_custom_call.1} parent=11 // pred_region
          %p414 = scmp.lt.s32.totalorder %s29, 0
          %s415 = scalar_select %p414, %s29, 0
          %s416 = smul.addr %s415, 2
          %s417 = scalar_lea.vmem %s0, %s416
        $region16: #{tpu_custom_call.1} parent=11 // pred_fallthru
          _
      $region12: #{tpu_custom_call.1} parent=5 // pred_fallthru
        _
      %p418 = scmp.lt.s32.totalorder %s20, 2
      // Predicated region
      $region17: #{tpu_custom_call.1} parent=5 // pred_check
        %p419 = pneg %p418
      $region18: #{tpu_custom_call.1} parent=5 // pred_check_branch
        %421 = sbr.rel (%p419) target = $region20
      $region19: #{tpu_custom_call.1} parent=5 // pred_region
        // Predicated region
        $region21: #{tpu_custom_call.1} parent=19 // pred_check
          %p422 = pneg %p78
        $region22: #{tpu_custom_call.1} parent=19 // pred_check_branch
          %424 = sbr.rel (%p422) target = $region24
        $region23: #{tpu_custom_call.1} parent=19 // pred_region
          %p425 = scmp.lt.s32.totalorder %s28, 1
          %s426 = scalar_select %p425, %s28, 1
          %s427 = scalar_lea.vmem %s1, %s426
        $region24: #{tpu_custom_call.1} parent=19 // pred_fallthru
          _
        // Predicated region
        $region25: #{tpu_custom_call.1} parent=19 // pred_check
          %p428 = pneg %p104
        $region26: #{tpu_custom_call.1} parent=19 // pred_check_branch
          %430 = sbr.rel (%p428) target = $region28
        $region27: #{tpu_custom_call.1} parent=19 // pred_region
          %p431 = scmp.lt.s32.totalorder %s28, 1
          %s432 = scalar_select %p431, %s28, 1
          %s433 = scalar_lea.vmem %s2, %s432
        $region28: #{tpu_custom_call.1} parent=19 // pred_fallthru
          _
        // Predicated region
        $region29: #{tpu_custom_call.1} parent=19 // pred_check
          %p434 = pneg %p130
        $region30: #{tpu_custom_call.1} parent=19 // pred_check_branch
          %436 = sbr.rel (%p434) target = $region32
        $region31: #{tpu_custom_call.1} parent=19 // pred_region
          %p437 = scmp.lt.s32.totalorder %s28, 1
          %s438 = scalar_select %p437, %s28, 1
          %s439 = smul.addr %s438, 4
          %s440 = smul.addr %s439, 4
          %s441 = scalar_lea.vmem %s3, %s440
        $region32: #{tpu_custom_call.1} parent=19 // pred_fallthru
          _
        // Predicated region
        $region33: #{tpu_custom_call.1} parent=19 // pred_check
          %p442 = pneg %p156
        $region34: #{tpu_custom_call.1} parent=19 // pred_check_branch
          %444 = sbr.rel (%p442) target = $region36
        $region35: #{tpu_custom_call.1} parent=19 // pred_region
          %p445 = scmp.lt.s32.totalorder %s28, 1
          %s446 = scalar_select %p445, %s28, 1
          %s447 = scalar_lea.vmem %s4, %s446
        $region36: #{tpu_custom_call.1} parent=19 // pred_fallthru
          _
        // Predicated region
        $region37: #{tpu_custom_call.1} parent=19 // pred_check
          %p448 = pneg %p182
        $region38: #{tpu_custom_call.1} parent=19 // pred_check_branch
          %450 = sbr.rel (%p448) target = $region40
        $region39: #{tpu_custom_call.1} parent=19 // pred_region
          %p451 = scmp.lt.s32.totalorder %s28, 1
          %s452 = scalar_select %p451, %s28, 1
          %s453 = smul.addr %s452, 4
          %s454 = smul.addr %s453, 4
          %s455 = scalar_lea.vmem %s5, %s454
        $region40: #{tpu_custom_call.1} parent=19 // pred_fallthru
          _
        // Predicated region
        $region41: #{tpu_custom_call.1} parent=19 // pred_check
          %p456 = pneg %p208
        $region42: #{tpu_custom_call.1} parent=19 // pred_check_branch
          %458 = sbr.rel (%p456) target = $region44
        $region43: #{tpu_custom_call.1} parent=19 // pred_region
          %p459 = scmp.lt.s32.totalorder %s28, 1
          %s460 = scalar_select %p459, %s28, 1
          %s461 = scalar_lea.vmem %s6, %s460
        $region44: #{tpu_custom_call.1} parent=19 // pred_fallthru
          _
        // Predicated region
        $region45: #{tpu_custom_call.1} parent=19 // pred_check
          %p462 = pneg %p234
        $region46: #{tpu_custom_call.1} parent=19 // pred_check_branch
          %464 = sbr.rel (%p462) target = $region48
        $region47: #{tpu_custom_call.1} parent=19 // pred_region
          %p465 = scmp.lt.s32.totalorder %s28, 1
          %s466 = scalar_select %p465, %s28, 1
          %s467 = scalar_lea.vmem %s7, %s466
        $region48: #{tpu_custom_call.1} parent=19 // pred_fallthru
          _
        // Predicated region
        $region49: #{tpu_custom_call.1} parent=19 // pred_check
          %p468 = pneg %p260
        $region50: #{tpu_custom_call.1} parent=19 // pred_check_branch
          %470 = sbr.rel (%p468) target = $region52
        $region51: #{tpu_custom_call.1} parent=19 // pred_region
          %p471 = scmp.lt.s32.totalorder %s28, 1
          %s472 = scalar_select %p471, %s28, 1
          %s473 = scalar_lea.vmem %s8, %s472
        $region52: #{tpu_custom_call.1} parent=19 // pred_fallthru
          _
        // Predicated region
        $region53: #{tpu_custom_call.1} parent=19 // pred_check
          %p474 = pneg %p286
        $region54: #{tpu_custom_call.1} parent=19 // pred_check_branch
          %476 = sbr.rel (%p474) target = $region56
        $region55: #{tpu_custom_call.1} parent=19 // pred_region
          %p477 = scmp.lt.s32.totalorder %s28, 1
          %s478 = scalar_select %p477, %s28, 1
          %s479 = smul.addr %s478, 4
          %s480 = smul.addr %s479, 4
          %s481 = scalar_lea.vmem %s9, %s480
        $region56: #{tpu_custom_call.1} parent=19 // pred_fallthru
          _
        // Predicated region
        $region57: #{tpu_custom_call.1} parent=19 // pred_check
          %p482 = pneg %p312
        $region58: #{tpu_custom_call.1} parent=19 // pred_check_branch
          %484 = sbr.rel (%p482) target = $region60
        $region59: #{tpu_custom_call.1} parent=19 // pred_region
          %p485 = scmp.lt.s32.totalorder %s28, 1
          %s486 = scalar_select %p485, %s28, 1
          %s487 = scalar_lea.vmem %s10, %s486
        $region60: #{tpu_custom_call.1} parent=19 // pred_fallthru
          _
        // Predicated region
        $region61: #{tpu_custom_call.1} parent=19 // pred_check
          %p488 = pneg %p338
        $region62: #{tpu_custom_call.1} parent=19 // pred_check_branch
          %490 = sbr.rel (%p488) target = $region64
        $region63: #{tpu_custom_call.1} parent=19 // pred_region
          %p491 = scmp.lt.s32.totalorder %s28, 1
          %s492 = scalar_select %p491, %s28, 1
          %s493 = smul.addr %s492, 16
          %s494 = smul.addr %s493, 4
          %s495 = scalar_lea.vmem %s11, %s494
        $region64: #{tpu_custom_call.1} parent=19 // pred_fallthru
          _
        // Predicated region
        $region65: #{tpu_custom_call.1} parent=19 // pred_check
          %p496 = pneg %p364
        $region66: #{tpu_custom_call.1} parent=19 // pred_check_branch
          %498 = sbr.rel (%p496) target = $region68
        $region67: #{tpu_custom_call.1} parent=19 // pred_region
          %p499 = scmp.lt.s32.totalorder %s28, 1
          %s500 = scalar_select %p499, %s28, 1
          %s501 = scalar_lea.vmem %s12, %s500
        $region68: #{tpu_custom_call.1} parent=19 // pred_fallthru
          _
      $region20: #{tpu_custom_call.1} parent=5 // pred_fallthru
        _
      %p502 = scmp.le.s32.totalorder 1, %s20
      %p503 = scmp.lt.s32.totalorder %s20, 3
      %p504 = pnand %p502, %p503
      %p505 = pneg %p504
      // Predicated region
      $region69: #{tpu_custom_call.1} parent=5 // pred_check
        _
      $region70: #{tpu_custom_call.1} parent=5 // pred_check_branch
        %507 = sbr.rel (%p504) target = $region72
      $region71: #{tpu_custom_call.1} parent=5 // pred_region
        %s508 = ssub.s32 %s20, 1
        %p509 = scmp.lt.s32.totalorder %s29, 0
        %s510 = scalar_select %p509, %s29, 0
        %s511 = smul.addr %s510, 2
        %s512 = scalar_lea.vmem %s0, %s511
        %p513 = pneg %p58
        %p514 = pneg %p55
        %p515 = scmp.lt.s32.totalorder %s30, 1
        %s516 = scalar_select %p515, %s30, 1
        %s517 = scalar_lea.vmem %s1, %s516
        %p518 = pneg %p84
        %p519 = pneg %p81
        %p520 = scmp.lt.s32.totalorder %s30, 1
        %s521 = scalar_select %p520, %s30, 1
        %s522 = scalar_lea.vmem %s2, %s521
        %p523 = pneg %p110
        %p524 = pneg %p107
        %p525 = scmp.lt.s32.totalorder %s30, 1
        %s526 = scalar_select %p525, %s30, 1
        %s527 = smul.addr %s526, 4
        %s528 = smul.addr %s527, 4
        %s529 = scalar_lea.vmem %s3, %s528
        %p530 = pneg %p136
        %p531 = pneg %p133
        %p532 = scmp.lt.s32.totalorder %s30, 1
        %s533 = scalar_select %p532, %s30, 1
        %s534 = scalar_lea.vmem %s4, %s533
        %p535 = pneg %p162
        %p536 = pneg %p159
        %p537 = scmp.lt.s32.totalorder %s30, 1
        %s538 = scalar_select %p537, %s30, 1
        %s539 = smul.addr %s538, 4
        %s540 = smul.addr %s539, 4
        %s541 = scalar_lea.vmem %s5, %s540
        %p542 = pneg %p188
        %p543 = pneg %p185
        %p544 = scmp.lt.s32.totalorder %s30, 1
        %s545 = scalar_select %p544, %s30, 1
        %s546 = scalar_lea.vmem %s6, %s545
        %p547 = pneg %p214
        %p548 = pneg %p211
        %p549 = scmp.lt.s32.totalorder %s30, 1
        %s550 = scalar_select %p549, %s30, 1
        %s551 = scalar_lea.vmem %s7, %s550
        %p552 = pneg %p240
        %p553 = pneg %p237
        %p554 = scmp.lt.s32.totalorder %s30, 1
        %s555 = scalar_select %p554, %s30, 1
        %s556 = scalar_lea.vmem %s8, %s555
        %p557 = pneg %p266
        %p558 = pneg %p263
        %p559 = scmp.lt.s32.totalorder %s30, 1
        %s560 = scalar_select %p559, %s30, 1
        %s561 = smul.addr %s560, 4
        %s562 = smul.addr %s561, 4
        %s563 = scalar_lea.vmem %s9, %s562
        %p564 = pneg %p292
        %p565 = pneg %p289
        %p566 = scmp.lt.s32.totalorder %s30, 1
        %s567 = scalar_select %p566, %s30, 1
        %s568 = scalar_lea.vmem %s10, %s567
        %p569 = pneg %p318
        %p570 = pneg %p315
        %p571 = scmp.lt.s32.totalorder %s30, 1
        %s572 = scalar_select %p571, %s30, 1
        %s573 = smul.addr %s572, 16
        %s574 = smul.addr %s573, 4
        %s575 = scalar_lea.vmem %s11, %s574
        %p576 = pneg %p344
        %p577 = pneg %p341
        %p578 = scmp.lt.s32.totalorder %s30, 1
        %s579 = scalar_select %p578, %s30, 1
        %s580 = scalar_lea.vmem %s12, %s579
        %p581 = pneg %p370
        %p582 = pneg %p367
        %p583 = pneg %p396
        %p584 = pneg %p393
        %p585 = scmp.lt.s32.totalorder %s29, 0
        %s586 = scalar_select %p585, %s29, 0
        %s587 = smul.addr %s586, 2
        %s588 = scalar_lea.vmem %s0, %s587
        %p589 = scmp.lt.s32.totalorder %s30, 1
        %s590 = scalar_select %p589, %s30, 1
        %s591 = scalar_lea.vmem %s1, %s590
        %p592 = scmp.lt.s32.totalorder %s30, 1
        %s593 = scalar_select %p592, %s30, 1
        %s594 = scalar_lea.vmem %s2, %s593
        %p595 = scmp.lt.s32.totalorder %s30, 1
        %s596 = scalar_select %p595, %s30, 1
        %s597 = smul.addr %s596, 4
        %s598 = smul.addr %s597, 4
        %s599 = scalar_lea.vmem %s3, %s598
        %p600 = scmp.lt.s32.totalorder %s30, 1
        %s601 = scalar_select %p600, %s30, 1
        %s602 = scalar_lea.vmem %s4, %s601
        %p603 = scmp.lt.s32.totalorder %s30, 1
        %s604 = scalar_select %p603, %s30, 1
        %s605 = smul.addr %s604, 4
        %s606 = smul.addr %s605, 4
        %s607 = scalar_lea.vmem %s5, %s606
        %p608 = scmp.lt.s32.totalorder %s30, 1
        %s609 = scalar_select %p608, %s30, 1
        %s610 = scalar_lea.vmem %s6, %s609
        %p611 = scmp.lt.s32.totalorder %s30, 1
        %s612 = scalar_select %p611, %s30, 1
        %s613 = scalar_lea.vmem %s7, %s612
        %p614 = scmp.lt.s32.totalorder %s30, 1
        %s615 = scalar_select %p614, %s30, 1
        %s616 = scalar_lea.vmem %s8, %s615
        %p617 = scmp.lt.s32.totalorder %s30, 1
        %s618 = scalar_select %p617, %s30, 1
        %s619 = smul.addr %s618, 4
        %s620 = smul.addr %s619, 4
        %s621 = scalar_lea.vmem %s9, %s620
        %p622 = scmp.lt.s32.totalorder %s30, 1
        %s623 = scalar_select %p622, %s30, 1
        %s624 = scalar_lea.vmem %s10, %s623
        %p625 = scmp.lt.s32.totalorder %s30, 1
        %s626 = scalar_select %p625, %s30, 1
        %s627 = smul.addr %s626, 16
        %s628 = smul.addr %s627, 4
        %s629 = scalar_lea.vmem %s11, %s628
        %p630 = scmp.lt.s32.totalorder %s30, 1
        %s631 = scalar_select %p630, %s30, 1
        %s632 = scalar_lea.vmem %s12, %s631
        %p634 = scmp.eq.s32.totalorder %s30, 0
        // Predicated region
        $region73: #{tpu_custom_call.1} parent=71 // pred_check
          %p635 = pneg %p634
        $region74: #{tpu_custom_call.1} parent=71 // pred_check_branch
          %637 = sbr.rel (%p635) target = $region76
        $region75: #{tpu_custom_call.1} parent=71 // pred_region
          %v638 = vld [vmem:[%s588] sm:$0x3]
          %v639 = vld [vmem:[%s588 + $0x2] sm:$0x3]
          %v640 = vld [vmem:[%s588 + $0x4] sm:$0x3]
          %v641 = vld [vmem:[%s588 + $0x6] sm:$0x3]
          %v642 = vld [vmem:[%s588 + $0x8] sm:$0x3]
          %v643 = vld [vmem:[%s588 + $0xa] sm:$0x3]
          %v644 = vld [vmem:[%s588 + $0xc] sm:$0x3]
          %v645 = vld [vmem:[%s588 + $0xe] sm:$0x3]
          %v646 = vcombine.low %v638, %v640
          %v648 = vunpack.c.l.s4 1983009808
          %v649 = vunpack.c.0.s8 %v648
          %v650 = vlaneseq
          %v651 = vshrl.u32 %v650, 7
          %v652 = vsub.s32 %v649, %v651
          %v653 = vrot.slane %v646, %v652
          %v654 = vcombine.low %v639, %v641
          %v656 = vunpack.c.l.s4 1983009808
          %v657 = vunpack.c.0.s8 %v656
          %v658 = vlaneseq
          %v659 = vshrl.u32 %v658, 7
          %v660 = vsub.s32 %v657, %v659
          %v661 = vrot.slane %v654, %v660
          %v662 = vcombine.low %v642, %v644
          %v664 = vunpack.c.l.s4 1983009808
          %v665 = vunpack.c.0.s8 %v664
          %v666 = vlaneseq
          %v667 = vshrl.u32 %v666, 7
          %v668 = vsub.s32 %v665, %v667
          %v669 = vrot.slane %v662, %v668
          %v670 = vcombine.low %v643, %v645
          %v672 = vunpack.c.l.s4 1983009808
          %v673 = vunpack.c.0.s8 %v672
          %v674 = vlaneseq
          %v675 = vshrl.u32 %v674, 7
          %v676 = vsub.s32 %v673, %v675
          %v677 = vrot.slane %v670, %v676
          %v678 = vcombine.low %v653, %v661
          %v680 = vunpack.c.l.s4 1934713408
          %v681 = vunpack.c.0.s8 %v680
          %v682 = vlaneseq
          %v683 = vshrl.u32 %v682, 7
          %v684 = vsub.s32 %v681, %v683
          %v685 = vrot.slane %v678, %v684
          %v686 = vcombine.low %v669, %v677
          %v688 = vunpack.c.l.s4 1934713408
          %v689 = vunpack.c.0.s8 %v688
          %v690 = vlaneseq
          %v691 = vshrl.u32 %v690, 7
          %v692 = vsub.s32 %v689, %v691
          %v693 = vrot.slane %v686, %v692
          %v694 = vcombine.low %v685, %v693
          %v695 = vcombine.high %v685, %v693
          %vm696 = vcmask 261120
          %697 = vst.msk [vmem:[#allocation2] sm:$0xff] %vm696, %v694
          %698 = vst.msk [vmem:[#allocation2 + $0x8] sm:$0xff] %vm696, %v695
        $region76: #{tpu_custom_call.1} parent=71 // pred_fallthru
          _
        %v699 = vld [vmem:[#allocation2] sm:$0xff]
        %v700 = vld [vmem:[#allocation2 + $0x8] sm:$0xff]
        %v701 = vld [vmem:[%s591] sm:$0x1]
        %v702 = vld [vmem:[%s594] sm:$0x1]
        %vm703 = vcmask 261120
        %v704 = vsel %vm703, %v699, 0.0
        %705 = vadd.xlane.f32.xlu0 %v704
        %v706 = vpop.xlane.xlu0 %705
        %v707 = vsel %vm703, %v700, 0.0
        %708 = vadd.xlane.f32.xlu0 %v707
        %v709 = vpop.xlane.xlu0 %708
        %v710 = vrcp.pop 32.0
        %v711 = vmul.f32 %v706, %v710
        %v712 = vmul.f32 %v709, %v710
        %v713 = vsub.f32 %v699, %v711
        %v714 = vsub.f32 %v700, %v712
        %v715 = vmul.f32 %v713, %v713
        %v716 = vmul.f32 %v714, %v714
        %v717 = vsel %vm703, %v715, 0.0
        %718 = vadd.xlane.f32.xlu0 %v717
        %v719 = vpop.xlane.xlu0 %718
        %v720 = vsel %vm703, %v716, 0.0
        %721 = vadd.xlane.f32.xlu0 %v720
        %v722 = vpop.xlane.xlu0 %721
        %v723 = vmul.f32 %v719, %v710
        %v724 = vmul.f32 %v722, %v710
        %v725 = vadd.f32 %v723, 1e-05
        %v726 = vadd.f32 %v724, 1e-05
        %v727 = vrsqrt.pop %v725
        %v728 = vrsqrt.pop %v726
        %v729 = vmul.f32 %v713, %v727
        %v730 = vmul.f32 %v714, %v728
        %v732 = vlaneseq
        %v733 = vshrl.u32 %v732, 7
        %v734 = vsub.s32 0, %v733
        %v735 = vrot.slane %v701, %v734
        %v737 = vmul.f32 %v729, %v735
        %v738 = vmul.f32 %v730, %v735
        %v740 = vlaneseq
        %v741 = vshrl.u32 %v740, 7
        %v742 = vsub.s32 0, %v741
        %v743 = vrot.slane %v702, %v742
        %v745 = vadd.f32 %v737, %v743
        %v746 = vadd.f32 %v738, %v743
        %v747 = vpack.c.bf16 %v746, %v745
        %v748 = vld [vmem:[%s599] sm:$0xf]
        %v749 = vld [vmem:[%s599 + $0x4] sm:$0xf]
        %v750 = vld [vmem:[%s599 + $0x8] sm:$0xf]
        %v751 = vld [vmem:[%s599 + $0xc] sm:$0xf]
        %v752 = vld [vmem:[%s602] sm:$0x1]
        %v754 = vlaneseq
        %v755 = vshrl.u32 %v754, 7
        %v756 = vsub.s32 0, %v755
        %v757 = vrot.slane %v752, %v756
        %v763 = vunpack.c.l.b16 %v748
        %v764 = vunpack.c.l.b16 %v749
        %v765 = vunpack.c.l.b16 %v750
        %v766 = vunpack.c.l.b16 %v751
        %v767 = vpack.c.b16 %v764, %v763
        %v768 = vpack.c.b16 %v766, %v765
        %v772 = vsel %vm703, %v747, 0
        %774 = vmatprep.subr.bf16.mxu0 0
        %775 = vmatpush1.bf16.msra.mxu0 %v767
        %776 = vmatprep.subr.bf16.mxu0 0
        %777 = vmatpush1.bf16.msra.mxu0 %v768
        %778 = vmatprep.subr.bf16.mxu0 0
        %779 = vmatpush1.bf16.msra.mxu0 0
        %780 = vmatprep.subr.bf16.mxu0 0
        %781 = vmatpush1.bf16.msra.mxu0 0
        %782 = vmatprep.subr.bf16.mxu0 0
        %783 = vmatpush1.bf16.msra.mxu0 0
        %784 = vmatprep.subr.bf16.mxu0 0
        %785 = vmatpush1.bf16.msra.mxu0 0
        %786 = vmatprep.subr.bf16.mxu0 0
        %787 = vmatpush1.bf16.msra.mxu0 0
        %788 = vmatprep.subr.bf16.mxu0 0
        %789 = vmatpush1.bf16.msra.mxu0 0
        %790 = vmatprep.subr.bf16.mxu0 0
        %791 = vmatpush1.bf16.msra.mxu0 0
        %792 = vmatprep.subr.bf16.mxu0 0
        %793 = vmatpush1.bf16.msra.mxu0 0
        %794 = vmatprep.subr.bf16.mxu0 0
        %795 = vmatpush1.bf16.msra.mxu0 0
        %796 = vmatprep.subr.bf16.mxu0 0
        %797 = vmatpush1.bf16.msra.mxu0 0
        %798 = vmatprep.subr.bf16.mxu0 0
        %799 = vmatpush1.bf16.msra.mxu0 0
        %800 = vmatprep.subr.bf16.mxu0 0
        %801 = vmatpush1.bf16.msra.mxu0 0
        %802 = vmatprep.subr.bf16.mxu0 0
        %803 = vmatpush1.bf16.msra.mxu0 0
        %804 = vmatprep.subr.bf16.mxu0 0
        %805 = vmatpush1.bf16.msra.mxu0 0
        %806 = vmatprep.mubr.bf16.mxu0 0
        %807 = vmatmul.mubr.bf16.gmra.mrb[0].mxu0 %v772
        %v808 = vpop.f32.mrb[0].mxu0
        %v809 = vadd.f32 %v757, %v808
        %v810 = vpop.f32.mrb[0].mxu0
        %v811 = vpop.f32.mrb[0].mxu0
        %v812 = vadd.f32 %v757, %v811
        %v813 = vpop.f32.mrb[0].mxu0
        %814 = vdwg.mxu0
        %816 = vrot.lane.b32.xlu0 %v809, 120
        %v817 = vpop.permute.xlu0 %816
        %819 = vrot.lane.b32.xlu0 %v809, 112
        %v820 = vpop.permute.xlu0 %819
        %822 = vrot.lane.b32.xlu0 %v809, 104
        %v823 = vpop.permute.xlu0 %822
        %v825 = vcombine.low %v809, %v820
        %v826 = vcombine.high %v809, %v820
        %v828 = vunpack.c.l.s4 1983009808
        %v829 = vunpack.c.0.s8 %v828
        %v830 = vlaneseq
        %v831 = vshrl.u32 %v830, 7
        %v832 = vsub.s32 %v829, %v831
        %v833 = vrot.slane %v825, %v832
        %v835 = vunpack.c.l.s4 1983009808
        %v836 = vunpack.c.0.s8 %v835
        %v837 = vlaneseq
        %v838 = vshrl.u32 %v837, 7
        %v839 = vsub.s32 %v836, %v838
        %v840 = vrot.slane %v826, %v839
        %v841 = vcombine.low %v817, %v823
        %v842 = vcombine.high %v817, %v823
        %v844 = vunpack.c.l.s4 1983009808
        %v845 = vunpack.c.0.s8 %v844
        %v846 = vlaneseq
        %v847 = vshrl.u32 %v846, 7
        %v848 = vsub.s32 %v845, %v847
        %v849 = vrot.slane %v841, %v848
        %v851 = vunpack.c.l.s4 1983009808
        %v852 = vunpack.c.0.s8 %v851
        %v853 = vlaneseq
        %v854 = vshrl.u32 %v853, 7
        %v855 = vsub.s32 %v852, %v854
        %v856 = vrot.slane %v842, %v855
        %v857 = vcombine.low %v833, %v849
        %v858 = vcombine.high %v833, %v849
        %v860 = vunpack.c.l.s4 1934713408
        %v861 = vunpack.c.0.s8 %v860
        %v862 = vlaneseq
        %v863 = vshrl.u32 %v862, 7
        %v864 = vsub.s32 %v861, %v863
        %v865 = vrot.slane %v857, %v864
        %v867 = vunpack.c.l.s4 1934713408
        %v868 = vunpack.c.0.s8 %v867
        %v869 = vlaneseq
        %v870 = vshrl.u32 %v869, 7
        %v871 = vsub.s32 %v868, %v870
        %v872 = vrot.slane %v858, %v871
        %v873 = vcombine.low %v840, %v856
        %v874 = vcombine.high %v840, %v856
        %v876 = vunpack.c.l.s4 1934713408
        %v877 = vunpack.c.0.s8 %v876
        %v878 = vlaneseq
        %v879 = vshrl.u32 %v878, 7
        %v880 = vsub.s32 %v877, %v879
        %v881 = vrot.slane %v873, %v880
        %v883 = vunpack.c.l.s4 1934713408
        %v884 = vunpack.c.0.s8 %v883
        %v885 = vlaneseq
        %v886 = vshrl.u32 %v885, 7
        %v887 = vsub.s32 %v884, %v886
        %v888 = vrot.slane %v874, %v887
        %v889 = vcombine.high %v865, 0.0
        %v890 = vcombine.high %v872, 0.0
        %v891 = vcombine.high %v881, 0.0
        %v892 = vcombine.high %v888, 0.0
        %v893 = vcombine.low %v865, %v872
        %v895 = vunpack.c.l.s4 1983009808
        %v896 = vunpack.c.0.s8 %v895
        %v897 = vlaneseq
        %v898 = vshrl.u32 %v897, 7
        %v899 = vsub.s32 %v896, %v898
        %v900 = vrot.slane %v893, %v899
        %v901 = vcombine.low %v889, %v890
        %v903 = vunpack.c.l.s4 1983009808
        %v904 = vunpack.c.0.s8 %v903
        %v905 = vlaneseq
        %v906 = vshrl.u32 %v905, 7
        %v907 = vsub.s32 %v904, %v906
        %v908 = vrot.slane %v901, %v907
        %v909 = vcombine.low %v881, %v888
        %v911 = vunpack.c.l.s4 1983009808
        %v912 = vunpack.c.0.s8 %v911
        %v913 = vlaneseq
        %v914 = vshrl.u32 %v913, 7
        %v915 = vsub.s32 %v912, %v914
        %v916 = vrot.slane %v909, %v915
        %v917 = vcombine.low %v891, %v892
        %v919 = vunpack.c.l.s4 1983009808
        %v920 = vunpack.c.0.s8 %v919
        %v921 = vlaneseq
        %v922 = vshrl.u32 %v921, 7
        %v923 = vsub.s32 %v920, %v922
        %v924 = vrot.slane %v917, %v923
        %v925 = vcombine.low %v900, %v908
        %v926 = vcombine.high %v900, %v908
        %v928 = vunpack.c.l.s4 1934713408
        %v929 = vunpack.c.0.s8 %v928
        %v930 = vlaneseq
        %v931 = vshrl.u32 %v930, 7
        %v932 = vsub.s32 %v929, %v931
        %v933 = vrot.slane %v925, %v932
        %v935 = vunpack.c.l.s4 1934713408
        %v936 = vunpack.c.0.s8 %v935
        %v937 = vlaneseq
        %v938 = vshrl.u32 %v937, 7
        %v939 = vsub.s32 %v936, %v938
        %v940 = vrot.slane %v926, %v939
        %v941 = vcombine.low %v916, %v924
        %v942 = vcombine.high %v916, %v924
        %v944 = vunpack.c.l.s4 1934713408
        %v945 = vunpack.c.0.s8 %v944
        %v946 = vlaneseq
        %v947 = vshrl.u32 %v946, 7
        %v948 = vsub.s32 %v945, %v947
        %v949 = vrot.slane %v941, %v948
        %v951 = vunpack.c.l.s4 1934713408
        %v952 = vunpack.c.0.s8 %v951
        %v953 = vlaneseq
        %v954 = vshrl.u32 %v953, 7
        %v955 = vsub.s32 %v952, %v954
        %v956 = vrot.slane %v942, %v955
        %v957 = vcombine.low %v933, %v949
        %v958 = vcombine.high %v933, %v949
        %v959 = vcombine.low %v940, %v956
        %v960 = vcombine.high %v940, %v956
        %v961 = vpack.c.bf16 %v957, %v957
        %v962 = vpack.c.bf16 %v958, %v958
        %v963 = vpack.c.bf16 %v959, %v959
        %v964 = vpack.c.bf16 %v960, %v960
        %965 = vrot.lane.b32.xlu0 %v809, 96
        %v966 = vpop.permute.xlu0 %965
        %967 = vrot.lane.b32.xlu0 %v817, 96
        %v968 = vpop.permute.xlu0 %967
        %969 = vrot.lane.b32.xlu0 %v820, 96
        %v970 = vpop.permute.xlu0 %969
        %971 = vrot.lane.b32.xlu0 %v823, 96
        %v972 = vpop.permute.xlu0 %971
        %v977 = vcombine.low %v966, %v970
        %v978 = vcombine.high %v966, %v970
        %v980 = vunpack.c.l.s4 1983009808
        %v981 = vunpack.c.0.s8 %v980
        %v982 = vlaneseq
        %v983 = vshrl.u32 %v982, 7
        %v984 = vsub.s32 %v981, %v983
        %v985 = vrot.slane %v977, %v984
        %v987 = vunpack.c.l.s4 1983009808
        %v988 = vunpack.c.0.s8 %v987
        %v989 = vlaneseq
        %v990 = vshrl.u32 %v989, 7
        %v991 = vsub.s32 %v988, %v990
        %v992 = vrot.slane %v978, %v991
        %v993 = vcombine.low %v968, %v972
        %v994 = vcombine.high %v968, %v972
        %v996 = vunpack.c.l.s4 1983009808
        %v997 = vunpack.c.0.s8 %v996
        %v998 = vlaneseq
        %v999 = vshrl.u32 %v998, 7
        %v1000 = vsub.s32 %v997, %v999
        %v1001 = vrot.slane %v993, %v1000
        %v1003 = vunpack.c.l.s4 1983009808
        %v1004 = vunpack.c.0.s8 %v1003
        %v1005 = vlaneseq
        %v1006 = vshrl.u32 %v1005, 7
        %v1007 = vsub.s32 %v1004, %v1006
        %v1008 = vrot.slane %v994, %v1007
        %v1009 = vcombine.low %v985, %v1001
        %v1010 = vcombine.high %v985, %v1001
        %v1012 = vunpack.c.l.s4 1934713408
        %v1013 = vunpack.c.0.s8 %v1012
        %v1014 = vlaneseq
        %v1015 = vshrl.u32 %v1014, 7
        %v1016 = vsub.s32 %v1013, %v1015
        %v1017 = vrot.slane %v1009, %v1016
        %v1019 = vunpack.c.l.s4 1934713408
        %v1020 = vunpack.c.0.s8 %v1019
        %v1021 = vlaneseq
        %v1022 = vshrl.u32 %v1021, 7
        %v1023 = vsub.s32 %v1020, %v1022
        %v1024 = vrot.slane %v1010, %v1023
        %v1025 = vcombine.low %v992, %v1008
        %v1026 = vcombine.high %v992, %v1008
        %v1028 = vunpack.c.l.s4 1934713408
        %v1029 = vunpack.c.0.s8 %v1028
        %v1030 = vlaneseq
        %v1031 = vshrl.u32 %v1030, 7
        %v1032 = vsub.s32 %v1029, %v1031
        %v1033 = vrot.slane %v1025, %v1032
        %v1035 = vunpack.c.l.s4 1934713408
        %v1036 = vunpack.c.0.s8 %v1035
        %v1037 = vlaneseq
        %v1038 = vshrl.u32 %v1037, 7
        %v1039 = vsub.s32 %v1036, %v1038
        %v1040 = vrot.slane %v1026, %v1039
        %v1041 = vcombine.high %v1017, 0.0
        %v1042 = vcombine.high %v1024, 0.0
        %v1043 = vcombine.high %v1033, 0.0
        %v1044 = vcombine.high %v1040, 0.0
        %v1045 = vcombine.low %v1017, %v1024
        %v1047 = vunpack.c.l.s4 1983009808
        %v1048 = vunpack.c.0.s8 %v1047
        %v1049 = vlaneseq
        %v1050 = vshrl.u32 %v1049, 7
        %v1051 = vsub.s32 %v1048, %v1050
        %v1052 = vrot.slane %v1045, %v1051
        %v1053 = vcombine.low %v1041, %v1042
        %v1055 = vunpack.c.l.s4 1983009808
        %v1056 = vunpack.c.0.s8 %v1055
        %v1057 = vlaneseq
        %v1058 = vshrl.u32 %v1057, 7
        %v1059 = vsub.s32 %v1056, %v1058
        %v1060 = vrot.slane %v1053, %v1059
        %v1061 = vcombine.low %v1033, %v1040
        %v1063 = vunpack.c.l.s4 1983009808
        %v1064 = vunpack.c.0.s8 %v1063
        %v1065 = vlaneseq
        %v1066 = vshrl.u32 %v1065, 7
        %v1067 = vsub.s32 %v1064, %v1066
        %v1068 = vrot.slane %v1061, %v1067
        %v1069 = vcombine.low %v1043, %v1044
        %v1071 = vunpack.c.l.s4 1983009808
        %v1072 = vunpack.c.0.s8 %v1071
        %v1073 = vlaneseq
        %v1074 = vshrl.u32 %v1073, 7
        %v1075 = vsub.s32 %v1072, %v1074
        %v1076 = vrot.slane %v1069, %v1075
        %v1077 = vcombine.low %v1052, %v1060
        %v1078 = vcombine.high %v1052, %v1060
        %v1080 = vunpack.c.l.s4 1934713408
        %v1081 = vunpack.c.0.s8 %v1080
        %v1082 = vlaneseq
        %v1083 = vshrl.u32 %v1082, 7
        %v1084 = vsub.s32 %v1081, %v1083
        %v1085 = vrot.slane %v1077, %v1084
        %v1087 = vunpack.c.l.s4 1934713408
        %v1088 = vunpack.c.0.s8 %v1087
        %v1089 = vlaneseq
        %v1090 = vshrl.u32 %v1089, 7
        %v1091 = vsub.s32 %v1088, %v1090
        %v1092 = vrot.slane %v1078, %v1091
        %v1093 = vcombine.low %v1068, %v1076
        %v1094 = vcombine.high %v1068, %v1076
        %v1096 = vunpack.c.l.s4 1934713408
        %v1097 = vunpack.c.0.s8 %v1096
        %v1098 = vlaneseq
        %v1099 = vshrl.u32 %v1098, 7
        %v1100 = vsub.s32 %v1097, %v1099
        %v1101 = vrot.slane %v1093, %v1100
        %v1103 = vunpack.c.l.s4 1934713408
        %v1104 = vunpack.c.0.s8 %v1103
        %v1105 = vlaneseq
        %v1106 = vshrl.u32 %v1105, 7
        %v1107 = vsub.s32 %v1104, %v1106
        %v1108 = vrot.slane %v1094, %v1107
        %v1109 = vcombine.low %v1085, %v1101
        %v1110 = vcombine.high %v1085, %v1101
        %v1111 = vcombine.low %v1092, %v1108
        %v1112 = vcombine.high %v1092, %v1108
        %v1113 = vpack.c.bf16 %v1109, %v1109
        %v1114 = vpack.c.bf16 %v1110, %v1110
        %v1115 = vpack.c.bf16 %v1111, %v1111
        %v1116 = vpack.c.bf16 %v1112, %v1112
        %1117 = vrot.lane.b32.xlu0 %v809, 64
        %v1118 = vpop.permute.xlu0 %1117
        %1119 = vrot.lane.b32.xlu0 %v817, 64
        %v1120 = vpop.permute.xlu0 %1119
        %1121 = vrot.lane.b32.xlu0 %v820, 64
        %v1122 = vpop.permute.xlu0 %1121
        %1123 = vrot.lane.b32.xlu0 %v823, 64
        %v1124 = vpop.permute.xlu0 %1123
        %v1129 = vcombine.low %v1118, %v1122
        %v1130 = vcombine.high %v1118, %v1122
        %v1132 = vunpack.c.l.s4 1983009808
        %v1133 = vunpack.c.0.s8 %v1132
        %v1134 = vlaneseq
        %v1135 = vshrl.u32 %v1134, 7
        %v1136 = vsub.s32 %v1133, %v1135
        %v1137 = vrot.slane %v1129, %v1136
        %v1139 = vunpack.c.l.s4 1983009808
        %v1140 = vunpack.c.0.s8 %v1139
        %v1141 = vlaneseq
        %v1142 = vshrl.u32 %v1141, 7
        %v1143 = vsub.s32 %v1140, %v1142
        %v1144 = vrot.slane %v1130, %v1143
        %v1145 = vcombine.low %v1120, %v1124
        %v1146 = vcombine.high %v1120, %v1124
        %v1148 = vunpack.c.l.s4 1983009808
        %v1149 = vunpack.c.0.s8 %v1148
        %v1150 = vlaneseq
        %v1151 = vshrl.u32 %v1150, 7
        %v1152 = vsub.s32 %v1149, %v1151
        %v1153 = vrot.slane %v1145, %v1152
        %v1155 = vunpack.c.l.s4 1983009808
        %v1156 = vunpack.c.0.s8 %v1155
        %v1157 = vlaneseq
        %v1158 = vshrl.u32 %v1157, 7
        %v1159 = vsub.s32 %v1156, %v1158
        %v1160 = vrot.slane %v1146, %v1159
        %v1161 = vcombine.low %v1137, %v1153
        %v1162 = vcombine.high %v1137, %v1153
        %v1164 = vunpack.c.l.s4 1934713408
        %v1165 = vunpack.c.0.s8 %v1164
        %v1166 = vlaneseq
        %v1167 = vshrl.u32 %v1166, 7
        %v1168 = vsub.s32 %v1165, %v1167
        %v1169 = vrot.slane %v1161, %v1168
        %v1171 = vunpack.c.l.s4 1934713408
        %v1172 = vunpack.c.0.s8 %v1171
        %v1173 = vlaneseq
        %v1174 = vshrl.u32 %v1173, 7
        %v1175 = vsub.s32 %v1172, %v1174
        %v1176 = vrot.slane %v1162, %v1175
        %v1177 = vcombine.low %v1144, %v1160
        %v1178 = vcombine.high %v1144, %v1160
        %v1180 = vunpack.c.l.s4 1934713408
        %v1181 = vunpack.c.0.s8 %v1180
        %v1182 = vlaneseq
        %v1183 = vshrl.u32 %v1182, 7
        %v1184 = vsub.s32 %v1181, %v1183
        %v1185 = vrot.slane %v1177, %v1184
        %v1187 = vunpack.c.l.s4 1934713408
        %v1188 = vunpack.c.0.s8 %v1187
        %v1189 = vlaneseq
        %v1190 = vshrl.u32 %v1189, 7
        %v1191 = vsub.s32 %v1188, %v1190
        %v1192 = vrot.slane %v1178, %v1191
        %v1193 = vcombine.high %v1169, 0.0
        %v1194 = vcombine.high %v1176, 0.0
        %v1195 = vcombine.high %v1185, 0.0
        %v1196 = vcombine.high %v1192, 0.0
        %v1197 = vcombine.low %v1169, %v1176
        %v1199 = vunpack.c.l.s4 1983009808
        %v1200 = vunpack.c.0.s8 %v1199
        %v1201 = vlaneseq
        %v1202 = vshrl.u32 %v1201, 7
        %v1203 = vsub.s32 %v1200, %v1202
        %v1204 = vrot.slane %v1197, %v1203
        %v1205 = vcombine.low %v1193, %v1194
        %v1207 = vunpack.c.l.s4 1983009808
        %v1208 = vunpack.c.0.s8 %v1207
        %v1209 = vlaneseq
        %v1210 = vshrl.u32 %v1209, 7
        %v1211 = vsub.s32 %v1208, %v1210
        %v1212 = vrot.slane %v1205, %v1211
        %v1213 = vcombine.low %v1185, %v1192
        %v1215 = vunpack.c.l.s4 1983009808
        %v1216 = vunpack.c.0.s8 %v1215
        %v1217 = vlaneseq
        %v1218 = vshrl.u32 %v1217, 7
        %v1219 = vsub.s32 %v1216, %v1218
        %v1220 = vrot.slane %v1213, %v1219
        %v1221 = vcombine.low %v1195, %v1196
        %v1223 = vunpack.c.l.s4 1983009808
        %v1224 = vunpack.c.0.s8 %v1223
        %v1225 = vlaneseq
        %v1226 = vshrl.u32 %v1225, 7
        %v1227 = vsub.s32 %v1224, %v1226
        %v1228 = vrot.slane %v1221, %v1227
        %v1229 = vcombine.low %v1204, %v1212
        %v1230 = vcombine.high %v1204, %v1212
        %v1232 = vunpack.c.l.s4 1934713408
        %v1233 = vunpack.c.0.s8 %v1232
        %v1234 = vlaneseq
        %v1235 = vshrl.u32 %v1234, 7
        %v1236 = vsub.s32 %v1233, %v1235
        %v1237 = vrot.slane %v1229, %v1236
        %v1239 = vunpack.c.l.s4 1934713408
        %v1240 = vunpack.c.0.s8 %v1239
        %v1241 = vlaneseq
        %v1242 = vshrl.u32 %v1241, 7
        %v1243 = vsub.s32 %v1240, %v1242
        %v1244 = vrot.slane %v1230, %v1243
        %v1245 = vcombine.low %v1220, %v1228
        %v1246 = vcombine.high %v1220, %v1228
        %v1248 = vunpack.c.l.s4 1934713408
        %v1249 = vunpack.c.0.s8 %v1248
        %v1250 = vlaneseq
        %v1251 = vshrl.u32 %v1250, 7
        %v1252 = vsub.s32 %v1249, %v1251
        %v1253 = vrot.slane %v1245, %v1252
        %v1255 = vunpack.c.l.s4 1934713408
        %v1256 = vunpack.c.0.s8 %v1255
        %v1257 = vlaneseq
        %v1258 = vshrl.u32 %v1257, 7
        %v1259 = vsub.s32 %v1256, %v1258
        %v1260 = vrot.slane %v1246, %v1259
        %v1261 = vcombine.low %v1237, %v1253
        %v1262 = vcombine.high %v1237, %v1253
        %v1263 = vcombine.low %v1244, %v1260
        %v1264 = vcombine.high %v1244, %v1260
        %v1265 = vpack.c.bf16 %v1261, %v1261
        %v1266 = vpack.c.bf16 %v1262, %v1262
        %v1267 = vpack.c.bf16 %v1263, %v1263
        %v1268 = vpack.c.bf16 %v1264, %v1264
        %vm1269 = vcmask 64512
        %v1271 = vsel %vm1269, %v961, 0
        %v1274 = vsel %vm1269, %v1113, 0
        %1276 = vmatprep.subr.bf16.mxu0 0
        %1277 = vmatpush1.bf16.xpose.msra.mxu0 %v1274
        %1278 = vmatprep.subr.bf16.mxu0 0
        %1279 = vmatpush1.bf16.xpose.msra.mxu0 0
        %1280 = vmatprep.subr.bf16.mxu0 0
        %1281 = vmatpush1.bf16.xpose.msra.mxu0 0
        %1282 = vmatprep.subr.bf16.mxu0 0
        %1283 = vmatpush1.bf16.xpose.msra.mxu0 0
        %1284 = vmatprep.subr.bf16.mxu0 0
        %1285 = vmatpush1.bf16.xpose.msra.mxu0 0
        %1286 = vmatprep.subr.bf16.mxu0 0
        %1287 = vmatpush1.bf16.xpose.msra.mxu0 0
        %1288 = vmatprep.subr.bf16.mxu0 0
        %1289 = vmatpush1.bf16.xpose.msra.mxu0 0
        %1290 = vmatprep.subr.bf16.mxu0 0
        %1291 = vmatpush1.bf16.xpose.msra.mxu0 0
        %1292 = vmatprep.subr.bf16.mxu0 0
        %1293 = vmatpush1.bf16.xpose.msra.mxu0 0
        %1294 = vmatprep.subr.bf16.mxu0 0
        %1295 = vmatpush1.bf16.xpose.msra.mxu0 0
        %1296 = vmatprep.subr.bf16.mxu0 0
        %1297 = vmatpush1.bf16.xpose.msra.mxu0 0
        %1298 = vmatprep.subr.bf16.mxu0 0
        %1299 = vmatpush1.bf16.xpose.msra.mxu0 0
        %1300 = vmatprep.subr.bf16.mxu0 0
        %1301 = vmatpush1.bf16.xpose.msra.mxu0 0
        %1302 = vmatprep.subr.bf16.mxu0 0
        %1303 = vmatpush1.bf16.xpose.msra.mxu0 0
        %1304 = vmatprep.subr.bf16.mxu0 0
        %1305 = vmatpush1.bf16.xpose.msra.mxu0 0
        %1306 = vmatprep.subr.bf16.mxu0 0
        %1307 = vmatpush1.bf16.xpose.msra.mxu0 0
        %1308 = vmatprep.mubr.bf16.mxu0 0
        %1309 = vmatmul.mubr.bf16.gmra.mrb[0].mxu0 %v1271
        %v1310 = vpop.f32.mrb[0].mxu0
        %v1311 = vadd.f32 0.0, %v1310
        %v1312 = vpop.f32.mrb[0].mxu0
        %v1313 = vpop.f32.mrb[0].mxu0
        %v1314 = vpop.f32.mrb[0].mxu0
        %1315 = vdwg.mxu0
        %v1317 = vsel %vm1269, %v962, 0
        %v1320 = vsel %vm1269, %v1114, 0
        %1322 = vmatprep.subr.bf16.mxu0 0
        %1323 = vmatpush1.bf16.xpose.msra.mxu0 %v1320
        %1324 = vmatprep.subr.bf16.mxu0 0
        %1325 = vmatpush1.bf16.xpose.msra.mxu0 0
        %1326 = vmatprep.subr.bf16.mxu0 0
        %1327 = vmatpush1.bf16.xpose.msra.mxu0 0
        %1328 = vmatprep.subr.bf16.mxu0 0
        %1329 = vmatpush1.bf16.xpose.msra.mxu0 0
        %1330 = vmatprep.subr.bf16.mxu0 0
        %1331 = vmatpush1.bf16.xpose.msra.mxu0 0
        %1332 = vmatprep.subr.bf16.mxu0 0
        %1333 = vmatpush1.bf16.xpose.msra.mxu0 0
        %1334 = vmatprep.subr.bf16.mxu0 0
        %1335 = vmatpush1.bf16.xpose.msra.mxu0 0
        %1336 = vmatprep.subr.bf16.mxu0 0
        %1337 = vmatpush1.bf16.xpose.msra.mxu0 0
        %1338 = vmatprep.subr.bf16.mxu0 0
        %1339 = vmatpush1.bf16.xpose.msra.mxu0 0
        %1340 = vmatprep.subr.bf16.mxu0 0
        %1341 = vmatpush1.bf16.xpose.msra.mxu0 0
        %1342 = vmatprep.subr.bf16.mxu0 0
        %1343 = vmatpush1.bf16.xpose.msra.mxu0 0
        %1344 = vmatprep.subr.bf16.mxu0 0
        %1345 = vmatpush1.bf16.xpose.msra.mxu0 0
        %1346 = vmatprep.subr.bf16.mxu0 0
        %1347 = vmatpush1.bf16.xpose.msra.mxu0 0
        %1348 = vmatprep.subr.bf16.mxu0 0
        %1349 = vmatpush1.bf16.xpose.msra.mxu0 0
        %1350 = vmatprep.subr.bf16.mxu0 0
        %1351 = vmatpush1.bf16.xpose.msra.mxu0 0
        %1352 = vmatprep.subr.bf16.mxu0 0
        %1353 = vmatpush1.bf16.xpose.msra.mxu0 0
        %1354 = vmatprep.mubr.bf16.mxu0 0
        %1355 = vmatmul.mubr.bf16.gmra.mrb[0].mxu0 %v1317
        %v1356 = vpop.f32.mrb[0].mxu0
        %v1357 = vadd.f32 0.0, %v1356
        %v1358 = vpop.f32.mrb[0].mxu0
        %v1359 = vpop.f32.mrb[0].mxu0
        %v1360 = vpop.f32.mrb[0].mxu0
        %1361 = vdwg.mxu0
        %v1363 = vsel %vm1269, %v963, 0
        %v1366 = vsel %vm1269, %v1115, 0
        %1368 = vmatprep.subr.bf16.mxu0 0
        %1369 = vmatpush1.bf16.xpose.msra.mxu0 %v1366
        %1370 = vmatprep.subr.bf16.mxu0 0
        %1371 = vmatpush1.bf16.xpose.msra.mxu0 0
        %1372 = vmatprep.subr.bf16.mxu0 0
        %1373 = vmatpush1.bf16.xpose.msra.mxu0 0
        %1374 = vmatprep.subr.bf16.mxu0 0
        %1375 = vmatpush1.bf16.xpose.msra.mxu0 0
        %1376 = vmatprep.subr.bf16.mxu0 0
        %1377 = vmatpush1.bf16.xpose.msra.mxu0 0
        %1378 = vmatprep.subr.bf16.mxu0 0
        %1379 = vmatpush1.bf16.xpose.msra.mxu0 0
        %1380 = vmatprep.subr.bf16.mxu0 0
        %1381 = vmatpush1.bf16.xpose.msra.mxu0 0
        %1382 = vmatprep.subr.bf16.mxu0 0
        %1383 = vmatpush1.bf16.xpose.msra.mxu0 0
        %1384 = vmatprep.subr.bf16.mxu0 0
        %1385 = vmatpush1.bf16.xpose.msra.mxu0 0
        %1386 = vmatprep.subr.bf16.mxu0 0
        %1387 = vmatpush1.bf16.xpose.msra.mxu0 0
        %1388 = vmatprep.subr.bf16.mxu0 0
        %1389 = vmatpush1.bf16.xpose.msra.mxu0 0
        %1390 = vmatprep.subr.bf16.mxu0 0
        %1391 = vmatpush1.bf16.xpose.msra.mxu0 0
        %1392 = vmatprep.subr.bf16.mxu0 0
        %1393 = vmatpush1.bf16.xpose.msra.mxu0 0
        %1394 = vmatprep.subr.bf16.mxu0 0
        %1395 = vmatpush1.bf16.xpose.msra.mxu0 0
        %1396 = vmatprep.subr.bf16.mxu0 0
        %1397 = vmatpush1.bf16.xpose.msra.mxu0 0
        %1398 = vmatprep.subr.bf16.mxu0 0
        %1399 = vmatpush1.bf16.xpose.msra.mxu0 0
        %1400 = vmatprep.mubr.bf16.mxu0 0
        %1401 = vmatmul.mubr.bf16.gmra.mrb[0].mxu0 %v1363
        %v1402 = vpop.f32.mrb[0].mxu0
        %v1403 = vadd.f32 0.0, %v1402
        %v1404 = vpop.f32.mrb[0].mxu0
        %v1405 = vpop.f32.mrb[0].mxu0
        %v1406 = vpop.f32.mrb[0].mxu0
        %1407 = vdwg.mxu0
        %v1409 = vsel %vm1269, %v964, 0
        %v1412 = vsel %vm1269, %v1116, 0
        %1414 = vmatprep.subr.bf16.mxu0 0
        %1415 = vmatpush1.bf16.xpose.msra.mxu0 %v1412
        %1416 = vmatprep.subr.bf16.mxu0 0
        %1417 = vmatpush1.bf16.xpose.msra.mxu0 0
        %1418 = vmatprep.subr.bf16.mxu0 0
        %1419 = vmatpush1.bf16.xpose.msra.mxu0 0
        %1420 = vmatprep.subr.bf16.mxu0 0
        %1421 = vmatpush1.bf16.xpose.msra.mxu0 0
        %1422 = vmatprep.subr.bf16.mxu0 0
        %1423 = vmatpush1.bf16.xpose.msra.mxu0 0
        %1424 = vmatprep.subr.bf16.mxu0 0
        %1425 = vmatpush1.bf16.xpose.msra.mxu0 0
        %1426 = vmatprep.subr.bf16.mxu0 0
        %1427 = vmatpush1.bf16.xpose.msra.mxu0 0
        %1428 = vmatprep.subr.bf16.mxu0 0
        %1429 = vmatpush1.bf16.xpose.msra.mxu0 0
        %1430 = vmatprep.subr.bf16.mxu0 0
        %1431 = vmatpush1.bf16.xpose.msra.mxu0 0
        %1432 = vmatprep.subr.bf16.mxu0 0
        %1433 = vmatpush1.bf16.xpose.msra.mxu0 0
        %1434 = vmatprep.subr.bf16.mxu0 0
        %1435 = vmatpush1.bf16.xpose.msra.mxu0 0
        %1436 = vmatprep.subr.bf16.mxu0 0
        %1437 = vmatpush1.bf16.xpose.msra.mxu0 0
        %1438 = vmatprep.subr.bf16.mxu0 0
        %1439 = vmatpush1.bf16.xpose.msra.mxu0 0
        %1440 = vmatprep.subr.bf16.mxu0 0
        %1441 = vmatpush1.bf16.xpose.msra.mxu0 0
        %1442 = vmatprep.subr.bf16.mxu0 0
        %1443 = vmatpush1.bf16.xpose.msra.mxu0 0
        %1444 = vmatprep.subr.bf16.mxu0 0
        %1445 = vmatpush1.bf16.xpose.msra.mxu0 0
        %1446 = vmatprep.mubr.bf16.mxu0 0
        %1447 = vmatmul.mubr.bf16.gmra.mrb[0].mxu0 %v1409
        %v1448 = vpop.f32.mrb[0].mxu0
        %v1449 = vadd.f32 0.0, %v1448
        %v1450 = vpop.f32.mrb[0].mxu0
        %v1451 = vpop.f32.mrb[0].mxu0
        %v1452 = vpop.f32.mrb[0].mxu0
        %1453 = vdwg.mxu0
        %v1454 = vsel %vm1269, %v1311, -inf
        %1455 = vmax.xlane.f32.xlu0 %v1454
        %v1456 = vpop.xlane.xlu0 %1455
        %v1457 = vsel %vm1269, %v1357, -inf
        %1458 = vmax.xlane.f32.xlu0 %v1457
        %v1459 = vpop.xlane.xlu0 %1458
        %v1460 = vsel %vm1269, %v1403, -inf
        %1461 = vmax.xlane.f32.xlu0 %v1460
        %v1462 = vpop.xlane.xlu0 %1461
        %v1463 = vsel %vm1269, %v1449, -inf
        %1464 = vmax.xlane.f32.xlu0 %v1463
        %v1465 = vpop.xlane.xlu0 %1464
        %v1466 = vsub.f32 %v1311, %v1456
        %v1467 = vsub.f32 %v1357, %v1459
        %v1468 = vsub.f32 %v1403, %v1462
        %v1469 = vsub.f32 %v1449, %v1465
        %v1470 = vmul.f32 %v1466, 1.442695
        %v1471 = vpow.pop %v1470
        %v1472 = vmul.f32 %v1467, 1.442695
        %v1473 = vpow.pop %v1472
        %v1474 = vmul.f32 %v1468, 1.442695
        %v1475 = vpow.pop %v1474
        %v1476 = vmul.f32 %v1469, 1.442695
        %v1477 = vpow.pop %v1476
        %v1478 = vsel %vm1269, %v1471, 0.0
        %1479 = vadd.xlane.f32.xlu0 %v1478
        %v1480 = vpop.xlane.xlu0 %1479
        %v1481 = vsel %vm1269, %v1473, 0.0
        %1482 = vadd.xlane.f32.xlu0 %v1481
        %v1483 = vpop.xlane.xlu0 %1482
        %v1484 = vsel %vm1269, %v1475, 0.0
        %1485 = vadd.xlane.f32.xlu0 %v1484
        %v1486 = vpop.xlane.xlu0 %1485
        %v1487 = vsel %vm1269, %v1477, 0.0
        %1488 = vadd.xlane.f32.xlu0 %v1487
        %v1489 = vpop.xlane.xlu0 %1488
        %v1490 = vrcp.pop %v1480
        %v1491 = vrcp.pop %v1483
        %v1492 = vrcp.pop %v1486
        %v1493 = vrcp.pop %v1489
        %v1494 = vmul.f32 %v1471, %v1490
        %v1495 = vmul.f32 %v1473, %v1491
        %v1496 = vmul.f32 %v1475, %v1492
        %v1497 = vmul.f32 %v1477, %v1493
        %v1498 = vpack.c.bf16 %v1494, %v1494
        %v1499 = vpack.c.bf16 %v1495, %v1495
        %v1500 = vpack.c.bf16 %v1496, %v1496
        %v1501 = vpack.c.bf16 %v1497, %v1497
        %v1503 = vsel %vm1269, %v1498, 0
        %vm1505 = vcmask 1043456
        %v1507 = vsel %vm1505, %v1265, 0
        %1509 = vmatprep.subr.bf16.mxu0 0
        %1510 = vmatpush1.bf16.msra.mxu0 %v1507
        %1511 = vmatprep.subr.bf16.mxu0 0
        %1512 = vmatpush1.bf16.msra.mxu0 0
        %1513 = vmatprep.subr.bf16.mxu0 0
        %1514 = vmatpush1.bf16.msra.mxu0 0
        %1515 = vmatprep.subr.bf16.mxu0 0
        %1516 = vmatpush1.bf16.msra.mxu0 0
        %1517 = vmatprep.subr.bf16.mxu0 0
        %1518 = vmatpush1.bf16.msra.mxu0 0
        %1519 = vmatprep.subr.bf16.mxu0 0
        %1520 = vmatpush1.bf16.msra.mxu0 0
        %1521 = vmatprep.subr.bf16.mxu0 0
        %1522 = vmatpush1.bf16.msra.mxu0 0
        %1523 = vmatprep.subr.bf16.mxu0 0
        %1524 = vmatpush1.bf16.msra.mxu0 0
        %1525 = vmatprep.subr.bf16.mxu0 0
        %1526 = vmatpush1.bf16.msra.mxu0 0
        %1527 = vmatprep.subr.bf16.mxu0 0
        %1528 = vmatpush1.bf16.msra.mxu0 0
        %1529 = vmatprep.subr.bf16.mxu0 0
        %1530 = vmatpush1.bf16.msra.mxu0 0
        %1531 = vmatprep.subr.bf16.mxu0 0
        %1532 = vmatpush1.bf16.msra.mxu0 0
        %1533 = vmatprep.subr.bf16.mxu0 0
        %1534 = vmatpush1.bf16.msra.mxu0 0
        %1535 = vmatprep.subr.bf16.mxu0 0
        %1536 = vmatpush1.bf16.msra.mxu0 0
        %1537 = vmatprep.subr.bf16.mxu0 0
        %1538 = vmatpush1.bf16.msra.mxu0 0
        %1539 = vmatprep.subr.bf16.mxu0 0
        %1540 = vmatpush1.bf16.msra.mxu0 0
        %1541 = vmatprep.mubr.bf16.mxu0 0
        %1542 = vmatmul.mubr.bf16.gmra.mrb[0].mxu0 %v1503
        %v1543 = vpop.f32.mrb[0].mxu0
        %v1544 = vadd.f32 0.0, %v1543
        %v1545 = vpop.f32.mrb[0].mxu0
        %v1546 = vpop.f32.mrb[0].mxu0
        %v1547 = vpop.f32.mrb[0].mxu0
        %1548 = vdwg.mxu0
        %v1550 = vsel %vm1269, %v1499, 0
        %v1553 = vsel %vm1505, %v1266, 0
        %1555 = vmatprep.subr.bf16.mxu0 0
        %1556 = vmatpush1.bf16.msra.mxu0 %v1553
        %1557 = vmatprep.subr.bf16.mxu0 0
        %1558 = vmatpush1.bf16.msra.mxu0 0
        %1559 = vmatprep.subr.bf16.mxu0 0
        %1560 = vmatpush1.bf16.msra.mxu0 0
        %1561 = vmatprep.subr.bf16.mxu0 0
        %1562 = vmatpush1.bf16.msra.mxu0 0
        %1563 = vmatprep.subr.bf16.mxu0 0
        %1564 = vmatpush1.bf16.msra.mxu0 0
        %1565 = vmatprep.subr.bf16.mxu0 0
        %1566 = vmatpush1.bf16.msra.mxu0 0
        %1567 = vmatprep.subr.bf16.mxu0 0
        %1568 = vmatpush1.bf16.msra.mxu0 0
        %1569 = vmatprep.subr.bf16.mxu0 0
        %1570 = vmatpush1.bf16.msra.mxu0 0
        %1571 = vmatprep.subr.bf16.mxu0 0
        %1572 = vmatpush1.bf16.msra.mxu0 0
        %1573 = vmatprep.subr.bf16.mxu0 0
        %1574 = vmatpush1.bf16.msra.mxu0 0
        %1575 = vmatprep.subr.bf16.mxu0 0
        %1576 = vmatpush1.bf16.msra.mxu0 0
        %1577 = vmatprep.subr.bf16.mxu0 0
        %1578 = vmatpush1.bf16.msra.mxu0 0
        %1579 = vmatprep.subr.bf16.mxu0 0
        %1580 = vmatpush1.bf16.msra.mxu0 0
        %1581 = vmatprep.subr.bf16.mxu0 0
        %1582 = vmatpush1.bf16.msra.mxu0 0
        %1583 = vmatprep.subr.bf16.mxu0 0
        %1584 = vmatpush1.bf16.msra.mxu0 0
        %1585 = vmatprep.subr.bf16.mxu0 0
        %1586 = vmatpush1.bf16.msra.mxu0 0
        %1587 = vmatprep.mubr.bf16.mxu0 0
        %1588 = vmatmul.mubr.bf16.gmra.mrb[0].mxu0 %v1550
        %v1589 = vpop.f32.mrb[0].mxu0
        %v1590 = vadd.f32 0.0, %v1589
        %v1591 = vpop.f32.mrb[0].mxu0
        %v1592 = vpop.f32.mrb[0].mxu0
        %v1593 = vpop.f32.mrb[0].mxu0
        %1594 = vdwg.mxu0
        %v1596 = vsel %vm1269, %v1500, 0
        %v1599 = vsel %vm1505, %v1267, 0
        %1601 = vmatprep.subr.bf16.mxu0 0
        %1602 = vmatpush1.bf16.msra.mxu0 %v1599
        %1603 = vmatprep.subr.bf16.mxu0 0
        %1604 = vmatpush1.bf16.msra.mxu0 0
        %1605 = vmatprep.subr.bf16.mxu0 0
        %1606 = vmatpush1.bf16.msra.mxu0 0
        %1607 = vmatprep.subr.bf16.mxu0 0
        %1608 = vmatpush1.bf16.msra.mxu0 0
        %1609 = vmatprep.subr.bf16.mxu0 0
        %1610 = vmatpush1.bf16.msra.mxu0 0
        %1611 = vmatprep.subr.bf16.mxu0 0
        %1612 = vmatpush1.bf16.msra.mxu0 0
        %1613 = vmatprep.subr.bf16.mxu0 0
        %1614 = vmatpush1.bf16.msra.mxu0 0
        %1615 = vmatprep.subr.bf16.mxu0 0
        %1616 = vmatpush1.bf16.msra.mxu0 0
        %1617 = vmatprep.subr.bf16.mxu0 0
        %1618 = vmatpush1.bf16.msra.mxu0 0
        %1619 = vmatprep.subr.bf16.mxu0 0
        %1620 = vmatpush1.bf16.msra.mxu0 0
        %1621 = vmatprep.subr.bf16.mxu0 0
        %1622 = vmatpush1.bf16.msra.mxu0 0
        %1623 = vmatprep.subr.bf16.mxu0 0
        %1624 = vmatpush1.bf16.msra.mxu0 0
        %1625 = vmatprep.subr.bf16.mxu0 0
        %1626 = vmatpush1.bf16.msra.mxu0 0
        %1627 = vmatprep.subr.bf16.mxu0 0
        %1628 = vmatpush1.bf16.msra.mxu0 0
        %1629 = vmatprep.subr.bf16.mxu0 0
        %1630 = vmatpush1.bf16.msra.mxu0 0
        %1631 = vmatprep.subr.bf16.mxu0 0
        %1632 = vmatpush1.bf16.msra.mxu0 0
        %1633 = vmatprep.mubr.bf16.mxu0 0
        %1634 = vmatmul.mubr.bf16.gmra.mrb[0].mxu0 %v1596
        %v1635 = vpop.f32.mrb[0].mxu0
        %v1636 = vadd.f32 0.0, %v1635
        %v1637 = vpop.f32.mrb[0].mxu0
        %v1638 = vpop.f32.mrb[0].mxu0
        %v1639 = vpop.f32.mrb[0].mxu0
        %1640 = vdwg.mxu0
        %v1642 = vsel %vm1269, %v1501, 0
        %v1645 = vsel %vm1505, %v1268, 0
        %1647 = vmatprep.subr.bf16.mxu0 0
        %1648 = vmatpush1.bf16.msra.mxu0 %v1645
        %1649 = vmatprep.subr.bf16.mxu0 0
        %1650 = vmatpush1.bf16.msra.mxu0 0
        %1651 = vmatprep.subr.bf16.mxu0 0
        %1652 = vmatpush1.bf16.msra.mxu0 0
        %1653 = vmatprep.subr.bf16.mxu0 0
        %1654 = vmatpush1.bf16.msra.mxu0 0
        %1655 = vmatprep.subr.bf16.mxu0 0
        %1656 = vmatpush1.bf16.msra.mxu0 0
        %1657 = vmatprep.subr.bf16.mxu0 0
        %1658 = vmatpush1.bf16.msra.mxu0 0
        %1659 = vmatprep.subr.bf16.mxu0 0
        %1660 = vmatpush1.bf16.msra.mxu0 0
        %1661 = vmatprep.subr.bf16.mxu0 0
        %1662 = vmatpush1.bf16.msra.mxu0 0
        %1663 = vmatprep.subr.bf16.mxu0 0
        %1664 = vmatpush1.bf16.msra.mxu0 0
        %1665 = vmatprep.subr.bf16.mxu0 0
        %1666 = vmatpush1.bf16.msra.mxu0 0
        %1667 = vmatprep.subr.bf16.mxu0 0
        %1668 = vmatpush1.bf16.msra.mxu0 0
        %1669 = vmatprep.subr.bf16.mxu0 0
        %1670 = vmatpush1.bf16.msra.mxu0 0
        %1671 = vmatprep.subr.bf16.mxu0 0
        %1672 = vmatpush1.bf16.msra.mxu0 0
        %1673 = vmatprep.subr.bf16.mxu0 0
        %1674 = vmatpush1.bf16.msra.mxu0 0
        %1675 = vmatprep.subr.bf16.mxu0 0
        %1676 = vmatpush1.bf16.msra.mxu0 0
        %1677 = vmatprep.subr.bf16.mxu0 0
        %1678 = vmatpush1.bf16.msra.mxu0 0
        %1679 = vmatprep.mubr.bf16.mxu0 0
        %1680 = vmatmul.mubr.bf16.gmra.mrb[0].mxu0 %v1642
        %v1681 = vpop.f32.mrb[0].mxu0
        %v1682 = vadd.f32 0.0, %v1681
        %v1683 = vpop.f32.mrb[0].mxu0
        %v1684 = vpop.f32.mrb[0].mxu0
        %v1685 = vpop.f32.mrb[0].mxu0
        %1686 = vdwg.mxu0
        %v1687 = vcombine.low %v1544, %v1636
        %v1688 = vcombine.high %v1544, %v1636
        %v1690 = vunpack.c.l.s4 1983009808
        %v1691 = vunpack.c.0.s8 %v1690
        %v1692 = vlaneseq
        %v1693 = vshrl.u32 %v1692, 7
        %v1694 = vsub.s32 %v1691, %v1693
        %v1695 = vrot.slane %v1687, %v1694
        %v1697 = vunpack.c.l.s4 1983009808
        %v1698 = vunpack.c.0.s8 %v1697
        %v1699 = vlaneseq
        %v1700 = vshrl.u32 %v1699, 7
        %v1701 = vsub.s32 %v1698, %v1700
        %v1702 = vrot.slane %v1688, %v1701
        %v1703 = vcombine.low %v1590, %v1682
        %v1704 = vcombine.high %v1590, %v1682
        %v1706 = vunpack.c.l.s4 1983009808
        %v1707 = vunpack.c.0.s8 %v1706
        %v1708 = vlaneseq
        %v1709 = vshrl.u32 %v1708, 7
        %v1710 = vsub.s32 %v1707, %v1709
        %v1711 = vrot.slane %v1703, %v1710
        %v1713 = vunpack.c.l.s4 1983009808
        %v1714 = vunpack.c.0.s8 %v1713
        %v1715 = vlaneseq
        %v1716 = vshrl.u32 %v1715, 7
        %v1717 = vsub.s32 %v1714, %v1716
        %v1718 = vrot.slane %v1704, %v1717
        %v1719 = vcombine.low %v1695, %v1711
        %v1720 = vcombine.high %v1695, %v1711
        %v1722 = vunpack.c.l.s4 1934713408
        %v1723 = vunpack.c.0.s8 %v1722
        %v1724 = vlaneseq
        %v1725 = vshrl.u32 %v1724, 7
        %v1726 = vsub.s32 %v1723, %v1725
        %v1727 = vrot.slane %v1719, %v1726
        %v1729 = vunpack.c.l.s4 1934713408
        %v1730 = vunpack.c.0.s8 %v1729
        %v1731 = vlaneseq
        %v1732 = vshrl.u32 %v1731, 7
        %v1733 = vsub.s32 %v1730, %v1732
        %v1734 = vrot.slane %v1720, %v1733
        %v1735 = vcombine.low %v1702, %v1718
        %v1736 = vcombine.high %v1702, %v1718
        %v1738 = vunpack.c.l.s4 1934713408
        %v1739 = vunpack.c.0.s8 %v1738
        %v1740 = vlaneseq
        %v1741 = vshrl.u32 %v1740, 7
        %v1742 = vsub.s32 %v1739, %v1741
        %v1743 = vrot.slane %v1735, %v1742
        %v1745 = vunpack.c.l.s4 1934713408
        %v1746 = vunpack.c.0.s8 %v1745
        %v1747 = vlaneseq
        %v1748 = vshrl.u32 %v1747, 7
        %v1749 = vsub.s32 %v1746, %v1748
        %v1750 = vrot.slane %v1736, %v1749
        %v1751 = vcombine.high %v1727, 0.0
        %v1752 = vcombine.high %v1734, 0.0
        %v1753 = vcombine.high %v1743, 0.0
        %v1754 = vcombine.high %v1750, 0.0
        %v1755 = vcombine.low %v1727, %v1734
        %v1757 = vunpack.c.l.s4 1983009808
        %v1758 = vunpack.c.0.s8 %v1757
        %v1759 = vlaneseq
        %v1760 = vshrl.u32 %v1759, 7
        %v1761 = vsub.s32 %v1758, %v1760
        %v1762 = vrot.slane %v1755, %v1761
        %v1763 = vcombine.low %v1751, %v1752
        %v1765 = vunpack.c.l.s4 1983009808
        %v1766 = vunpack.c.0.s8 %v1765
        %v1767 = vlaneseq
        %v1768 = vshrl.u32 %v1767, 7
        %v1769 = vsub.s32 %v1766, %v1768
        %v1770 = vrot.slane %v1763, %v1769
        %v1771 = vcombine.low %v1743, %v1750
        %v1773 = vunpack.c.l.s4 1983009808
        %v1774 = vunpack.c.0.s8 %v1773
        %v1775 = vlaneseq
        %v1776 = vshrl.u32 %v1775, 7
        %v1777 = vsub.s32 %v1774, %v1776
        %v1778 = vrot.slane %v1771, %v1777
        %v1779 = vcombine.low %v1753, %v1754
        %v1781 = vunpack.c.l.s4 1983009808
        %v1782 = vunpack.c.0.s8 %v1781
        %v1783 = vlaneseq
        %v1784 = vshrl.u32 %v1783, 7
        %v1785 = vsub.s32 %v1782, %v1784
        %v1786 = vrot.slane %v1779, %v1785
        %v1787 = vcombine.low %v1762, %v1770
        %v1788 = vcombine.high %v1762, %v1770
        %v1790 = vunpack.c.l.s4 1934713408
        %v1791 = vunpack.c.0.s8 %v1790
        %v1792 = vlaneseq
        %v1793 = vshrl.u32 %v1792, 7
        %v1794 = vsub.s32 %v1791, %v1793
        %v1795 = vrot.slane %v1787, %v1794
        %v1797 = vunpack.c.l.s4 1934713408
        %v1798 = vunpack.c.0.s8 %v1797
        %v1799 = vlaneseq
        %v1800 = vshrl.u32 %v1799, 7
        %v1801 = vsub.s32 %v1798, %v1800
        %v1802 = vrot.slane %v1788, %v1801
        %v1803 = vcombine.low %v1778, %v1786
        %v1804 = vcombine.high %v1778, %v1786
        %v1806 = vunpack.c.l.s4 1934713408
        %v1807 = vunpack.c.0.s8 %v1806
        %v1808 = vlaneseq
        %v1809 = vshrl.u32 %v1808, 7
        %v1810 = vsub.s32 %v1807, %v1809
        %v1811 = vrot.slane %v1803, %v1810
        %v1813 = vunpack.c.l.s4 1934713408
        %v1814 = vunpack.c.0.s8 %v1813
        %v1815 = vlaneseq
        %v1816 = vshrl.u32 %v1815, 7
        %v1817 = vsub.s32 %v1814, %v1816
        %v1818 = vrot.slane %v1804, %v1817
        %v1819 = vcombine.low %v1795, %v1811
        %v1820 = vcombine.high %v1795, %v1811
        %v1821 = vcombine.low %v1802, %v1818
        %v1822 = vcombine.high %v1802, %v1818
        %1824 = vrot.lane.b32.xlu0 %v1820, 8
        %v1825 = vpop.permute.xlu0 %1824
        %1828 = vrot.lane.b32.xlu0 %v1821, 16
        %v1829 = vpop.permute.xlu0 %1828
        %1832 = vrot.lane.b32.xlu0 %v1822, 24
        %v1833 = vpop.permute.xlu0 %1832
        %v1835 = vsel %vm1269, %v1819, %v1825
        %vm1836 = vcmask 130048
        %v1837 = vsel %vm1836, %v1835, %v1829
        %vm1838 = vcmask 195584
        %v1839 = vsel %vm1838, %v1837, %v1833
        %1841 = vrot.lane.b32.xlu0 %v812, 120
        %v1842 = vpop.permute.xlu0 %1841
        %1844 = vrot.lane.b32.xlu0 %v812, 112
        %v1845 = vpop.permute.xlu0 %1844
        %1847 = vrot.lane.b32.xlu0 %v812, 104
        %v1848 = vpop.permute.xlu0 %1847
        %v1850 = vcombine.low %v812, %v1845
        %v1851 = vcombine.high %v812, %v1845
        %v1853 = vunpack.c.l.s4 1983009808
        %v1854 = vunpack.c.0.s8 %v1853
        %v1855 = vlaneseq
        %v1856 = vshrl.u32 %v1855, 7
        %v1857 = vsub.s32 %v1854, %v1856
        %v1858 = vrot.slane %v1850, %v1857
        %v1860 = vunpack.c.l.s4 1983009808
        %v1861 = vunpack.c.0.s8 %v1860
        %v1862 = vlaneseq
        %v1863 = vshrl.u32 %v1862, 7
        %v1864 = vsub.s32 %v1861, %v1863
        %v1865 = vrot.slane %v1851, %v1864
        %v1866 = vcombine.low %v1842, %v1848
        %v1867 = vcombine.high %v1842, %v1848
        %v1869 = vunpack.c.l.s4 1983009808
        %v1870 = vunpack.c.0.s8 %v1869
        %v1871 = vlaneseq
        %v1872 = vshrl.u32 %v1871, 7
        %v1873 = vsub.s32 %v1870, %v1872
        %v1874 = vrot.slane %v1866, %v1873
        %v1876 = vunpack.c.l.s4 1983009808
        %v1877 = vunpack.c.0.s8 %v1876
        %v1878 = vlaneseq
        %v1879 = vshrl.u32 %v1878, 7
        %v1880 = vsub.s32 %v1877, %v1879
        %v1881 = vrot.slane %v1867, %v1880
        %v1882 = vcombine.low %v1858, %v1874
        %v1883 = vcombine.high %v1858, %v1874
        %v1885 = vunpack.c.l.s4 1934713408
        %v1886 = vunpack.c.0.s8 %v1885
        %v1887 = vlaneseq
        %v1888 = vshrl.u32 %v1887, 7
        %v1889 = vsub.s32 %v1886, %v1888
        %v1890 = vrot.slane %v1882, %v1889
        %v1892 = vunpack.c.l.s4 1934713408
        %v1893 = vunpack.c.0.s8 %v1892
        %v1894 = vlaneseq
        %v1895 = vshrl.u32 %v1894, 7
        %v1896 = vsub.s32 %v1893, %v1895
        %v1897 = vrot.slane %v1883, %v1896
        %v1898 = vcombine.low %v1865, %v1881
        %v1899 = vcombine.high %v1865, %v1881
        %v1901 = vunpack.c.l.s4 1934713408
        %v1902 = vunpack.c.0.s8 %v1901
        %v1903 = vlaneseq
        %v1904 = vshrl.u32 %v1903, 7
        %v1905 = vsub.s32 %v1902, %v1904
        %v1906 = vrot.slane %v1898, %v1905
        %v1908 = vunpack.c.l.s4 1934713408
        %v1909 = vunpack.c.0.s8 %v1908
        %v1910 = vlaneseq
        %v1911 = vshrl.u32 %v1910, 7
        %v1912 = vsub.s32 %v1909, %v1911
        %v1913 = vrot.slane %v1899, %v1912
        %v1914 = vcombine.high %v1890, 0.0
        %v1915 = vcombine.high %v1897, 0.0
        %v1916 = vcombine.high %v1906, 0.0
        %v1917 = vcombine.high %v1913, 0.0
        %v1918 = vcombine.low %v1890, %v1897
        %v1920 = vunpack.c.l.s4 1983009808
        %v1921 = vunpack.c.0.s8 %v1920
        %v1922 = vlaneseq
        %v1923 = vshrl.u32 %v1922, 7
        %v1924 = vsub.s32 %v1921, %v1923
        %v1925 = vrot.slane %v1918, %v1924
        %v1926 = vcombine.low %v1914, %v1915
        %v1928 = vunpack.c.l.s4 1983009808
        %v1929 = vunpack.c.0.s8 %v1928
        %v1930 = vlaneseq
        %v1931 = vshrl.u32 %v1930, 7
        %v1932 = vsub.s32 %v1929, %v1931
        %v1933 = vrot.slane %v1926, %v1932
        %v1934 = vcombine.low %v1906, %v1913
        %v1936 = vunpack.c.l.s4 1983009808
        %v1937 = vunpack.c.0.s8 %v1936
        %v1938 = vlaneseq
        %v1939 = vshrl.u32 %v1938, 7
        %v1940 = vsub.s32 %v1937, %v1939
        %v1941 = vrot.slane %v1934, %v1940
        %v1942 = vcombine.low %v1916, %v1917
        %v1944 = vunpack.c.l.s4 1983009808
        %v1945 = vunpack.c.0.s8 %v1944
        %v1946 = vlaneseq
        %v1947 = vshrl.u32 %v1946, 7
        %v1948 = vsub.s32 %v1945, %v1947
        %v1949 = vrot.slane %v1942, %v1948
        %v1950 = vcombine.low %v1925, %v1933
        %v1951 = vcombine.high %v1925, %v1933
        %v1953 = vunpack.c.l.s4 1934713408
        %v1954 = vunpack.c.0.s8 %v1953
        %v1955 = vlaneseq
        %v1956 = vshrl.u32 %v1955, 7
        %v1957 = vsub.s32 %v1954, %v1956
        %v1958 = vrot.slane %v1950, %v1957
        %v1960 = vunpack.c.l.s4 1934713408
        %v1961 = vunpack.c.0.s8 %v1960
        %v1962 = vlaneseq
        %v1963 = vshrl.u32 %v1962, 7
        %v1964 = vsub.s32 %v1961, %v1963
        %v1965 = vrot.slane %v1951, %v1964
        %v1966 = vcombine.low %v1941, %v1949
        %v1967 = vcombine.high %v1941, %v1949
        %v1969 = vunpack.c.l.s4 1934713408
        %v1970 = vunpack.c.0.s8 %v1969
        %v1971 = vlaneseq
        %v1972 = vshrl.u32 %v1971, 7
        %v1973 = vsub.s32 %v1970, %v1972
        %v1974 = vrot.slane %v1966, %v1973
        %v1976 = vunpack.c.l.s4 1934713408
        %v1977 = vunpack.c.0.s8 %v1976
        %v1978 = vlaneseq
        %v1979 = vshrl.u32 %v1978, 7
        %v1980 = vsub.s32 %v1977, %v1979
        %v1981 = vrot.slane %v1967, %v1980
        %v1982 = vcombine.low %v1958, %v1974
        %v1983 = vcombine.high %v1958, %v1974
        %v1984 = vcombine.low %v1965, %v1981
        %v1985 = vcombine.high %v1965, %v1981
        %v1986 = vpack.c.bf16 %v1982, %v1982
        %v1987 = vpack.c.bf16 %v1983, %v1983
        %v1988 = vpack.c.bf16 %v1984, %v1984
        %v1989 = vpack.c.bf16 %v1985, %v1985
        %1990 = vrot.lane.b32.xlu0 %v812, 96
        %v1991 = vpop.permute.xlu0 %1990
        %1992 = vrot.lane.b32.xlu0 %v1842, 96
        %v1993 = vpop.permute.xlu0 %1992
        %1994 = vrot.lane.b32.xlu0 %v1845, 96
        %v1995 = vpop.permute.xlu0 %1994
        %1996 = vrot.lane.b32.xlu0 %v1848, 96
        %v1997 = vpop.permute.xlu0 %1996
        %v2002 = vcombine.low %v1991, %v1995
        %v2003 = vcombine.high %v1991, %v1995
        %v2005 = vunpack.c.l.s4 1983009808
        %v2006 = vunpack.c.0.s8 %v2005
        %v2007 = vlaneseq
        %v2008 = vshrl.u32 %v2007, 7
        %v2009 = vsub.s32 %v2006, %v2008
        %v2010 = vrot.slane %v2002, %v2009
        %v2012 = vunpack.c.l.s4 1983009808
        %v2013 = vunpack.c.0.s8 %v2012
        %v2014 = vlaneseq
        %v2015 = vshrl.u32 %v2014, 7
        %v2016 = vsub.s32 %v2013, %v2015
        %v2017 = vrot.slane %v2003, %v2016
        %v2018 = vcombine.low %v1993, %v1997
        %v2019 = vcombine.high %v1993, %v1997
        %v2021 = vunpack.c.l.s4 1983009808
        %v2022 = vunpack.c.0.s8 %v2021
        %v2023 = vlaneseq
        %v2024 = vshrl.u32 %v2023, 7
        %v2025 = vsub.s32 %v2022, %v2024
        %v2026 = vrot.slane %v2018, %v2025
        %v2028 = vunpack.c.l.s4 1983009808
        %v2029 = vunpack.c.0.s8 %v2028
        %v2030 = vlaneseq
        %v2031 = vshrl.u32 %v2030, 7
        %v2032 = vsub.s32 %v2029, %v2031
        %v2033 = vrot.slane %v2019, %v2032
        %v2034 = vcombine.low %v2010, %v2026
        %v2035 = vcombine.high %v2010, %v2026
        %v2037 = vunpack.c.l.s4 1934713408
        %v2038 = vunpack.c.0.s8 %v2037
        %v2039 = vlaneseq
        %v2040 = vshrl.u32 %v2039, 7
        %v2041 = vsub.s32 %v2038, %v2040
        %v2042 = vrot.slane %v2034, %v2041
        %v2044 = vunpack.c.l.s4 1934713408
        %v2045 = vunpack.c.0.s8 %v2044
        %v2046 = vlaneseq
        %v2047 = vshrl.u32 %v2046, 7
        %v2048 = vsub.s32 %v2045, %v2047
        %v2049 = vrot.slane %v2035, %v2048
        %v2050 = vcombine.low %v2017, %v2033
        %v2051 = vcombine.high %v2017, %v2033
        %v2053 = vunpack.c.l.s4 1934713408
        %v2054 = vunpack.c.0.s8 %v2053
        %v2055 = vlaneseq
        %v2056 = vshrl.u32 %v2055, 7
        %v2057 = vsub.s32 %v2054, %v2056
        %v2058 = vrot.slane %v2050, %v2057
        %v2060 = vunpack.c.l.s4 1934713408
        %v2061 = vunpack.c.0.s8 %v2060
        %v2062 = vlaneseq
        %v2063 = vshrl.u32 %v2062, 7
        %v2064 = vsub.s32 %v2061, %v2063
        %v2065 = vrot.slane %v2051, %v2064
        %v2066 = vcombine.high %v2042, 0.0
        %v2067 = vcombine.high %v2049, 0.0
        %v2068 = vcombine.high %v2058, 0.0
        %v2069 = vcombine.high %v2065, 0.0
        %v2070 = vcombine.low %v2042, %v2049
        %v2072 = vunpack.c.l.s4 1983009808
        %v2073 = vunpack.c.0.s8 %v2072
        %v2074 = vlaneseq
        %v2075 = vshrl.u32 %v2074, 7
        %v2076 = vsub.s32 %v2073, %v2075
        %v2077 = vrot.slane %v2070, %v2076
        %v2078 = vcombine.low %v2066, %v2067
        %v2080 = vunpack.c.l.s4 1983009808
        %v2081 = vunpack.c.0.s8 %v2080
        %v2082 = vlaneseq
        %v2083 = vshrl.u32 %v2082, 7
        %v2084 = vsub.s32 %v2081, %v2083
        %v2085 = vrot.slane %v2078, %v2084
        %v2086 = vcombine.low %v2058, %v2065
        %v2088 = vunpack.c.l.s4 1983009808
        %v2089 = vunpack.c.0.s8 %v2088
        %v2090 = vlaneseq
        %v2091 = vshrl.u32 %v2090, 7
        %v2092 = vsub.s32 %v2089, %v2091
        %v2093 = vrot.slane %v2086, %v2092
        %v2094 = vcombine.low %v2068, %v2069
        %v2096 = vunpack.c.l.s4 1983009808
        %v2097 = vunpack.c.0.s8 %v2096
        %v2098 = vlaneseq
        %v2099 = vshrl.u32 %v2098, 7
        %v2100 = vsub.s32 %v2097, %v2099
        %v2101 = vrot.slane %v2094, %v2100
        %v2102 = vcombine.low %v2077, %v2085
        %v2103 = vcombine.high %v2077, %v2085
        %v2105 = vunpack.c.l.s4 1934713408
        %v2106 = vunpack.c.0.s8 %v2105
        %v2107 = vlaneseq
        %v2108 = vshrl.u32 %v2107, 7
        %v2109 = vsub.s32 %v2106, %v2108
        %v2110 = vrot.slane %v2102, %v2109
        %v2112 = vunpack.c.l.s4 1934713408
        %v2113 = vunpack.c.0.s8 %v2112
        %v2114 = vlaneseq
        %v2115 = vshrl.u32 %v2114, 7
        %v2116 = vsub.s32 %v2113, %v2115
        %v2117 = vrot.slane %v2103, %v2116
        %v2118 = vcombine.low %v2093, %v2101
        %v2119 = vcombine.high %v2093, %v2101
        %v2121 = vunpack.c.l.s4 1934713408
        %v2122 = vunpack.c.0.s8 %v2121
        %v2123 = vlaneseq
        %v2124 = vshrl.u32 %v2123, 7
        %v2125 = vsub.s32 %v2122, %v2124
        %v2126 = vrot.slane %v2118, %v2125
        %v2128 = vunpack.c.l.s4 1934713408
        %v2129 = vunpack.c.0.s8 %v2128
        %v2130 = vlaneseq
        %v2131 = vshrl.u32 %v2130, 7
        %v2132 = vsub.s32 %v2129, %v2131
        %v2133 = vrot.slane %v2119, %v2132
        %v2134 = vcombine.low %v2110, %v2126
        %v2135 = vcombine.high %v2110, %v2126
        %v2136 = vcombine.low %v2117, %v2133
        %v2137 = vcombine.high %v2117, %v2133
        %v2138 = vpack.c.bf16 %v2134, %v2134
        %v2139 = vpack.c.bf16 %v2135, %v2135
        %v2140 = vpack.c.bf16 %v2136, %v2136
        %v2141 = vpack.c.bf16 %v2137, %v2137
        %2142 = vrot.lane.b32.xlu0 %v812, 64
        %v2143 = vpop.permute.xlu0 %2142
        %2144 = vrot.lane.b32.xlu0 %v1842, 64
        %v2145 = vpop.permute.xlu0 %2144
        %2146 = vrot.lane.b32.xlu0 %v1845, 64
        %v2147 = vpop.permute.xlu0 %2146
        %2148 = vrot.lane.b32.xlu0 %v1848, 64
        %v2149 = vpop.permute.xlu0 %2148
        %v2154 = vcombine.low %v2143, %v2147
        %v2155 = vcombine.high %v2143, %v2147
        %v2157 = vunpack.c.l.s4 1983009808
        %v2158 = vunpack.c.0.s8 %v2157
        %v2159 = vlaneseq
        %v2160 = vshrl.u32 %v2159, 7
        %v2161 = vsub.s32 %v2158, %v2160
        %v2162 = vrot.slane %v2154, %v2161
        %v2164 = vunpack.c.l.s4 1983009808
        %v2165 = vunpack.c.0.s8 %v2164
        %v2166 = vlaneseq
        %v2167 = vshrl.u32 %v2166, 7
        %v2168 = vsub.s32 %v2165, %v2167
        %v2169 = vrot.slane %v2155, %v2168
        %v2170 = vcombine.low %v2145, %v2149
        %v2171 = vcombine.high %v2145, %v2149
        %v2173 = vunpack.c.l.s4 1983009808
        %v2174 = vunpack.c.0.s8 %v2173
        %v2175 = vlaneseq
        %v2176 = vshrl.u32 %v2175, 7
        %v2177 = vsub.s32 %v2174, %v2176
        %v2178 = vrot.slane %v2170, %v2177
        %v2180 = vunpack.c.l.s4 1983009808
        %v2181 = vunpack.c.0.s8 %v2180
        %v2182 = vlaneseq
        %v2183 = vshrl.u32 %v2182, 7
        %v2184 = vsub.s32 %v2181, %v2183
        %v2185 = vrot.slane %v2171, %v2184
        %v2186 = vcombine.low %v2162, %v2178
        %v2187 = vcombine.high %v2162, %v2178
        %v2189 = vunpack.c.l.s4 1934713408
        %v2190 = vunpack.c.0.s8 %v2189
        %v2191 = vlaneseq
        %v2192 = vshrl.u32 %v2191, 7
        %v2193 = vsub.s32 %v2190, %v2192
        %v2194 = vrot.slane %v2186, %v2193
        %v2196 = vunpack.c.l.s4 1934713408
        %v2197 = vunpack.c.0.s8 %v2196
        %v2198 = vlaneseq
        %v2199 = vshrl.u32 %v2198, 7
        %v2200 = vsub.s32 %v2197, %v2199
        %v2201 = vrot.slane %v2187, %v2200
        %v2202 = vcombine.low %v2169, %v2185
        %v2203 = vcombine.high %v2169, %v2185
        %v2205 = vunpack.c.l.s4 1934713408
        %v2206 = vunpack.c.0.s8 %v2205
        %v2207 = vlaneseq
        %v2208 = vshrl.u32 %v2207, 7
        %v2209 = vsub.s32 %v2206, %v2208
        %v2210 = vrot.slane %v2202, %v2209
        %v2212 = vunpack.c.l.s4 1934713408
        %v2213 = vunpack.c.0.s8 %v2212
        %v2214 = vlaneseq
        %v2215 = vshrl.u32 %v2214, 7
        %v2216 = vsub.s32 %v2213, %v2215
        %v2217 = vrot.slane %v2203, %v2216
        %v2218 = vcombine.high %v2194, 0.0
        %v2219 = vcombine.high %v2201, 0.0
        %v2220 = vcombine.high %v2210, 0.0
        %v2221 = vcombine.high %v2217, 0.0
        %v2222 = vcombine.low %v2194, %v2201
        %v2224 = vunpack.c.l.s4 1983009808
        %v2225 = vunpack.c.0.s8 %v2224
        %v2226 = vlaneseq
        %v2227 = vshrl.u32 %v2226, 7
        %v2228 = vsub.s32 %v2225, %v2227
        %v2229 = vrot.slane %v2222, %v2228
        %v2230 = vcombine.low %v2218, %v2219
        %v2232 = vunpack.c.l.s4 1983009808
        %v2233 = vunpack.c.0.s8 %v2232
        %v2234 = vlaneseq
        %v2235 = vshrl.u32 %v2234, 7
        %v2236 = vsub.s32 %v2233, %v2235
        %v2237 = vrot.slane %v2230, %v2236
        %v2238 = vcombine.low %v2210, %v2217
        %v2240 = vunpack.c.l.s4 1983009808
        %v2241 = vunpack.c.0.s8 %v2240
        %v2242 = vlaneseq
        %v2243 = vshrl.u32 %v2242, 7
        %v2244 = vsub.s32 %v2241, %v2243
        %v2245 = vrot.slane %v2238, %v2244
        %v2246 = vcombine.low %v2220, %v2221
        %v2248 = vunpack.c.l.s4 1983009808
        %v2249 = vunpack.c.0.s8 %v2248
        %v2250 = vlaneseq
        %v2251 = vshrl.u32 %v2250, 7
        %v2252 = vsub.s32 %v2249, %v2251
        %v2253 = vrot.slane %v2246, %v2252
        %v2254 = vcombine.low %v2229, %v2237
        %v2255 = vcombine.high %v2229, %v2237
        %v2257 = vunpack.c.l.s4 1934713408
        %v2258 = vunpack.c.0.s8 %v2257
        %v2259 = vlaneseq
        %v2260 = vshrl.u32 %v2259, 7
        %v2261 = vsub.s32 %v2258, %v2260
        %v2262 = vrot.slane %v2254, %v2261
        %v2264 = vunpack.c.l.s4 1934713408
        %v2265 = vunpack.c.0.s8 %v2264
        %v2266 = vlaneseq
        %v2267 = vshrl.u32 %v2266, 7
        %v2268 = vsub.s32 %v2265, %v2267
        %v2269 = vrot.slane %v2255, %v2268
        %v2270 = vcombine.low %v2245, %v2253
        %v2271 = vcombine.high %v2245, %v2253
        %v2273 = vunpack.c.l.s4 1934713408
        %v2274 = vunpack.c.0.s8 %v2273
        %v2275 = vlaneseq
        %v2276 = vshrl.u32 %v2275, 7
        %v2277 = vsub.s32 %v2274, %v2276
        %v2278 = vrot.slane %v2270, %v2277
        %v2280 = vunpack.c.l.s4 1934713408
        %v2281 = vunpack.c.0.s8 %v2280
        %v2282 = vlaneseq
        %v2283 = vshrl.u32 %v2282, 7
        %v2284 = vsub.s32 %v2281, %v2283
        %v2285 = vrot.slane %v2271, %v2284
        %v2286 = vcombine.low %v2262, %v2278
        %v2287 = vcombine.high %v2262, %v2278
        %v2288 = vcombine.low %v2269, %v2285
        %v2289 = vcombine.high %v2269, %v2285
        %v2290 = vpack.c.bf16 %v2286, %v2286
        %v2291 = vpack.c.bf16 %v2287, %v2287
        %v2292 = vpack.c.bf16 %v2288, %v2288
        %v2293 = vpack.c.bf16 %v2289, %v2289
        %v2295 = vsel %vm1269, %v1986, 0
        %v2298 = vsel %vm1269, %v2138, 0
        %2300 = vmatprep.subr.bf16.mxu0 0
        %2301 = vmatpush1.bf16.xpose.msra.mxu0 %v2298
        %2302 = vmatprep.subr.bf16.mxu0 0
        %2303 = vmatpush1.bf16.xpose.msra.mxu0 0
        %2304 = vmatprep.subr.bf16.mxu0 0
        %2305 = vmatpush1.bf16.xpose.msra.mxu0 0
        %2306 = vmatprep.subr.bf16.mxu0 0
        %2307 = vmatpush1.bf16.xpose.msra.mxu0 0
        %2308 = vmatprep.subr.bf16.mxu0 0
        %2309 = vmatpush1.bf16.xpose.msra.mxu0 0
        %2310 = vmatprep.subr.bf16.mxu0 0
        %2311 = vmatpush1.bf16.xpose.msra.mxu0 0
        %2312 = vmatprep.subr.bf16.mxu0 0
        %2313 = vmatpush1.bf16.xpose.msra.mxu0 0
        %2314 = vmatprep.subr.bf16.mxu0 0
        %2315 = vmatpush1.bf16.xpose.msra.mxu0 0
        %2316 = vmatprep.subr.bf16.mxu0 0
        %2317 = vmatpush1.bf16.xpose.msra.mxu0 0
        %2318 = vmatprep.subr.bf16.mxu0 0
        %2319 = vmatpush1.bf16.xpose.msra.mxu0 0
        %2320 = vmatprep.subr.bf16.mxu0 0
        %2321 = vmatpush1.bf16.xpose.msra.mxu0 0
        %2322 = vmatprep.subr.bf16.mxu0 0
        %2323 = vmatpush1.bf16.xpose.msra.mxu0 0
        %2324 = vmatprep.subr.bf16.mxu0 0
        %2325 = vmatpush1.bf16.xpose.msra.mxu0 0
        %2326 = vmatprep.subr.bf16.mxu0 0
        %2327 = vmatpush1.bf16.xpose.msra.mxu0 0
        %2328 = vmatprep.subr.bf16.mxu0 0
        %2329 = vmatpush1.bf16.xpose.msra.mxu0 0
        %2330 = vmatprep.subr.bf16.mxu0 0
        %2331 = vmatpush1.bf16.xpose.msra.mxu0 0
        %2332 = vmatprep.mubr.bf16.mxu0 0
        %2333 = vmatmul.mubr.bf16.gmra.mrb[0].mxu0 %v2295
        %v2334 = vpop.f32.mrb[0].mxu0
        %v2335 = vadd.f32 0.0, %v2334
        %v2336 = vpop.f32.mrb[0].mxu0
        %v2337 = vpop.f32.mrb[0].mxu0
        %v2338 = vpop.f32.mrb[0].mxu0
        %2339 = vdwg.mxu0
        %v2341 = vsel %vm1269, %v1987, 0
        %v2344 = vsel %vm1269, %v2139, 0
        %2346 = vmatprep.subr.bf16.mxu0 0
        %2347 = vmatpush1.bf16.xpose.msra.mxu0 %v2344
        %2348 = vmatprep.subr.bf16.mxu0 0
        %2349 = vmatpush1.bf16.xpose.msra.mxu0 0
        %2350 = vmatprep.subr.bf16.mxu0 0
        %2351 = vmatpush1.bf16.xpose.msra.mxu0 0
        %2352 = vmatprep.subr.bf16.mxu0 0
        %2353 = vmatpush1.bf16.xpose.msra.mxu0 0
        %2354 = vmatprep.subr.bf16.mxu0 0
        %2355 = vmatpush1.bf16.xpose.msra.mxu0 0
        %2356 = vmatprep.subr.bf16.mxu0 0
        %2357 = vmatpush1.bf16.xpose.msra.mxu0 0
        %2358 = vmatprep.subr.bf16.mxu0 0
        %2359 = vmatpush1.bf16.xpose.msra.mxu0 0
        %2360 = vmatprep.subr.bf16.mxu0 0
        %2361 = vmatpush1.bf16.xpose.msra.mxu0 0
        %2362 = vmatprep.subr.bf16.mxu0 0
        %2363 = vmatpush1.bf16.xpose.msra.mxu0 0
        %2364 = vmatprep.subr.bf16.mxu0 0
        %2365 = vmatpush1.bf16.xpose.msra.mxu0 0
        %2366 = vmatprep.subr.bf16.mxu0 0
        %2367 = vmatpush1.bf16.xpose.msra.mxu0 0
        %2368 = vmatprep.subr.bf16.mxu0 0
        %2369 = vmatpush1.bf16.xpose.msra.mxu0 0
        %2370 = vmatprep.subr.bf16.mxu0 0
        %2371 = vmatpush1.bf16.xpose.msra.mxu0 0
        %2372 = vmatprep.subr.bf16.mxu0 0
        %2373 = vmatpush1.bf16.xpose.msra.mxu0 0
        %2374 = vmatprep.subr.bf16.mxu0 0
        %2375 = vmatpush1.bf16.xpose.msra.mxu0 0
        %2376 = vmatprep.subr.bf16.mxu0 0
        %2377 = vmatpush1.bf16.xpose.msra.mxu0 0
        %2378 = vmatprep.mubr.bf16.mxu0 0
        %2379 = vmatmul.mubr.bf16.gmra.mrb[0].mxu0 %v2341
        %v2380 = vpop.f32.mrb[0].mxu0
        %v2381 = vadd.f32 0.0, %v2380
        %v2382 = vpop.f32.mrb[0].mxu0
        %v2383 = vpop.f32.mrb[0].mxu0
        %v2384 = vpop.f32.mrb[0].mxu0
        %2385 = vdwg.mxu0
        %v2387 = vsel %vm1269, %v1988, 0
        %v2390 = vsel %vm1269, %v2140, 0
        %2392 = vmatprep.subr.bf16.mxu0 0
        %2393 = vmatpush1.bf16.xpose.msra.mxu0 %v2390
        %2394 = vmatprep.subr.bf16.mxu0 0
        %2395 = vmatpush1.bf16.xpose.msra.mxu0 0
        %2396 = vmatprep.subr.bf16.mxu0 0
        %2397 = vmatpush1.bf16.xpose.msra.mxu0 0
        %2398 = vmatprep.subr.bf16.mxu0 0
        %2399 = vmatpush1.bf16.xpose.msra.mxu0 0
        %2400 = vmatprep.subr.bf16.mxu0 0
        %2401 = vmatpush1.bf16.xpose.msra.mxu0 0
        %2402 = vmatprep.subr.bf16.mxu0 0
        %2403 = vmatpush1.bf16.xpose.msra.mxu0 0
        %2404 = vmatprep.subr.bf16.mxu0 0
        %2405 = vmatpush1.bf16.xpose.msra.mxu0 0
        %2406 = vmatprep.subr.bf16.mxu0 0
        %2407 = vmatpush1.bf16.xpose.msra.mxu0 0
        %2408 = vmatprep.subr.bf16.mxu0 0
        %2409 = vmatpush1.bf16.xpose.msra.mxu0 0
        %2410 = vmatprep.subr.bf16.mxu0 0
        %2411 = vmatpush1.bf16.xpose.msra.mxu0 0
        %2412 = vmatprep.subr.bf16.mxu0 0
        %2413 = vmatpush1.bf16.xpose.msra.mxu0 0
        %2414 = vmatprep.subr.bf16.mxu0 0
        %2415 = vmatpush1.bf16.xpose.msra.mxu0 0
        %2416 = vmatprep.subr.bf16.mxu0 0
        %2417 = vmatpush1.bf16.xpose.msra.mxu0 0
        %2418 = vmatprep.subr.bf16.mxu0 0
        %2419 = vmatpush1.bf16.xpose.msra.mxu0 0
        %2420 = vmatprep.subr.bf16.mxu0 0
        %2421 = vmatpush1.bf16.xpose.msra.mxu0 0
        %2422 = vmatprep.subr.bf16.mxu0 0
        %2423 = vmatpush1.bf16.xpose.msra.mxu0 0
        %2424 = vmatprep.mubr.bf16.mxu0 0
        %2425 = vmatmul.mubr.bf16.gmra.mrb[0].mxu0 %v2387
        %v2426 = vpop.f32.mrb[0].mxu0
        %v2427 = vadd.f32 0.0, %v2426
        %v2428 = vpop.f32.mrb[0].mxu0
        %v2429 = vpop.f32.mrb[0].mxu0
        %v2430 = vpop.f32.mrb[0].mxu0
        %2431 = vdwg.mxu0
        %v2433 = vsel %vm1269, %v1989, 0
        %v2436 = vsel %vm1269, %v2141, 0
        %2438 = vmatprep.subr.bf16.mxu0 0
        %2439 = vmatpush1.bf16.xpose.msra.mxu0 %v2436
        %2440 = vmatprep.subr.bf16.mxu0 0
        %2441 = vmatpush1.bf16.xpose.msra.mxu0 0
        %2442 = vmatprep.subr.bf16.mxu0 0
        %2443 = vmatpush1.bf16.xpose.msra.mxu0 0
        %2444 = vmatprep.subr.bf16.mxu0 0
        %2445 = vmatpush1.bf16.xpose.msra.mxu0 0
        %2446 = vmatprep.subr.bf16.mxu0 0
        %2447 = vmatpush1.bf16.xpose.msra.mxu0 0
        %2448 = vmatprep.subr.bf16.mxu0 0
        %2449 = vmatpush1.bf16.xpose.msra.mxu0 0
        %2450 = vmatprep.subr.bf16.mxu0 0
        %2451 = vmatpush1.bf16.xpose.msra.mxu0 0
        %2452 = vmatprep.subr.bf16.mxu0 0
        %2453 = vmatpush1.bf16.xpose.msra.mxu0 0
        %2454 = vmatprep.subr.bf16.mxu0 0
        %2455 = vmatpush1.bf16.xpose.msra.mxu0 0
        %2456 = vmatprep.subr.bf16.mxu0 0
        %2457 = vmatpush1.bf16.xpose.msra.mxu0 0
        %2458 = vmatprep.subr.bf16.mxu0 0
        %2459 = vmatpush1.bf16.xpose.msra.mxu0 0
        %2460 = vmatprep.subr.bf16.mxu0 0
        %2461 = vmatpush1.bf16.xpose.msra.mxu0 0
        %2462 = vmatprep.subr.bf16.mxu0 0
        %2463 = vmatpush1.bf16.xpose.msra.mxu0 0
        %2464 = vmatprep.subr.bf16.mxu0 0
        %2465 = vmatpush1.bf16.xpose.msra.mxu0 0
        %2466 = vmatprep.subr.bf16.mxu0 0
        %2467 = vmatpush1.bf16.xpose.msra.mxu0 0
        %2468 = vmatprep.subr.bf16.mxu0 0
        %2469 = vmatpush1.bf16.xpose.msra.mxu0 0
        %2470 = vmatprep.mubr.bf16.mxu0 0
        %2471 = vmatmul.mubr.bf16.gmra.mrb[0].mxu0 %v2433
        %v2472 = vpop.f32.mrb[0].mxu0
        %v2473 = vadd.f32 0.0, %v2472
        %v2474 = vpop.f32.mrb[0].mxu0
        %v2475 = vpop.f32.mrb[0].mxu0
        %v2476 = vpop.f32.mrb[0].mxu0
        %2477 = vdwg.mxu0
        %v2478 = vsel %vm1269, %v2335, -inf
        %2479 = vmax.xlane.f32.xlu0 %v2478
        %v2480 = vpop.xlane.xlu0 %2479
        %v2481 = vsel %vm1269, %v2381, -inf
        %2482 = vmax.xlane.f32.xlu0 %v2481
        %v2483 = vpop.xlane.xlu0 %2482
        %v2484 = vsel %vm1269, %v2427, -inf
        %2485 = vmax.xlane.f32.xlu0 %v2484
        %v2486 = vpop.xlane.xlu0 %2485
        %v2487 = vsel %vm1269, %v2473, -inf
        %2488 = vmax.xlane.f32.xlu0 %v2487
        %v2489 = vpop.xlane.xlu0 %2488
        %v2490 = vsub.f32 %v2335, %v2480
        %v2491 = vsub.f32 %v2381, %v2483
        %v2492 = vsub.f32 %v2427, %v2486
        %v2493 = vsub.f32 %v2473, %v2489
        %v2494 = vmul.f32 %v2490, 1.442695
        %v2495 = vpow.pop %v2494
        %v2496 = vmul.f32 %v2491, 1.442695
        %v2497 = vpow.pop %v2496
        %v2498 = vmul.f32 %v2492, 1.442695
        %v2499 = vpow.pop %v2498
        %v2500 = vmul.f32 %v2493, 1.442695
        %v2501 = vpow.pop %v2500
        %v2502 = vsel %vm1269, %v2495, 0.0
        %2503 = vadd.xlane.f32.xlu0 %v2502
        %v2504 = vpop.xlane.xlu0 %2503
        %v2505 = vsel %vm1269, %v2497, 0.0
        %2506 = vadd.xlane.f32.xlu0 %v2505
        %v2507 = vpop.xlane.xlu0 %2506
        %v2508 = vsel %vm1269, %v2499, 0.0
        %2509 = vadd.xlane.f32.xlu0 %v2508
        %v2510 = vpop.xlane.xlu0 %2509
        %v2511 = vsel %vm1269, %v2501, 0.0
        %2512 = vadd.xlane.f32.xlu0 %v2511
        %v2513 = vpop.xlane.xlu0 %2512
        %v2514 = vrcp.pop %v2504
        %v2515 = vrcp.pop %v2507
        %v2516 = vrcp.pop %v2510
        %v2517 = vrcp.pop %v2513
        %v2518 = vmul.f32 %v2495, %v2514
        %v2519 = vmul.f32 %v2497, %v2515
        %v2520 = vmul.f32 %v2499, %v2516
        %v2521 = vmul.f32 %v2501, %v2517
        %v2522 = vpack.c.bf16 %v2518, %v2518
        %v2523 = vpack.c.bf16 %v2519, %v2519
        %v2524 = vpack.c.bf16 %v2520, %v2520
        %v2525 = vpack.c.bf16 %v2521, %v2521
        %v2527 = vsel %vm1269, %v2522, 0
        %v2530 = vsel %vm1505, %v2290, 0
        %2532 = vmatprep.subr.bf16.mxu0 0
        %2533 = vmatpush1.bf16.msra.mxu0 %v2530
        %2534 = vmatprep.subr.bf16.mxu0 0
        %2535 = vmatpush1.bf16.msra.mxu0 0
        %2536 = vmatprep.subr.bf16.mxu0 0
        %2537 = vmatpush1.bf16.msra.mxu0 0
        %2538 = vmatprep.subr.bf16.mxu0 0
        %2539 = vmatpush1.bf16.msra.mxu0 0
        %2540 = vmatprep.subr.bf16.mxu0 0
        %2541 = vmatpush1.bf16.msra.mxu0 0
        %2542 = vmatprep.subr.bf16.mxu0 0
        %2543 = vmatpush1.bf16.msra.mxu0 0
        %2544 = vmatprep.subr.bf16.mxu0 0
        %2545 = vmatpush1.bf16.msra.mxu0 0
        %2546 = vmatprep.subr.bf16.mxu0 0
        %2547 = vmatpush1.bf16.msra.mxu0 0
        %2548 = vmatprep.subr.bf16.mxu0 0
        %2549 = vmatpush1.bf16.msra.mxu0 0
        %2550 = vmatprep.subr.bf16.mxu0 0
        %2551 = vmatpush1.bf16.msra.mxu0 0
        %2552 = vmatprep.subr.bf16.mxu0 0
        %2553 = vmatpush1.bf16.msra.mxu0 0
        %2554 = vmatprep.subr.bf16.mxu0 0
        %2555 = vmatpush1.bf16.msra.mxu0 0
        %2556 = vmatprep.subr.bf16.mxu0 0
        %2557 = vmatpush1.bf16.msra.mxu0 0
        %2558 = vmatprep.subr.bf16.mxu0 0
        %2559 = vmatpush1.bf16.msra.mxu0 0
        %2560 = vmatprep.subr.bf16.mxu0 0
        %2561 = vmatpush1.bf16.msra.mxu0 0
        %2562 = vmatprep.subr.bf16.mxu0 0
        %2563 = vmatpush1.bf16.msra.mxu0 0
        %2564 = vmatprep.mubr.bf16.mxu0 0
        %2565 = vmatmul.mubr.bf16.gmra.mrb[0].mxu0 %v2527
        %v2566 = vpop.f32.mrb[0].mxu0
        %v2567 = vadd.f32 0.0, %v2566
        %v2568 = vpop.f32.mrb[0].mxu0
        %v2569 = vpop.f32.mrb[0].mxu0
        %v2570 = vpop.f32.mrb[0].mxu0
        %2571 = vdwg.mxu0
        %v2573 = vsel %vm1269, %v2523, 0
        %v2576 = vsel %vm1505, %v2291, 0
        %2578 = vmatprep.subr.bf16.mxu0 0
        %2579 = vmatpush1.bf16.msra.mxu0 %v2576
        %2580 = vmatprep.subr.bf16.mxu0 0
        %2581 = vmatpush1.bf16.msra.mxu0 0
        %2582 = vmatprep.subr.bf16.mxu0 0
        %2583 = vmatpush1.bf16.msra.mxu0 0
        %2584 = vmatprep.subr.bf16.mxu0 0
        %2585 = vmatpush1.bf16.msra.mxu0 0
        %2586 = vmatprep.subr.bf16.mxu0 0
        %2587 = vmatpush1.bf16.msra.mxu0 0
        %2588 = vmatprep.subr.bf16.mxu0 0
        %2589 = vmatpush1.bf16.msra.mxu0 0
        %2590 = vmatprep.subr.bf16.mxu0 0
        %2591 = vmatpush1.bf16.msra.mxu0 0
        %2592 = vmatprep.subr.bf16.mxu0 0
        %2593 = vmatpush1.bf16.msra.mxu0 0
        %2594 = vmatprep.subr.bf16.mxu0 0
        %2595 = vmatpush1.bf16.msra.mxu0 0
        %2596 = vmatprep.subr.bf16.mxu0 0
        %2597 = vmatpush1.bf16.msra.mxu0 0
        %2598 = vmatprep.subr.bf16.mxu0 0
        %2599 = vmatpush1.bf16.msra.mxu0 0
        %2600 = vmatprep.subr.bf16.mxu0 0
        %2601 = vmatpush1.bf16.msra.mxu0 0
        %2602 = vmatprep.subr.bf16.mxu0 0
        %2603 = vmatpush1.bf16.msra.mxu0 0
        %2604 = vmatprep.subr.bf16.mxu0 0
        %2605 = vmatpush1.bf16.msra.mxu0 0
        %2606 = vmatprep.subr.bf16.mxu0 0
        %2607 = vmatpush1.bf16.msra.mxu0 0
        %2608 = vmatprep.subr.bf16.mxu0 0
        %2609 = vmatpush1.bf16.msra.mxu0 0
        %2610 = vmatprep.mubr.bf16.mxu0 0
        %2611 = vmatmul.mubr.bf16.gmra.mrb[0].mxu0 %v2573
        %v2612 = vpop.f32.mrb[0].mxu0
        %v2613 = vadd.f32 0.0, %v2612
        %v2614 = vpop.f32.mrb[0].mxu0
        %v2615 = vpop.f32.mrb[0].mxu0
        %v2616 = vpop.f32.mrb[0].mxu0
        %2617 = vdwg.mxu0
        %v2619 = vsel %vm1269, %v2524, 0
        %v2622 = vsel %vm1505, %v2292, 0
        %2624 = vmatprep.subr.bf16.mxu0 0
        %2625 = vmatpush1.bf16.msra.mxu0 %v2622
        %2626 = vmatprep.subr.bf16.mxu0 0
        %2627 = vmatpush1.bf16.msra.mxu0 0
        %2628 = vmatprep.subr.bf16.mxu0 0
        %2629 = vmatpush1.bf16.msra.mxu0 0
        %2630 = vmatprep.subr.bf16.mxu0 0
        %2631 = vmatpush1.bf16.msra.mxu0 0
        %2632 = vmatprep.subr.bf16.mxu0 0
        %2633 = vmatpush1.bf16.msra.mxu0 0
        %2634 = vmatprep.subr.bf16.mxu0 0
        %2635 = vmatpush1.bf16.msra.mxu0 0
        %2636 = vmatprep.subr.bf16.mxu0 0
        %2637 = vmatpush1.bf16.msra.mxu0 0
        %2638 = vmatprep.subr.bf16.mxu0 0
        %2639 = vmatpush1.bf16.msra.mxu0 0
        %2640 = vmatprep.subr.bf16.mxu0 0
        %2641 = vmatpush1.bf16.msra.mxu0 0
        %2642 = vmatprep.subr.bf16.mxu0 0
        %2643 = vmatpush1.bf16.msra.mxu0 0
        %2644 = vmatprep.subr.bf16.mxu0 0
        %2645 = vmatpush1.bf16.msra.mxu0 0
        %2646 = vmatprep.subr.bf16.mxu0 0
        %2647 = vmatpush1.bf16.msra.mxu0 0
        %2648 = vmatprep.subr.bf16.mxu0 0
        %2649 = vmatpush1.bf16.msra.mxu0 0
        %2650 = vmatprep.subr.bf16.mxu0 0
        %2651 = vmatpush1.bf16.msra.mxu0 0
        %2652 = vmatprep.subr.bf16.mxu0 0
        %2653 = vmatpush1.bf16.msra.mxu0 0
        %2654 = vmatprep.subr.bf16.mxu0 0
        %2655 = vmatpush1.bf16.msra.mxu0 0
        %2656 = vmatprep.mubr.bf16.mxu0 0
        %2657 = vmatmul.mubr.bf16.gmra.mrb[0].mxu0 %v2619
        %v2658 = vpop.f32.mrb[0].mxu0
        %v2659 = vadd.f32 0.0, %v2658
        %v2660 = vpop.f32.mrb[0].mxu0
        %v2661 = vpop.f32.mrb[0].mxu0
        %v2662 = vpop.f32.mrb[0].mxu0
        %2663 = vdwg.mxu0
        %v2665 = vsel %vm1269, %v2525, 0
        %v2668 = vsel %vm1505, %v2293, 0
        %2670 = vmatprep.subr.bf16.mxu0 0
        %2671 = vmatpush1.bf16.msra.mxu0 %v2668
        %2672 = vmatprep.subr.bf16.mxu0 0
        %2673 = vmatpush1.bf16.msra.mxu0 0
        %2674 = vmatprep.subr.bf16.mxu0 0
        %2675 = vmatpush1.bf16.msra.mxu0 0
        %2676 = vmatprep.subr.bf16.mxu0 0
        %2677 = vmatpush1.bf16.msra.mxu0 0
        %2678 = vmatprep.subr.bf16.mxu0 0
        %2679 = vmatpush1.bf16.msra.mxu0 0
        %2680 = vmatprep.subr.bf16.mxu0 0
        %2681 = vmatpush1.bf16.msra.mxu0 0
        %2682 = vmatprep.subr.bf16.mxu0 0
        %2683 = vmatpush1.bf16.msra.mxu0 0
        %2684 = vmatprep.subr.bf16.mxu0 0
        %2685 = vmatpush1.bf16.msra.mxu0 0
        %2686 = vmatprep.subr.bf16.mxu0 0
        %2687 = vmatpush1.bf16.msra.mxu0 0
        %2688 = vmatprep.subr.bf16.mxu0 0
        %2689 = vmatpush1.bf16.msra.mxu0 0
        %2690 = vmatprep.subr.bf16.mxu0 0
        %2691 = vmatpush1.bf16.msra.mxu0 0
        %2692 = vmatprep.subr.bf16.mxu0 0
        %2693 = vmatpush1.bf16.msra.mxu0 0
        %2694 = vmatprep.subr.bf16.mxu0 0
        %2695 = vmatpush1.bf16.msra.mxu0 0
        %2696 = vmatprep.subr.bf16.mxu0 0
        %2697 = vmatpush1.bf16.msra.mxu0 0
        %2698 = vmatprep.subr.bf16.mxu0 0
        %2699 = vmatpush1.bf16.msra.mxu0 0
        %2700 = vmatprep.subr.bf16.mxu0 0
        %2701 = vmatpush1.bf16.msra.mxu0 0
        %2702 = vmatprep.mubr.bf16.mxu0 0
        %2703 = vmatmul.mubr.bf16.gmra.mrb[0].mxu0 %v2665
        %v2704 = vpop.f32.mrb[0].mxu0
        %v2705 = vadd.f32 0.0, %v2704
        %v2706 = vpop.f32.mrb[0].mxu0
        %v2707 = vpop.f32.mrb[0].mxu0
        %v2708 = vpop.f32.mrb[0].mxu0
        %2709 = vdwg.mxu0
        %v2710 = vcombine.low %v2567, %v2659
        %v2711 = vcombine.high %v2567, %v2659
        %v2713 = vunpack.c.l.s4 1983009808
        %v2714 = vunpack.c.0.s8 %v2713
        %v2715 = vlaneseq
        %v2716 = vshrl.u32 %v2715, 7
        %v2717 = vsub.s32 %v2714, %v2716
        %v2718 = vrot.slane %v2710, %v2717
        %v2720 = vunpack.c.l.s4 1983009808
        %v2721 = vunpack.c.0.s8 %v2720
        %v2722 = vlaneseq
        %v2723 = vshrl.u32 %v2722, 7
        %v2724 = vsub.s32 %v2721, %v2723
        %v2725 = vrot.slane %v2711, %v2724
        %v2726 = vcombine.low %v2613, %v2705
        %v2727 = vcombine.high %v2613, %v2705
        %v2729 = vunpack.c.l.s4 1983009808
        %v2730 = vunpack.c.0.s8 %v2729
        %v2731 = vlaneseq
        %v2732 = vshrl.u32 %v2731, 7
        %v2733 = vsub.s32 %v2730, %v2732
        %v2734 = vrot.slane %v2726, %v2733
        %v2736 = vunpack.c.l.s4 1983009808
        %v2737 = vunpack.c.0.s8 %v2736
        %v2738 = vlaneseq
        %v2739 = vshrl.u32 %v2738, 7
        %v2740 = vsub.s32 %v2737, %v2739
        %v2741 = vrot.slane %v2727, %v2740
        %v2742 = vcombine.low %v2718, %v2734
        %v2743 = vcombine.high %v2718, %v2734
        %v2745 = vunpack.c.l.s4 1934713408
        %v2746 = vunpack.c.0.s8 %v2745
        %v2747 = vlaneseq
        %v2748 = vshrl.u32 %v2747, 7
        %v2749 = vsub.s32 %v2746, %v2748
        %v2750 = vrot.slane %v2742, %v2749
        %v2752 = vunpack.c.l.s4 1934713408
        %v2753 = vunpack.c.0.s8 %v2752
        %v2754 = vlaneseq
        %v2755 = vshrl.u32 %v2754, 7
        %v2756 = vsub.s32 %v2753, %v2755
        %v2757 = vrot.slane %v2743, %v2756
        %v2758 = vcombine.low %v2725, %v2741
        %v2759 = vcombine.high %v2725, %v2741
        %v2761 = vunpack.c.l.s4 1934713408
        %v2762 = vunpack.c.0.s8 %v2761
        %v2763 = vlaneseq
        %v2764 = vshrl.u32 %v2763, 7
        %v2765 = vsub.s32 %v2762, %v2764
        %v2766 = vrot.slane %v2758, %v2765
        %v2768 = vunpack.c.l.s4 1934713408
        %v2769 = vunpack.c.0.s8 %v2768
        %v2770 = vlaneseq
        %v2771 = vshrl.u32 %v2770, 7
        %v2772 = vsub.s32 %v2769, %v2771
        %v2773 = vrot.slane %v2759, %v2772
        %v2774 = vcombine.high %v2750, 0.0
        %v2775 = vcombine.high %v2757, 0.0
        %v2776 = vcombine.high %v2766, 0.0
        %v2777 = vcombine.high %v2773, 0.0
        %v2778 = vcombine.low %v2750, %v2757
        %v2780 = vunpack.c.l.s4 1983009808
        %v2781 = vunpack.c.0.s8 %v2780
        %v2782 = vlaneseq
        %v2783 = vshrl.u32 %v2782, 7
        %v2784 = vsub.s32 %v2781, %v2783
        %v2785 = vrot.slane %v2778, %v2784
        %v2786 = vcombine.low %v2774, %v2775
        %v2788 = vunpack.c.l.s4 1983009808
        %v2789 = vunpack.c.0.s8 %v2788
        %v2790 = vlaneseq
        %v2791 = vshrl.u32 %v2790, 7
        %v2792 = vsub.s32 %v2789, %v2791
        %v2793 = vrot.slane %v2786, %v2792
        %v2794 = vcombine.low %v2766, %v2773
        %v2796 = vunpack.c.l.s4 1983009808
        %v2797 = vunpack.c.0.s8 %v2796
        %v2798 = vlaneseq
        %v2799 = vshrl.u32 %v2798, 7
        %v2800 = vsub.s32 %v2797, %v2799
        %v2801 = vrot.slane %v2794, %v2800
        %v2802 = vcombine.low %v2776, %v2777
        %v2804 = vunpack.c.l.s4 1983009808
        %v2805 = vunpack.c.0.s8 %v2804
        %v2806 = vlaneseq
        %v2807 = vshrl.u32 %v2806, 7
        %v2808 = vsub.s32 %v2805, %v2807
        %v2809 = vrot.slane %v2802, %v2808
        %v2810 = vcombine.low %v2785, %v2793
        %v2811 = vcombine.high %v2785, %v2793
        %v2813 = vunpack.c.l.s4 1934713408
        %v2814 = vunpack.c.0.s8 %v2813
        %v2815 = vlaneseq
        %v2816 = vshrl.u32 %v2815, 7
        %v2817 = vsub.s32 %v2814, %v2816
        %v2818 = vrot.slane %v2810, %v2817
        %v2820 = vunpack.c.l.s4 1934713408
        %v2821 = vunpack.c.0.s8 %v2820
        %v2822 = vlaneseq
        %v2823 = vshrl.u32 %v2822, 7
        %v2824 = vsub.s32 %v2821, %v2823
        %v2825 = vrot.slane %v2811, %v2824
        %v2826 = vcombine.low %v2801, %v2809
        %v2827 = vcombine.high %v2801, %v2809
        %v2829 = vunpack.c.l.s4 1934713408
        %v2830 = vunpack.c.0.s8 %v2829
        %v2831 = vlaneseq
        %v2832 = vshrl.u32 %v2831, 7
        %v2833 = vsub.s32 %v2830, %v2832
        %v2834 = vrot.slane %v2826, %v2833
        %v2836 = vunpack.c.l.s4 1934713408
        %v2837 = vunpack.c.0.s8 %v2836
        %v2838 = vlaneseq
        %v2839 = vshrl.u32 %v2838, 7
        %v2840 = vsub.s32 %v2837, %v2839
        %v2841 = vrot.slane %v2827, %v2840
        %v2842 = vcombine.low %v2818, %v2834
        %v2843 = vcombine.high %v2818, %v2834
        %v2844 = vcombine.low %v2825, %v2841
        %v2845 = vcombine.high %v2825, %v2841
        %2847 = vrot.lane.b32.xlu0 %v2843, 8
        %v2848 = vpop.permute.xlu0 %2847
        %2851 = vrot.lane.b32.xlu0 %v2844, 16
        %v2852 = vpop.permute.xlu0 %2851
        %2855 = vrot.lane.b32.xlu0 %v2845, 24
        %v2856 = vpop.permute.xlu0 %2855
        %v2858 = vsel %vm1269, %v2842, %v2848
        %v2859 = vsel %vm1836, %v2858, %v2852
        %v2860 = vsel %vm1838, %v2859, %v2856
        %v2861 = vpack.c.bf16 %v2860, %v1839
        %v2862 = vld [vmem:[%s607] sm:$0xf]
        %v2863 = vld [vmem:[%s607 + $0x4] sm:$0xf]
        %v2864 = vld [vmem:[%s607 + $0x8] sm:$0xf]
        %v2865 = vld [vmem:[%s607 + $0xc] sm:$0xf]
        %v2866 = vld [vmem:[%s610] sm:$0x1]
        %v2868 = vlaneseq
        %v2869 = vshrl.u32 %v2868, 7
        %v2870 = vsub.s32 0, %v2869
        %v2871 = vrot.slane %v2866, %v2870
        %v2877 = vunpack.c.l.b16 %v2862
        %v2878 = vunpack.c.l.b16 %v2863
        %v2879 = vunpack.c.l.b16 %v2864
        %v2880 = vunpack.c.l.b16 %v2865
        %v2881 = vpack.c.b16 %v2878, %v2877
        %v2882 = vpack.c.b16 %v2880, %v2879
        %v2886 = vsel %vm703, %v2861, 0
        %2888 = vmatprep.subr.bf16.mxu0 0
        %2889 = vmatpush1.bf16.msra.mxu0 %v2881
        %2890 = vmatprep.subr.bf16.mxu0 0
        %2891 = vmatpush1.bf16.msra.mxu0 %v2882
        %2892 = vmatprep.subr.bf16.mxu0 0
        %2893 = vmatpush1.bf16.msra.mxu0 0
        %2894 = vmatprep.subr.bf16.mxu0 0
        %2895 = vmatpush1.bf16.msra.mxu0 0
        %2896 = vmatprep.subr.bf16.mxu0 0
        %2897 = vmatpush1.bf16.msra.mxu0 0
        %2898 = vmatprep.subr.bf16.mxu0 0
        %2899 = vmatpush1.bf16.msra.mxu0 0
        %2900 = vmatprep.subr.bf16.mxu0 0
        %2901 = vmatpush1.bf16.msra.mxu0 0
        %2902 = vmatprep.subr.bf16.mxu0 0
        %2903 = vmatpush1.bf16.msra.mxu0 0
        %2904 = vmatprep.subr.bf16.mxu0 0
        %2905 = vmatpush1.bf16.msra.mxu0 0
        %2906 = vmatprep.subr.bf16.mxu0 0
        %2907 = vmatpush1.bf16.msra.mxu0 0
        %2908 = vmatprep.subr.bf16.mxu0 0
        %2909 = vmatpush1.bf16.msra.mxu0 0
        %2910 = vmatprep.subr.bf16.mxu0 0
        %2911 = vmatpush1.bf16.msra.mxu0 0
        %2912 = vmatprep.subr.bf16.mxu0 0
        %2913 = vmatpush1.bf16.msra.mxu0 0
        %2914 = vmatprep.subr.bf16.mxu0 0
        %2915 = vmatpush1.bf16.msra.mxu0 0
        %2916 = vmatprep.subr.bf16.mxu0 0
        %2917 = vmatpush1.bf16.msra.mxu0 0
        %2918 = vmatprep.subr.bf16.mxu0 0
        %2919 = vmatpush1.bf16.msra.mxu0 0
        %2920 = vmatprep.mubr.bf16.mxu0 0
        %2921 = vmatmul.mubr.bf16.gmra.mrb[0].mxu0 %v2886
        %v2922 = vpop.f32.mrb[0].mxu0
        %v2923 = vadd.f32 %v2871, %v2922
        %v2924 = vpop.f32.mrb[0].mxu0
        %v2925 = vpop.f32.mrb[0].mxu0
        %v2926 = vadd.f32 %v2871, %v2925
        %v2927 = vpop.f32.mrb[0].mxu0
        %2928 = vdwg.mxu0
        %v2929 = vadd.f32 %v699, %v2923
        %v2930 = vadd.f32 %v700, %v2926
        %v2931 = vld [vmem:[%s613] sm:$0x1]
        %v2932 = vld [vmem:[%s616] sm:$0x1]
        %v2933 = vsel %vm703, %v2929, 0.0
        %2934 = vadd.xlane.f32.xlu0 %v2933
        %v2935 = vpop.xlane.xlu0 %2934
        %v2936 = vsel %vm703, %v2930, 0.0
        %2937 = vadd.xlane.f32.xlu0 %v2936
        %v2938 = vpop.xlane.xlu0 %2937
        %v2939 = vmul.f32 %v2935, %v710
        %v2940 = vmul.f32 %v2938, %v710
        %v2941 = vsub.f32 %v2929, %v2939
        %v2942 = vsub.f32 %v2930, %v2940
        %v2943 = vmul.f32 %v2941, %v2941
        %v2944 = vmul.f32 %v2942, %v2942
        %v2945 = vsel %vm703, %v2943, 0.0
        %2946 = vadd.xlane.f32.xlu0 %v2945
        %v2947 = vpop.xlane.xlu0 %2946
        %v2948 = vsel %vm703, %v2944, 0.0
        %2949 = vadd.xlane.f32.xlu0 %v2948
        %v2950 = vpop.xlane.xlu0 %2949
        %v2951 = vmul.f32 %v2947, %v710
        %v2952 = vmul.f32 %v2950, %v710
        %v2953 = vadd.f32 %v2951, 1e-05
        %v2954 = vadd.f32 %v2952, 1e-05
        %v2955 = vrsqrt.pop %v2953
        %v2956 = vrsqrt.pop %v2954
        %v2957 = vmul.f32 %v2941, %v2955
        %v2958 = vmul.f32 %v2942, %v2956
        %v2960 = vlaneseq
        %v2961 = vshrl.u32 %v2960, 7
        %v2962 = vsub.s32 0, %v2961
        %v2963 = vrot.slane %v2931, %v2962
        %v2965 = vmul.f32 %v2957, %v2963
        %v2966 = vmul.f32 %v2958, %v2963
        %v2968 = vlaneseq
        %v2969 = vshrl.u32 %v2968, 7
        %v2970 = vsub.s32 0, %v2969
        %v2971 = vrot.slane %v2932, %v2970
        %v2973 = vadd.f32 %v2965, %v2971
        %v2974 = vadd.f32 %v2966, %v2971
        %v2975 = vpack.c.bf16 %v2974, %v2973
        %v2976 = vld [vmem:[%s621] sm:$0xf]
        %v2977 = vld [vmem:[%s621 + $0x4] sm:$0xf]
        %v2978 = vld [vmem:[%s621 + $0x8] sm:$0xf]
        %v2979 = vld [vmem:[%s621 + $0xc] sm:$0xf]
        %v2980 = vld [vmem:[%s624] sm:$0x1]
        %v2982 = vlaneseq
        %v2983 = vshrl.u32 %v2982, 7
        %v2984 = vsub.s32 0, %v2983
        %v2985 = vrot.slane %v2980, %v2984
        %v2991 = vunpack.c.l.b16 %v2976
        %v2992 = vunpack.c.l.b16 %v2977
        %v2993 = vunpack.c.l.b16 %v2978
        %v2994 = vunpack.c.l.b16 %v2979
        %v2995 = vpack.c.b16 %v2992, %v2991
        %v2996 = vpack.c.b16 %v2994, %v2993
        %v3000 = vsel %vm703, %v2975, 0
        %3002 = vmatprep.subr.bf16.mxu0 0
        %3003 = vmatpush1.bf16.msra.mxu0 %v2995
        %3004 = vmatprep.subr.bf16.mxu0 0
        %3005 = vmatpush1.bf16.msra.mxu0 %v2996
        %3006 = vmatprep.subr.bf16.mxu0 0
        %3007 = vmatpush1.bf16.msra.mxu0 0
        %3008 = vmatprep.subr.bf16.mxu0 0
        %3009 = vmatpush1.bf16.msra.mxu0 0
        %3010 = vmatprep.subr.bf16.mxu0 0
        %3011 = vmatpush1.bf16.msra.mxu0 0
        %3012 = vmatprep.subr.bf16.mxu0 0
        %3013 = vmatpush1.bf16.msra.mxu0 0
        %3014 = vmatprep.subr.bf16.mxu0 0
        %3015 = vmatpush1.bf16.msra.mxu0 0
        %3016 = vmatprep.subr.bf16.mxu0 0
        %3017 = vmatpush1.bf16.msra.mxu0 0
        %3018 = vmatprep.subr.bf16.mxu0 0
        %3019 = vmatpush1.bf16.msra.mxu0 0
        %3020 = vmatprep.subr.bf16.mxu0 0
        %3021 = vmatpush1.bf16.msra.mxu0 0
        %3022 = vmatprep.subr.bf16.mxu0 0
        %3023 = vmatpush1.bf16.msra.mxu0 0
        %3024 = vmatprep.subr.bf16.mxu0 0
        %3025 = vmatpush1.bf16.msra.mxu0 0
        %3026 = vmatprep.subr.bf16.mxu0 0
        %3027 = vmatpush1.bf16.msra.mxu0 0
        %3028 = vmatprep.subr.bf16.mxu0 0
        %3029 = vmatpush1.bf16.msra.mxu0 0
        %3030 = vmatprep.subr.bf16.mxu0 0
        %3031 = vmatpush1.bf16.msra.mxu0 0
        %3032 = vmatprep.subr.bf16.mxu0 0
        %3033 = vmatpush1.bf16.msra.mxu0 0
        %3034 = vmatprep.mubr.bf16.mxu0 0
        %3035 = vmatmul.mubr.bf16.gmra.mrb[0].mxu0 %v3000
        %v3036 = vpop.f32.mrb[0].mxu0
        %v3037 = vadd.f32 %v2985, %v3036
        %v3038 = vpop.f32.mrb[0].mxu0
        %v3039 = vpop.f32.mrb[0].mxu0
        %v3040 = vadd.f32 %v2985, %v3039
        %v3041 = vpop.f32.mrb[0].mxu0
        %3042 = vdwg.mxu0
        %v3043 = vmul.f32 %v3037, 1.702
        %v3044 = vmul.f32 %v3040, 1.702
        %v3045 = vxor.u32 %v3043, 2147483648
        %v3046 = vxor.u32 %v3044, 2147483648
        %v3047 = vmul.f32 %v3045, 1.442695
        %v3048 = vpow.pop %v3047
        %v3049 = vmul.f32 %v3046, 1.442695
        %v3050 = vpow.pop %v3049
        %v3051 = vadd.f32 %v3048, 1.0
        %v3052 = vadd.f32 %v3050, 1.0
        %v3053 = vrcp.pop %v3051
        %v3054 = vmul.f32 1.0, %v3053
        %v3055 = vrcp.pop %v3052
        %v3056 = vmul.f32 1.0, %v3055
        %v3057 = vmul.f32 %v3037, %v3054
        %v3058 = vmul.f32 %v3040, %v3056
        %v3059 = vpack.c.bf16 %v3058, %v3057
        %v3060 = vld [vmem:[%s629] sm:$0xf]
        %v3061 = vld [vmem:[%s629 + $0x4] sm:$0xf]
        %v3062 = vld [vmem:[%s629 + $0x8] sm:$0xf]
        %v3063 = vld [vmem:[%s629 + $0xc] sm:$0xf]
        %v3064 = vld [vmem:[%s629 + $0x10] sm:$0xf]
        %v3065 = vld [vmem:[%s629 + $0x14] sm:$0xf]
        %v3066 = vld [vmem:[%s629 + $0x18] sm:$0xf]
        %v3067 = vld [vmem:[%s629 + $0x1c] sm:$0xf]
        %v3068 = vld [vmem:[%s629 + $0x20] sm:$0xf]
        %v3069 = vld [vmem:[%s629 + $0x24] sm:$0xf]
        %v3070 = vld [vmem:[%s629 + $0x28] sm:$0xf]
        %v3071 = vld [vmem:[%s629 + $0x2c] sm:$0xf]
        %v3072 = vld [vmem:[%s629 + $0x30] sm:$0xf]
        %v3073 = vld [vmem:[%s629 + $0x34] sm:$0xf]
        %v3074 = vld [vmem:[%s629 + $0x38] sm:$0xf]
        %v3075 = vld [vmem:[%s629 + $0x3c] sm:$0xf]
        %v3092 = vunpack.c.l.b16 %v3060
        %v3093 = vunpack.c.l.b16 %v3061
        %v3094 = vunpack.c.l.b16 %v3062
        %v3095 = vunpack.c.l.b16 %v3063
        %v3096 = vunpack.c.l.b16 %v3064
        %v3097 = vunpack.c.l.b16 %v3065
        %v3098 = vunpack.c.l.b16 %v3066
        %v3099 = vunpack.c.l.b16 %v3067
        %v3100 = vunpack.c.l.b16 %v3068
        %v3101 = vunpack.c.l.b16 %v3069
        %v3102 = vunpack.c.l.b16 %v3070
        %v3103 = vunpack.c.l.b16 %v3071
        %v3104 = vunpack.c.l.b16 %v3072
        %v3105 = vunpack.c.l.b16 %v3073
        %v3106 = vunpack.c.l.b16 %v3074
        %v3107 = vunpack.c.l.b16 %v3075
        %v3108 = vpack.c.b16 %v3093, %v3092
        %v3109 = vpack.c.b16 %v3095, %v3094
        %v3110 = vpack.c.b16 %v3097, %v3096
        %v3111 = vpack.c.b16 %v3099, %v3098
        %v3112 = vpack.c.b16 %v3101, %v3100
        %v3113 = vpack.c.b16 %v3103, %v3102
        %v3114 = vpack.c.b16 %v3105, %v3104
        %v3115 = vpack.c.b16 %v3107, %v3106
        %3124 = vmatprep.subr.bf16.mxu0 0
        %3125 = vmatpush1.bf16.msra.mxu0 %v3108
        %3126 = vmatprep.subr.bf16.mxu0 0
        %3127 = vmatpush1.bf16.msra.mxu0 %v3109
        %3128 = vmatprep.subr.bf16.mxu0 0
        %3129 = vmatpush1.bf16.msra.mxu0 %v3110
        %3130 = vmatprep.subr.bf16.mxu0 0
        %3131 = vmatpush1.bf16.msra.mxu0 %v3111
        %3132 = vmatprep.subr.bf16.mxu0 0
        %3133 = vmatpush1.bf16.msra.mxu0 %v3112
        %3134 = vmatprep.subr.bf16.mxu0 0
        %3135 = vmatpush1.bf16.msra.mxu0 %v3113
        %3136 = vmatprep.subr.bf16.mxu0 0
        %3137 = vmatpush1.bf16.msra.mxu0 %v3114
        %3138 = vmatprep.subr.bf16.mxu0 0
        %3139 = vmatpush1.bf16.msra.mxu0 %v3115
        %3140 = vmatprep.subr.bf16.mxu0 0
        %3141 = vmatpush1.bf16.msra.mxu0 0
        %3142 = vmatprep.subr.bf16.mxu0 0
        %3143 = vmatpush1.bf16.msra.mxu0 0
        %3144 = vmatprep.subr.bf16.mxu0 0
        %3145 = vmatpush1.bf16.msra.mxu0 0
        %3146 = vmatprep.subr.bf16.mxu0 0
        %3147 = vmatpush1.bf16.msra.mxu0 0
        %3148 = vmatprep.subr.bf16.mxu0 0
        %3149 = vmatpush1.bf16.msra.mxu0 0
        %3150 = vmatprep.subr.bf16.mxu0 0
        %3151 = vmatpush1.bf16.msra.mxu0 0
        %3152 = vmatprep.subr.bf16.mxu0 0
        %3153 = vmatpush1.bf16.msra.mxu0 0
        %3154 = vmatprep.subr.bf16.mxu0 0
        %3155 = vmatpush1.bf16.msra.mxu0 0
        %3156 = vmatprep.mubr.bf16.mxu0 0
        %3157 = vmatmul.mubr.bf16.gmra.mrb[0].mxu0 %v3059
        %v3158 = vpop.f32.mrb[0].mxu0
        %v3159 = vadd.f32 0.0, %v3158
        %v3160 = vpop.f32.mrb[0].mxu0
        %v3161 = vpop.f32.mrb[0].mxu0
        %v3162 = vadd.f32 0.0, %v3161
        %v3163 = vpop.f32.mrb[0].mxu0
        %3164 = vdwg.mxu0
        %v3165 = vadd.f32 %v2929, %v3159
        %v3166 = vadd.f32 %v2930, %v3162
        %v3167 = vld [vmem:[%s632] sm:$0x1]
        %v3169 = vlaneseq
        %v3170 = vshrl.u32 %v3169, 7
        %v3171 = vsub.s32 0, %v3170
        %v3172 = vrot.slane %v3167, %v3171
        %v3174 = vadd.f32 %v3165, %v3172
        %v3175 = vadd.f32 %v3166, %v3172
        %3176 = vst.msk [vmem:[#allocation2] sm:$0xff] %vm703, %v3174
        %3177 = vst.msk [vmem:[#allocation2 + $0x8] sm:$0xff] %vm703, %v3175
        %p3178 = scmp.eq.s32.totalorder %s30, 1
        // Predicated region
        $region77: #{tpu_custom_call.1} parent=71 // pred_check
          %p3179 = pneg %p3178
        $region78: #{tpu_custom_call.1} parent=71 // pred_check_branch
          %3181 = sbr.rel (%p3179) target = $region80
        $region79: #{tpu_custom_call.1} parent=71 // pred_region
          %v3182 = vcombine.high %v3174, 0.0
          %v3184 = vunpack.c.l.s4 1983009808
          %v3185 = vunpack.c.0.s8 %v3184
          %v3186 = vlaneseq
          %v3187 = vshrl.u32 %v3186, 7
          %v3188 = vsub.s32 %v3185, %v3187
          %v3189 = vrot.slane %v3174, %v3188
          %v3191 = vunpack.c.l.s4 1983009808
          %v3192 = vunpack.c.0.s8 %v3191
          %v3193 = vlaneseq
          %v3194 = vshrl.u32 %v3193, 7
          %v3195 = vsub.s32 %v3192, %v3194
          %v3196 = vrot.slane %v3182, %v3195
          %v3197 = vcombine.high %v3175, 0.0
          %v3199 = vunpack.c.l.s4 1983009808
          %v3200 = vunpack.c.0.s8 %v3199
          %v3201 = vlaneseq
          %v3202 = vshrl.u32 %v3201, 7
          %v3203 = vsub.s32 %v3200, %v3202
          %v3204 = vrot.slane %v3175, %v3203
          %v3206 = vunpack.c.l.s4 1983009808
          %v3207 = vunpack.c.0.s8 %v3206
          %v3208 = vlaneseq
          %v3209 = vshrl.u32 %v3208, 7
          %v3210 = vsub.s32 %v3207, %v3209
          %v3211 = vrot.slane %v3197, %v3210
          %v3212 = vcombine.low %v3189, %v3204
          %v3213 = vcombine.high %v3189, %v3204
          %v3215 = vunpack.c.l.s4 1934713408
          %v3216 = vunpack.c.0.s8 %v3215
          %v3217 = vlaneseq
          %v3218 = vshrl.u32 %v3217, 7
          %v3219 = vsub.s32 %v3216, %v3218
          %v3220 = vrot.slane %v3212, %v3219
          %v3222 = vunpack.c.l.s4 1934713408
          %v3223 = vunpack.c.0.s8 %v3222
          %v3224 = vlaneseq
          %v3225 = vshrl.u32 %v3224, 7
          %v3226 = vsub.s32 %v3223, %v3225
          %v3227 = vrot.slane %v3213, %v3226
          %v3228 = vcombine.low %v3196, %v3211
          %v3229 = vcombine.high %v3196, %v3211
          %v3231 = vunpack.c.l.s4 1934713408
          %v3232 = vunpack.c.0.s8 %v3231
          %v3233 = vlaneseq
          %v3234 = vshrl.u32 %v3233, 7
          %v3235 = vsub.s32 %v3232, %v3234
          %v3236 = vrot.slane %v3228, %v3235
          %v3238 = vunpack.c.l.s4 1934713408
          %v3239 = vunpack.c.0.s8 %v3238
          %v3240 = vlaneseq
          %v3241 = vshrl.u32 %v3240, 7
          %v3242 = vsub.s32 %v3239, %v3241
          %v3243 = vrot.slane %v3229, %v3242
          %v3244 = vcombine.high %v3220, 0.0
          %v3245 = vcombine.high %v3227, 0.0
          %v3246 = vcombine.high %v3236, 0.0
          %v3247 = vcombine.high %v3243, 0.0
          %vm3248 = vcmask 254976
          %3249 = vst.msk [vmem:[#allocation3] sm:$0x3] %vm3248, %v3220
          %3250 = vst.msk [vmem:[#allocation3 + $0x2] sm:$0x3] %vm3248, %v3244
          %3251 = vst.msk [vmem:[#allocation3 + $0x4] sm:$0x3] %vm3248, %v3227
          %3252 = vst.msk [vmem:[#allocation3 + $0x6] sm:$0x3] %vm3248, %v3245
          %3253 = vst.msk [vmem:[#allocation3 + $0x8] sm:$0x3] %vm3248, %v3236
          %3254 = vst.msk [vmem:[#allocation3 + $0xa] sm:$0x3] %vm3248, %v3246
          %3255 = vst.msk [vmem:[#allocation3 + $0xc] sm:$0x3] %vm3248, %v3243
          %3256 = vst.msk [vmem:[#allocation3 + $0xe] sm:$0x3] %vm3248, %v3247
        $region80: #{tpu_custom_call.1} parent=71 // pred_fallthru
          _
        // Predicated region
        $region81: #{tpu_custom_call.1} parent=71 // pred_check
          %p3257 = pneg %p393
        $region82: #{tpu_custom_call.1} parent=71 // pred_check_branch
          %3259 = sbr.rel (%p3257) target = $region84
        $region83: #{tpu_custom_call.1} parent=71 // pred_region
          %s3261 = ssub.s32 256, 256
          %3262 = vsyncadd [#allocation4], %s3261
          %s3263 = smul.addr %s29, 32
          %s3264 = scalar_lea.hbm %s13, %s3263
          %s3265 = sshll.u32 [#allocation3], 4
          %s3266 = int_to_ptr.vmem [resolvable:$true] %s3265
          %3271 = dma.vmem_to_hbm [thread:$0]  %s3266, 256, %s3264, [#allocation4], 32, 32, 2
        $region84: #{tpu_custom_call.1} parent=71 // pred_fallthru
          _
        // Predicated region
        $region85: #{tpu_custom_call.1} parent=71 // pred_check
          %p3272 = pneg %p393
        $region86: #{tpu_custom_call.1} parent=71 // pred_check_branch
          %3274 = sbr.rel (%p3272) target = $region88
        $region87: #{tpu_custom_call.1} parent=71 // pred_region
          %3275 = dma.done [#allocation4], 256
        $region88: #{tpu_custom_call.1} parent=71 // pred_fallthru
          _
      $region72: #{tpu_custom_call.1} parent=5 // pred_fallthru
        _
      %p3276 = scmp.le.s32.totalorder 2, %s20
      // Predicated region
      $region89: #{tpu_custom_call.1} parent=5 // pred_check
        %p3277 = pneg %p3276
      $region90: #{tpu_custom_call.1} parent=5 // pred_check_branch
        %3279 = sbr.rel (%p3277) target = $region92
      $region91: #{tpu_custom_call.1} parent=5 // pred_region
        %s3280 = ssub.s32 %s20, 2
      $region92: #{tpu_custom_call.1} parent=5 // pred_fallthru
        _
    $region6: #{tpu_custom_call.1} parent=1 // loop_footer
      %s24 = sadd.s32 1, %s20
    $region7: #{tpu_custom_call.1} parent=1 // loop_footer_branch
      %19 = sbr.rel target = $region3
    $region8: #{tpu_custom_call.1} parent=1 // loop_exit
      _
    %3281 = vsyncpa [#allocation4], 1
    %s3282 = scalar_lea.sflag [#allocation4], 1
    %3283 = vsyncpa %s3282, 1

</llo_original>
